<compile_context>
chip_gen: v7x
topology: tpu7x:2x2x1
jax: 0.10.0
libtpu: 0.0.40
codegen_flags: <defaults>
</compile_context>

<pallas_src>
import jax
import jax.numpy as jnp
import numpy as np
from jax.experimental import pallas as pl
from jax.experimental.pallas import tpu as pltpu


def _upblock_kernel(xp_ref, w_ref, o_ref):
    """xp_ref: (1, H+2, W+2, Cin) zero-padded NHWC input (one sample), bf16
       w_ref : (9*Cin, 4*Cout)    shift/phase-fused transposed-conv weight, bf16
       o_ref : (1, H*W, 4*Cout)   normalized output, phases fused on lanes, bf16
    """
    _, Hp, Wp, Cin = xp_ref.shape
    H, W = Hp - 2, Wp - 2
    Cout4 = o_ref.shape[-1]
    Cout = Cout4 // 4
    M = H * W

    # ReLU up front (zero padding is invariant under ReLU); stays bf16 for the MXU.
    x = jnp.maximum(xp_ref[0], 0.0)

    # Deduplicated transposed conv: 9 accumulating matmuls (one per unique
    # (row, col) shift), bf16 x bf16 operands with f32 accumulation.  No bias:
    # cancelled exactly by the InstanceNorm mean subtraction below.
    acc = None
    for r in range(3):
        for c in range(3):
            slab = x[r:r + H, c:c + W, :].reshape(M, Cin)
            wk = w_ref[pl.ds((3 * r + c) * Cin, Cin), :]
            p = jnp.dot(slab, wk, preferred_element_type=jnp.float32)
            acc = p if acc is None else acc + p                       # (M, 4*Cout) f32

    # InstanceNorm2d(affine=False, eps=1e-5): per-channel stats over the full
    # 2H x 2W output = H*W rows x 4 phase groups on the lane axis.
    inv_n = 1.0 / (4.0 * H * W)
    s1 = jnp.sum(acc, axis=0, keepdims=True)                          # (1, 4*Cout)
    s2 = jnp.sum(acc * acc, axis=0, keepdims=True)                    # (1, 4*Cout)

    def fold(v):    # (1, 4*Cout) -> (1, Cout): sum the 4 phase groups
        return (v[:, 0 * Cout:1 * Cout] + v[:, 1 * Cout:2 * Cout]
                + v[:, 2 * Cout:3 * Cout] + v[:, 3 * Cout:4 * Cout])

    def tile4(v):   # (1, Cout) -> (1, 4*Cout): repeat per phase group (no concat)
        return jnp.broadcast_to(v[:, None, :], (1, 4, Cout)).reshape(1, Cout4)

    mean_c = fold(s1) * inv_n                                         # (1, Cout)
    var_c = jnp.maximum(fold(s2) * inv_n - mean_c * mean_c, 0.0)
    inv_c = jax.lax.rsqrt(var_c + 1e-5)
    mean4 = tile4(mean_c)
    inv4 = tile4(inv_c)

    # Subtraction folded into the store -- no separate `centered` buffer.
    o_ref[0] = ((acc - mean4) * inv4).astype(o_ref.dtype)


def upblock_forward(x_nchw, w, b=None):
    """x_nchw: (N, Cin, H, W) f32; w: ConvTranspose2d weight (Cin, Cout, 4, 4);
    b: (Cout,) accepted for API parity but unused (a per-channel constant is
    exactly cancelled by InstanceNorm2d's mean subtraction).
    Returns (N, Cout, 2H, 2W) in bf16."""
    del b
    N, Cin, H, W = x_nchw.shape
    Cout = w.shape[1]

    # Layout prep (single XLA pass); bf16 to halve input DMA into the kernel.
    x = jnp.transpose(x_nchw, (0, 2, 3, 1)).astype(jnp.bfloat16)      # NHWC
    xp = jnp.pad(x, ((0, 0), (1, 1), (1, 1), (0, 0)))                 # (N, H+2, W+2, Cin)

    # Shift/phase-fused weight (9*Cin, 4*Cout): output phase (pr, pc) at input
    # offset (dr, dc) reads padded-input shift (r, c) = (pr+dr, pc+dc) with
    # ConvTranspose2d tap (kh, kw) = ((3-pr)-2*dr, (3-pc)-2*dc).  Built once,
    # cast to bf16 once.
    w9 = jnp.zeros((9, Cin, 4, Cout), jnp.float32)
    for pr in range(2):
        for pc in range(2):
            for dr in range(2):
                for dc in range(2):
                    r, c = pr + dr, pc + dc
                    kh, kw = (3 - pr) - 2 * dr, (3 - pc) - 2 * dc
                    w9 = w9.at[3 * r + c, :, 2 * pr + pc, :].set(
                        w[:, :, kh, kw].astype(jnp.float32))
    w9 = w9.reshape(9 * Cin, 4 * Cout).astype(jnp.bfloat16)

    flops = 2 * N * (H * W) * (9 * Cin) * (4 * Cout)
    bytes_accessed = xp.size * 2 + w9.size * 2 + N * H * W * 4 * Cout * 2

    out = pl.pallas_call(
        _upblock_kernel,
        out_shape=jax.ShapeDtypeStruct((N, H * W, 4 * Cout), jnp.bfloat16),
        grid_spec=pltpu.PrefetchScalarGridSpec(
            num_scalar_prefetch=0,
            grid=(N,),   # one sample per step; InstanceNorm stats are per-sample
            in_specs=[
                pl.BlockSpec((1, H + 2, W + 2, Cin), lambda n: (n, 0, 0, 0)),
                pl.BlockSpec((9 * Cin, 4 * Cout), lambda n: (0, 0)),
            ],
            out_specs=pl.BlockSpec((1, H * W, 4 * Cout), lambda n: (n, 0, 0)),
        ),
        compiler_params=pltpu.CompilerParams(
            dimension_semantics=("parallel",),
            vmem_limit_bytes=48 * 1024 * 1024),
        cost_estimate=pl.CostEstimate(
            flops=flops, transcendentals=N * Cout,
            bytes_accessed=bytes_accessed),
    )(xp, w9)

    # Un-interleave phases (bf16, half the layout traffic):
    #   out[n, a*W+b, (2*pr+pc)*Cout+co] -> y[n, co, 2a+pr, 2b+pc]
    # TODO(synk): drop this if the downstream block consumes the phase-fused
    # (N, H*W, 4*Cout) layout directly.
    y = out.reshape(N, H, W, 2, 2, Cout)
    y = jnp.transpose(y, (0, 5, 1, 3, 2, 4)).reshape(N, Cout, 2 * H, 2 * W)
    return y


def upblock_reference(x, w, b):
    """Pure-JAX f32 reference matching PyTorch semantics (NCHW), bias included."""
    xr = jnp.maximum(x, 0.0)
    k = jnp.transpose(jnp.flip(w, axis=(2, 3)), (1, 0, 2, 3))         # (Cout, Cin, 4, 4)
    y = jax.lax.conv_general_dilated(
        xr, k, window_strides=(1, 1), padding=((2, 2), (2, 2)),
        lhs_dilation=(2, 2),
        dimension_numbers=('NCHW', 'OIHW', 'NCHW'))
    y = y + b[None, :, None, None]
    mean = jnp.mean(y, axis=(2, 3), keepdims=True)
    var = jnp.var(y, axis=(2, 3), keepdims=True)
    return (y - mean) * jax.lax.rsqrt(var + 1e-5)


if __name__ == "__main__":
    key = jax.random.PRNGKey(0)
    kx, kw, kb = jax.random.split(key, 3)

    # Small but lane-meaningful sizes: 4*Cout = 128 lanes, H*W = 256 rows/sample.
    N, Cin, Cout, H, W = 2, 16, 32, 16, 16
    x = jax.random.normal(kx, (N, Cin, H, W), jnp.float32)
    w = jax.random.normal(kw, (Cin, Cout, 4, 4), jnp.float32) * 0.1   # ConvTranspose2d weight
    b = jax.random.normal(kb, (Cout,), jnp.float32) * 0.1             # ConvTranspose2d bias

    out = jax.block_until_ready(upblock_forward(x, w, b))
    ref = upblock_reference(x, w, b)

    assert out.shape == (N, Cout, 2 * H, 2 * W), out.shape
    # Kernel feeds the MXU bf16 operands and stores bf16 output (f32 accumulate /
    # f32 norm stats), so compare against the f32 reference at bf16 tolerance.
    np.testing.assert_allclose(np.asarray(out, dtype=np.float32), np.asarray(ref),
                               atol=2e-2, rtol=2e-2)
    print("KERNEL_OK")
</pallas_src>

<mosaic_0001>
module attributes {stable_mosaic.version = 11 : i64} {
  func.func @_upblock_kernel(%arg0: i32, %arg1: memref<1x18x18x16xbf16, #tpu.memory_space<vmem>>, %arg2: memref<144x128xbf16, #tpu.memory_space<vmem>>, %arg3: memref<1x256x128xbf16, #tpu.memory_space<vmem>>) attributes {dimension_semantics = [#tpu.dimension_semantics<parallel>], iteration_bounds = array<i64: 2>, scalar_prefetch = 0 : i64, scratch_operands = 0 : i64, tpu.core_type = #tpu.core_type<tc>, window_params = [{transform_indices = @transform_0, window_bounds = array<i64: 1, 18, 18, 16>}, {pipeline_mode = #tpu.pipeline_mode<synchronous>, transform_indices = @transform_1, window_bounds = array<i64: 144, 128>}, {transform_indices = @transform_2, window_bounds = array<i64: 1, 256, 128>}]} {
    %c0 = arith.constant 0 : index
    %c0_0 = arith.constant 0 : index
    %c0_1 = arith.constant 0 : index
    %c0_2 = arith.constant 0 : index
    %0 = vector.load %arg1[%c0, %c0_0, %c0_1, %c0_2] : memref<1x18x18x16xbf16, #tpu.memory_space<vmem>>, vector<1x18x18x16xbf16>
    %1 = vector.shape_cast %0 : vector<1x18x18x16xbf16> to vector<18x18x16xbf16>
    %cst = arith.constant 0.000000e+00 : bf16
    %2 = vector.broadcast %cst : bf16 to vector<18x18x16xbf16>
    %3 = arith.maximumf %1, %2 : vector<18x18x16xbf16>
    %4 = vector.extract_strided_slice %3 {offsets = [0, 0, 0], sizes = [16, 16, 16], strides = [1, 1, 1]} : vector<18x18x16xbf16> to vector<16x16x16xbf16>
    %5 = vector.shape_cast %4 : vector<16x16x16xbf16> to vector<256x16xbf16>
    %c0_3 = arith.constant 0 : index
    %c0_4 = arith.constant 0 : index
    %6 = vector.load %arg2[%c0_3, %c0_4] : memref<144x128xbf16, #tpu.memory_space<vmem>>, vector<16x128xbf16>
    %cst_5 = arith.constant dense<0.000000e+00> : vector<256x128xf32>
    %7 = tpu.matmul %5, %6, %cst_5 {dimension_numbers = #tpu.dot_dimension_numbers<[1], [0], [0], [1], [0, 0, 1, 1], [], []>} : vector<256x16xbf16>, vector<16x128xbf16>, vector<256x128xf32> -> vector<256x128xf32>
    %8 = vector.extract_strided_slice %3 {offsets = [0, 1, 0], sizes = [16, 16, 16], strides = [1, 1, 1]} : vector<18x18x16xbf16> to vector<16x16x16xbf16>
    %9 = vector.shape_cast %8 : vector<16x16x16xbf16> to vector<256x16xbf16>
    %c16 = arith.constant 16 : index
    %c0_6 = arith.constant 0 : index
    %10 = vector.load %arg2[%c16, %c0_6] : memref<144x128xbf16, #tpu.memory_space<vmem>>, vector<16x128xbf16>
    %cst_7 = arith.constant dense<0.000000e+00> : vector<256x128xf32>
    %11 = tpu.matmul %9, %10, %cst_7 {dimension_numbers = #tpu.dot_dimension_numbers<[1], [0], [0], [1], [0, 0, 1, 1], [], []>} : vector<256x16xbf16>, vector<16x128xbf16>, vector<256x128xf32> -> vector<256x128xf32>
    %12 = arith.addf %7, %11 : vector<256x128xf32>
    %13 = vector.extract_strided_slice %3 {offsets = [0, 2, 0], sizes = [16, 16, 16], strides = [1, 1, 1]} : vector<18x18x16xbf16> to vector<16x16x16xbf16>
    %14 = vector.shape_cast %13 : vector<16x16x16xbf16> to vector<256x16xbf16>
    %c32 = arith.constant 32 : index
    %c0_8 = arith.constant 0 : index
    %15 = vector.load %arg2[%c32, %c0_8] : memref<144x128xbf16, #tpu.memory_space<vmem>>, vector<16x128xbf16>
    %cst_9 = arith.constant dense<0.000000e+00> : vector<256x128xf32>
    %16 = tpu.matmul %14, %15, %cst_9 {dimension_numbers = #tpu.dot_dimension_numbers<[1], [0], [0], [1], [0, 0, 1, 1], [], []>} : vector<256x16xbf16>, vector<16x128xbf16>, vector<256x128xf32> -> vector<256x128xf32>
    %17 = arith.addf %12, %16 : vector<256x128xf32>
    %18 = vector.extract_strided_slice %3 {offsets = [1, 0, 0], sizes = [16, 16, 16], strides = [1, 1, 1]} : vector<18x18x16xbf16> to vector<16x16x16xbf16>
    %19 = vector.shape_cast %18 : vector<16x16x16xbf16> to vector<256x16xbf16>
    %c48 = arith.constant 48 : index
    %c0_10 = arith.constant 0 : index
    %20 = vector.load %arg2[%c48, %c0_10] : memref<144x128xbf16, #tpu.memory_space<vmem>>, vector<16x128xbf16>
    %cst_11 = arith.constant dense<0.000000e+00> : vector<256x128xf32>
    %21 = tpu.matmul %19, %20, %cst_11 {dimension_numbers = #tpu.dot_dimension_numbers<[1], [0], [0], [1], [0, 0, 1, 1], [], []>} : vector<256x16xbf16>, vector<16x128xbf16>, vector<256x128xf32> -> vector<256x128xf32>
    %22 = arith.addf %17, %21 : vector<256x128xf32>
    %23 = vector.extract_strided_slice %3 {offsets = [1, 1, 0], sizes = [16, 16, 16], strides = [1, 1, 1]} : vector<18x18x16xbf16> to vector<16x16x16xbf16>
    %24 = vector.shape_cast %23 : vector<16x16x16xbf16> to vector<256x16xbf16>
    %c64 = arith.constant 64 : index
    %c0_12 = arith.constant 0 : index
    %25 = vector.load %arg2[%c64, %c0_12] : memref<144x128xbf16, #tpu.memory_space<vmem>>, vector<16x128xbf16>
    %cst_13 = arith.constant dense<0.000000e+00> : vector<256x128xf32>
    %26 = tpu.matmul %24, %25, %cst_13 {dimension_numbers = #tpu.dot_dimension_numbers<[1], [0], [0], [1], [0, 0, 1, 1], [], []>} : vector<256x16xbf16>, vector<16x128xbf16>, vector<256x128xf32> -> vector<256x128xf32>
    %27 = arith.addf %22, %26 : vector<256x128xf32>
    %28 = vector.extract_strided_slice %3 {offsets = [1, 2, 0], sizes = [16, 16, 16], strides = [1, 1, 1]} : vector<18x18x16xbf16> to vector<16x16x16xbf16>
    %29 = vector.shape_cast %28 : vector<16x16x16xbf16> to vector<256x16xbf16>
    %c80 = arith.constant 80 : index
    %c0_14 = arith.constant 0 : index
    %30 = vector.load %arg2[%c80, %c0_14] : memref<144x128xbf16, #tpu.memory_space<vmem>>, vector<16x128xbf16>
    %cst_15 = arith.constant dense<0.000000e+00> : vector<256x128xf32>
    %31 = tpu.matmul %29, %30, %cst_15 {dimension_numbers = #tpu.dot_dimension_numbers<[1], [0], [0], [1], [0, 0, 1, 1], [], []>} : vector<256x16xbf16>, vector<16x128xbf16>, vector<256x128xf32> -> vector<256x128xf32>
    %32 = arith.addf %27, %31 : vector<256x128xf32>
    %33 = vector.extract_strided_slice %3 {offsets = [2, 0, 0], sizes = [16, 16, 16], strides = [1, 1, 1]} : vector<18x18x16xbf16> to vector<16x16x16xbf16>
    %34 = vector.shape_cast %33 : vector<16x16x16xbf16> to vector<256x16xbf16>
    %c96 = arith.constant 96 : index
    %c0_16 = arith.constant 0 : index
    %35 = vector.load %arg2[%c96, %c0_16] : memref<144x128xbf16, #tpu.memory_space<vmem>>, vector<16x128xbf16>
    %cst_17 = arith.constant dense<0.000000e+00> : vector<256x128xf32>
    %36 = tpu.matmul %34, %35, %cst_17 {dimension_numbers = #tpu.dot_dimension_numbers<[1], [0], [0], [1], [0, 0, 1, 1], [], []>} : vector<256x16xbf16>, vector<16x128xbf16>, vector<256x128xf32> -> vector<256x128xf32>
    %37 = arith.addf %32, %36 : vector<256x128xf32>
    %38 = vector.extract_strided_slice %3 {offsets = [2, 1, 0], sizes = [16, 16, 16], strides = [1, 1, 1]} : vector<18x18x16xbf16> to vector<16x16x16xbf16>
    %39 = vector.shape_cast %38 : vector<16x16x16xbf16> to vector<256x16xbf16>
    %c112 = arith.constant 112 : index
    %c0_18 = arith.constant 0 : index
    %40 = vector.load %arg2[%c112, %c0_18] : memref<144x128xbf16, #tpu.memory_space<vmem>>, vector<16x128xbf16>
    %cst_19 = arith.constant dense<0.000000e+00> : vector<256x128xf32>
    %41 = tpu.matmul %39, %40, %cst_19 {dimension_numbers = #tpu.dot_dimension_numbers<[1], [0], [0], [1], [0, 0, 1, 1], [], []>} : vector<256x16xbf16>, vector<16x128xbf16>, vector<256x128xf32> -> vector<256x128xf32>
    %42 = arith.addf %37, %41 : vector<256x128xf32>
    %43 = vector.extract_strided_slice %3 {offsets = [2, 2, 0], sizes = [16, 16, 16], strides = [1, 1, 1]} : vector<18x18x16xbf16> to vector<16x16x16xbf16>
    %44 = vector.shape_cast %43 : vector<16x16x16xbf16> to vector<256x16xbf16>
    %c128 = arith.constant 128 : index
    %c0_20 = arith.constant 0 : index
    %45 = vector.load %arg2[%c128, %c0_20] : memref<144x128xbf16, #tpu.memory_space<vmem>>, vector<16x128xbf16>
    %cst_21 = arith.constant dense<0.000000e+00> : vector<256x128xf32>
    %46 = tpu.matmul %44, %45, %cst_21 {dimension_numbers = #tpu.dot_dimension_numbers<[1], [0], [0], [1], [0, 0, 1, 1], [], []>} : vector<256x16xbf16>, vector<16x128xbf16>, vector<256x128xf32> -> vector<256x128xf32>
    %47 = arith.addf %42, %46 : vector<256x128xf32>
    %cst_22 = arith.constant dense<0.000000e+00> : vector<128xf32>
    %48 = vector.multi_reduction <add>, %47, %cst_22 [0] : vector<256x128xf32> to vector<128xf32>
    %49 = vector.shape_cast %48 : vector<128xf32> to vector<1x128xf32>
    %50 = arith.mulf %47, %47 : vector<256x128xf32>
    %cst_23 = arith.constant dense<0.000000e+00> : vector<128xf32>
    %51 = vector.multi_reduction <add>, %50, %cst_23 [0] : vector<256x128xf32> to vector<128xf32>
    %52 = vector.shape_cast %51 : vector<128xf32> to vector<1x128xf32>
    %53 = vector.extract_strided_slice %49 {offsets = [0, 0], sizes = [1, 32], strides = [1, 1]} : vector<1x128xf32> to vector<1x32xf32>
    %54 = vector.extract_strided_slice %49 {offsets = [0, 32], sizes = [1, 32], strides = [1, 1]} : vector<1x128xf32> to vector<1x32xf32>
    %55 = arith.addf %53, %54 : vector<1x32xf32>
    %56 = vector.extract_strided_slice %49 {offsets = [0, 64], sizes = [1, 32], strides = [1, 1]} : vector<1x128xf32> to vector<1x32xf32>
    %57 = arith.addf %55, %56 : vector<1x32xf32>
    %58 = vector.extract_strided_slice %49 {offsets = [0, 96], sizes = [1, 32], strides = [1, 1]} : vector<1x128xf32> to vector<1x32xf32>
    %59 = arith.addf %57, %58 : vector<1x32xf32>
    %cst_24 = arith.constant 9.765625E-4 : f32
    %60 = vector.broadcast %cst_24 : f32 to vector<1x32xf32>
    %61 = arith.mulf %59, %60 : vector<1x32xf32>
    %62 = vector.extract_strided_slice %52 {offsets = [0, 0], sizes = [1, 32], strides = [1, 1]} : vector<1x128xf32> to vector<1x32xf32>
    %63 = vector.extract_strided_slice %52 {offsets = [0, 32], sizes = [1, 32], strides = [1, 1]} : vector<1x128xf32> to vector<1x32xf32>
    %64 = arith.addf %62, %63 : vector<1x32xf32>
    %65 = vector.extract_strided_slice %52 {offsets = [0, 64], sizes = [1, 32], strides = [1, 1]} : vector<1x128xf32> to vector<1x32xf32>
    %66 = arith.addf %64, %65 : vector<1x32xf32>
    %67 = vector.extract_strided_slice %52 {offsets = [0, 96], sizes = [1, 32], strides = [1, 1]} : vector<1x128xf32> to vector<1x32xf32>
    %68 = arith.addf %66, %67 : vector<1x32xf32>
    %cst_25 = arith.constant 9.765625E-4 : f32
    %69 = vector.broadcast %cst_25 : f32 to vector<1x32xf32>
    %70 = arith.mulf %68, %69 : vector<1x32xf32>
    %71 = arith.mulf %61, %61 : vector<1x32xf32>
    %72 = arith.subf %70, %71 : vector<1x32xf32>
    %cst_26 = arith.constant 0.000000e+00 : f32
    %73 = vector.broadcast %cst_26 : f32 to vector<1x32xf32>
    %74 = arith.maximumf %72, %73 : vector<1x32xf32>
    %cst_27 = arith.constant 9.99999974E-6 : f32
    %75 = vector.broadcast %cst_27 : f32 to vector<1x32xf32>
    %76 = arith.addf %74, %75 : vector<1x32xf32>
    %77 = math.rsqrt %76 : vector<1x32xf32>
    %78 = vector.shape_cast %61 : vector<1x32xf32> to vector<1x1x32xf32>
    %79 = vector.shape_cast %78 : vector<1x1x32xf32> to vector<1x1x32xf32>
    %80 = vector.broadcast %79 : vector<1x1x32xf32> to vector<1x4x32xf32>
    %81 = vector.shape_cast %80 : vector<1x4x32xf32> to vector<1x128xf32>
    %82 = vector.shape_cast %77 : vector<1x32xf32> to vector<1x1x32xf32>
    %83 = vector.shape_cast %82 : vector<1x1x32xf32> to vector<1x1x32xf32>
    %84 = vector.broadcast %83 : vector<1x1x32xf32> to vector<1x4x32xf32>
    %85 = vector.shape_cast %84 : vector<1x4x32xf32> to vector<1x128xf32>
    %86 = vector.broadcast %81 : vector<1x128xf32> to vector<256x128xf32>
    %87 = arith.subf %47, %86 : vector<256x128xf32>
    %88 = vector.broadcast %85 : vector<1x128xf32> to vector<256x128xf32>
    %89 = arith.mulf %87, %88 : vector<256x128xf32>
    %90 = arith.truncf %89 : vector<256x128xf32> to vector<256x128xbf16>
    %c0_28 = arith.constant 0 : index
    %c0_29 = arith.constant 0 : index
    %c0_30 = arith.constant 0 : index
    %91 = vector.load %arg3[%c0_28, %c0_29, %c0_30] : memref<1x256x128xbf16, #tpu.memory_space<vmem>>, vector<1x256x128xbf16>
    %92 = vector.shape_cast %91 : vector<1x256x128xbf16> to vector<256x128xbf16>
    %93 = vector.shape_cast %90 : vector<256x128xbf16> to vector<1x256x128xbf16>
    tpu.vector_store %arg3[%c0_28, %c0_29, %c0_30], %93 {strides = array<i32>} : memref<1x256x128xbf16, #tpu.memory_space<vmem>>, vector<1x256x128xbf16>,
    return
  }
  func.func @transform_0(%arg0: i32) -> (i32, i32, i32, i32) {
    %c0_i32 = arith.constant 0 : i32
    %c0_i32_0 = arith.constant 0 : i32
    %c0_i32_1 = arith.constant 0 : i32
    %c0_i32_2 = arith.constant 0 : i32
    return %arg0, %c0_i32, %c0_i32_0, %c0_i32_1 : i32, i32, i32, i32
  }
  func.func @transform_1(%arg0: i32) -> (i32, i32) {
    %c0_i32 = arith.constant 0 : i32
    %c0_i32_0 = arith.constant 0 : i32
    %c0_i32_1 = arith.constant 0 : i32
    return %c0_i32, %c0_i32_0 : i32, i32
  }
  func.func @transform_2(%arg0: i32) -> (i32, i32, i32) {
    %c0_i32 = arith.constant 0 : i32
    %c0_i32_0 = arith.constant 0 : i32
    %c0_i32_1 = arith.constant 0 : i32
    return %arg0, %c0_i32, %c0_i32_0 : i32, i32, i32
  }
}

</mosaic_0001>

<llo_original>
// kernel: tpu_custom_call.1
$region0: #{tpu_custom_call.1}
  #allocation0 [shape = 'u32[]', space=smem, size = 0x4, offset = 0x4, fixed_abs, tag = 'smem constant byte address 0x4 - core index']
  #allocation1 [shape = 'u32[144,128]{1,0:T(1,128)}', space=vmem, size = 0x12000, scoped, tag = 'internal scratch']
  %s0 = inlined_call_operand.vmem [shape: bf16[2,18,18,16], index: 0, kind: input, shape index: {}]
  %s1 = inlined_call_operand.vmem [shape: bf16[144,128], index: 1, kind: input, shape index: {}]
  %s2 = inlined_call_operand.hbm [shape: bf16[2,256,128], index: 2, kind: output, shape index: {}]
  %s3 = sld [smem:[#allocation0]]
  $region41: #{tpu_custom_call.1} parent=0
    _
  %s5 = ssub.s32 1, %s3
  %s6 = scalar_select 0, %s5, %s3
  $region1: #{tpu_custom_call.1} parent=0
    #allocation2 [shape = 'u8[131072]{0}', space=vmem, size = 0x20000, scoped, tag = 'output window, operand 0']
    #allocation3 [shape = 's32[2]{0}', space=sflag, size = 0x8, scoped, tag = 'scoped memory for tpu_custom_call.1']
    %7 = vsyncpa [#allocation3], 0
    %s8 = scalar_lea.sflag [#allocation3], 1
    %9 = vsyncpa %s8, 0
    loop: start=0, step=1, limit=4
    $region2: #{tpu_custom_call.1} parent=1 // loop_pre_header
      _
    $region3: #{tpu_custom_call.1} parent=1 // loop_header
      %s11 = sphi 0, %s15
      %p12 = scmp.ge.s32.totalorder %s11, 4
      %s21 = sphi 0, %s23
      %s24 = sphi 0, %s21
      %s25 = sphi 0, %s24
      %s41 = sphi 0, %s25
      %s45 = sphi 0, %s45
      %s47 = sphi 0, %s45
      %s48 = sphi 0, %s47
      %s62 = sphi 0, %s48
      %s68 = sphi 0, %s70
      %s71 = sphi 0, %s68
      %s72 = sphi 0, %s71
      %s88 = sphi 0, %s72
    $region4: #{tpu_custom_call.1} parent=1 // loop_header_branch
      %14 = sbr.rel (%p12) target = $region8
    $region5: #{tpu_custom_call.1} parent=1 // loop_body
      %s16 = ssub.s32 %s11, 1
      %s17 = ssub.s32 %s11, 2
      %s18 = sadd.s32 %s11, 1
      %s19 = ssub.s32 %s11, %s18
      %p20 = scmp.eq.s32.totalorder %s19, 0
      %s22 = sadd.s32 %s21, 1
      %s23 = scalar_select %p20, %s21, %s22
      %p26 = pneg %p20
      %p27 = scmp.eq.s32.totalorder %s11, 1
      %p28 = por %p26, %p27
      %p29 = scmp.ne.s32.totalorder %s21, %s24
      %p30 = scmp.eq.s32.totalorder %s11, 0
      %p31 = por %p29, %p30
      %p32 = scmp.ne.s32.totalorder %s21, %s24
      %p33 = scmp.eq.s32.totalorder %s16, 1
      %p34 = por %p32, %p33
      %p35 = scmp.ne.s32.totalorder %s24, %s25
      %p36 = scmp.eq.s32.totalorder %s16, 0
      %p37 = por %p35, %p36
      %p38 = scmp.ne.s32.totalorder %s24, %s25
      %p39 = scmp.eq.s32.totalorder %s17, 1
      %p40 = por %p38, %p39
      %p42 = scmp.ne.s32.totalorder %s25, %s41
      %p43 = scmp.eq.s32.totalorder %s17, 0
      %p44 = por %p42, %p43
      %s46 = sadd.s32 %s45, 1
      %p49 = scmp.eq.s32.totalorder %s11, 1
      %p50 = scmp.ne.s32.totalorder %s45, %s47
      %p51 = scmp.eq.s32.totalorder %s11, 0
      %p52 = por %p50, %p51
      %p53 = scmp.ne.s32.totalorder %s45, %s47
      %p54 = scmp.eq.s32.totalorder %s16, 1
      %p55 = por %p53, %p54
      %p56 = scmp.ne.s32.totalorder %s47, %s48
      %p57 = scmp.eq.s32.totalorder %s16, 0
      %p58 = por %p56, %p57
      %p59 = scmp.ne.s32.totalorder %s47, %s48
      %p60 = scmp.eq.s32.totalorder %s17, 1
      %p61 = por %p59, %p60
      %p63 = scmp.ne.s32.totalorder %s48, %s62
      %p64 = scmp.eq.s32.totalorder %s17, 0
      %p65 = por %p63, %p64
      %s66 = ssub.s32 %s11, %s18
      %p67 = scmp.eq.s32.totalorder %s66, 0
      %s69 = sadd.s32 %s68, 1
      %s70 = scalar_select %p67, %s68, %s69
      %p73 = pneg %p67
      %p74 = scmp.eq.s32.totalorder %s11, 1
      %p75 = por %p73, %p74
      %p76 = scmp.ne.s32.totalorder %s68, %s71
      %p77 = scmp.eq.s32.totalorder %s11, 0
      %p78 = por %p76, %p77
      %p79 = scmp.ne.s32.totalorder %s68, %s71
      %p80 = scmp.eq.s32.totalorder %s16, 1
      %p81 = por %p79, %p80
      %p82 = scmp.ne.s32.totalorder %s71, %s72
      %p83 = scmp.eq.s32.totalorder %s16, 0
      %p84 = por %p82, %p83
      %p85 = scmp.ne.s32.totalorder %s71, %s72
      %p86 = scmp.eq.s32.totalorder %s17, 1
      %p87 = por %p85, %p86
      %p89 = scmp.ne.s32.totalorder %s72, %s88
      %p90 = scmp.eq.s32.totalorder %s17, 0
      %p91 = por %p89, %p90
      %p92 = scmp.le.s32.totalorder 1, %s11
      %p93 = scmp.lt.s32.totalorder %s11, 3
      %p94 = pnand %p92, %p93
      %p95 = pneg %p94
      // Predicated region
      $region9: #{tpu_custom_call.1} parent=5 // pred_check
        _
      $region10: #{tpu_custom_call.1} parent=5 // pred_check_branch
        %97 = sbr.rel (%p94) target = $region12
      $region11: #{tpu_custom_call.1} parent=5 // pred_region
        %s98 = ssub.s32 %s11, 1
        // Predicated region
        $region13: #{tpu_custom_call.1} parent=11 // pred_check
          %p99 = pneg %p58
        $region14: #{tpu_custom_call.1} parent=11 // pred_check_branch
          %101 = sbr.rel (%p99) target = $region16
        $region15: #{tpu_custom_call.1} parent=11 // pred_region
          _
        $region16: #{tpu_custom_call.1} parent=11 // pred_fallthru
          _
      $region12: #{tpu_custom_call.1} parent=5 // pred_fallthru
        _
      %p102 = scmp.lt.s32.totalorder %s11, 2
      // Predicated region
      $region17: #{tpu_custom_call.1} parent=5 // pred_check
        %p103 = pneg %p102
      $region18: #{tpu_custom_call.1} parent=5 // pred_check_branch
        %105 = sbr.rel (%p103) target = $region20
      $region19: #{tpu_custom_call.1} parent=5 // pred_region
        // Predicated region
        $region21: #{tpu_custom_call.1} parent=19 // pred_check
          %p106 = pneg %p31
        $region22: #{tpu_custom_call.1} parent=19 // pred_check_branch
          %108 = sbr.rel (%p106) target = $region24
        $region23: #{tpu_custom_call.1} parent=19 // pred_region
          %p109 = scmp.lt.s32.totalorder %s11, 1
          %s110 = scalar_select %p109, %s11, 1
          %s111 = smul.addr %s110, 54
          %s112 = smul.addr %s111, 4
          %s113 = scalar_lea.vmem %s0, %s112
        $region24: #{tpu_custom_call.1} parent=19 // pred_fallthru
          _
      $region20: #{tpu_custom_call.1} parent=5 // pred_fallthru
        _
      %p114 = scmp.le.s32.totalorder 1, %s11
      %p115 = scmp.lt.s32.totalorder %s11, 3
      %p116 = pnand %p114, %p115
      %p117 = pneg %p116
      // Predicated region
      $region25: #{tpu_custom_call.1} parent=5 // pred_check
        _
      $region26: #{tpu_custom_call.1} parent=5 // pred_check_branch
        %119 = sbr.rel (%p116) target = $region28
      $region27: #{tpu_custom_call.1} parent=5 // pred_region
        %s120 = ssub.s32 %s11, 1
        %p121 = scmp.lt.s32.totalorder %s16, 1
        %s122 = scalar_select %p121, %s16, 1
        %s123 = smul.addr %s122, 54
        %s124 = smul.addr %s123, 4
        %s125 = scalar_lea.vmem %s0, %s124
        %p126 = pneg %p37
        %p127 = pneg %p34
        %p128 = pneg %p58
        %p129 = pneg %p55
        %p130 = pneg %p84
        %p131 = pneg %p81
        %s132 = sand.u32 %s71, 1
        %s133 = scalar_lea.sflag [#allocation3], %s132
        %s134 = sand.u32 %s71, 1
        %s135 = smul.addr %s134, 128
        %s136 = scalar_lea.vmem [#allocation2], %s135
        %p137 = scmp.lt.s32.totalorder %s16, 1
        %s138 = scalar_select %p137, %s16, 1
        %s139 = smul.addr %s138, 54
        %s140 = smul.addr %s139, 4
        %s141 = scalar_lea.vmem %s0, %s140
        %v143 = vld [vmem:[%s141] sm:$0xf]
        %v144 = vld [vmem:[%s141 + $0x4] sm:$0xf]
        %v145 = vld [vmem:[%s141 + $0x8] sm:$0x1]
        %v146 = vld [vmem:[%s141 + $0xc] sm:$0xf]
        %v147 = vld [vmem:[%s141 + $0x10] sm:$0xf]
        %v148 = vld [vmem:[%s141 + $0x14] sm:$0x1]
        %v149 = vld [vmem:[%s141 + $0x18] sm:$0xf]
        %v150 = vld [vmem:[%s141 + $0x1c] sm:$0xf]
        %v151 = vld [vmem:[%s141 + $0x20] sm:$0x1]
        %v152 = vld [vmem:[%s141 + $0x24] sm:$0xf]
        %v153 = vld [vmem:[%s141 + $0x28] sm:$0xf]
        %v154 = vld [vmem:[%s141 + $0x2c] sm:$0x1]
        %v155 = vld [vmem:[%s141 + $0x30] sm:$0xf]
        %v156 = vld [vmem:[%s141 + $0x34] sm:$0xf]
        %v157 = vld [vmem:[%s141 + $0x38] sm:$0x1]
        %v158 = vld [vmem:[%s141 + $0x3c] sm:$0xf]
        %v159 = vld [vmem:[%s141 + $0x40] sm:$0xf]
        %v160 = vld [vmem:[%s141 + $0x44] sm:$0x1]
        %v161 = vld [vmem:[%s141 + $0x48] sm:$0xf]
        %v162 = vld [vmem:[%s141 + $0x4c] sm:$0xf]
        %v163 = vld [vmem:[%s141 + $0x50] sm:$0x1]
        %v164 = vld [vmem:[%s141 + $0x54] sm:$0xf]
        %v165 = vld [vmem:[%s141 + $0x58] sm:$0xf]
        %v166 = vld [vmem:[%s141 + $0x5c] sm:$0x1]
        %v167 = vld [vmem:[%s141 + $0x60] sm:$0xf]
        %v168 = vld [vmem:[%s141 + $0x64] sm:$0xf]
        %v169 = vld [vmem:[%s141 + $0x68] sm:$0x1]
        %v170 = vld [vmem:[%s141 + $0x6c] sm:$0xf]
        %v171 = vld [vmem:[%s141 + $0x70] sm:$0xf]
        %v172 = vld [vmem:[%s141 + $0x74] sm:$0x1]
        %v173 = vld [vmem:[%s141 + $0x78] sm:$0xf]
        %v174 = vld [vmem:[%s141 + $0x7c] sm:$0xf]
        %v175 = vld [vmem:[%s141 + $0x80] sm:$0x1]
        %v176 = vld [vmem:[%s141 + $0x84] sm:$0xf]
        %v177 = vld [vmem:[%s141 + $0x88] sm:$0xf]
        %v178 = vld [vmem:[%s141 + $0x8c] sm:$0x1]
        %v179 = vld [vmem:[%s141 + $0x90] sm:$0xf]
        %v180 = vld [vmem:[%s141 + $0x94] sm:$0xf]
        %v181 = vld [vmem:[%s141 + $0x98] sm:$0x1]
        %v182 = vld [vmem:[%s141 + $0x9c] sm:$0xf]
        %v183 = vld [vmem:[%s141 + $0xa0] sm:$0xf]
        %v184 = vld [vmem:[%s141 + $0xa4] sm:$0x1]
        %v185 = vld [vmem:[%s141 + $0xa8] sm:$0xf]
        %v186 = vld [vmem:[%s141 + $0xac] sm:$0xf]
        %v187 = vld [vmem:[%s141 + $0xb0] sm:$0x1]
        %v188 = vld [vmem:[%s141 + $0xb4] sm:$0xf]
        %v189 = vld [vmem:[%s141 + $0xb8] sm:$0xf]
        %v190 = vld [vmem:[%s141 + $0xbc] sm:$0x1]
        %v191 = vld [vmem:[%s141 + $0xc0] sm:$0xf]
        %v192 = vld [vmem:[%s141 + $0xc4] sm:$0xf]
        %v193 = vld [vmem:[%s141 + $0xc8] sm:$0x1]
        %v194 = vld [vmem:[%s141 + $0xcc] sm:$0xf]
        %v195 = vld [vmem:[%s141 + $0xd0] sm:$0xf]
        %v196 = vld [vmem:[%s141 + $0xd4] sm:$0x1]
        %v197 = vmax.bf16 %v143, 0
        %v198 = vmax.bf16 %v144, 0
        %v199 = vmax.bf16 %v145, 0
        %v200 = vmax.bf16 %v146, 0
        %v201 = vmax.bf16 %v147, 0
        %v202 = vmax.bf16 %v148, 0
        %v203 = vmax.bf16 %v149, 0
        %v204 = vmax.bf16 %v150, 0
        %v205 = vmax.bf16 %v151, 0
        %v206 = vmax.bf16 %v152, 0
        %v207 = vmax.bf16 %v153, 0
        %v208 = vmax.bf16 %v154, 0
        %v209 = vmax.bf16 %v155, 0
        %v210 = vmax.bf16 %v156, 0
        %v211 = vmax.bf16 %v157, 0
        %v212 = vmax.bf16 %v158, 0
        %v213 = vmax.bf16 %v159, 0
        %v214 = vmax.bf16 %v160, 0
        %v215 = vmax.bf16 %v161, 0
        %v216 = vmax.bf16 %v162, 0
        %v217 = vmax.bf16 %v163, 0
        %v218 = vmax.bf16 %v164, 0
        %v219 = vmax.bf16 %v165, 0
        %v220 = vmax.bf16 %v166, 0
        %v221 = vmax.bf16 %v167, 0
        %v222 = vmax.bf16 %v168, 0
        %v223 = vmax.bf16 %v169, 0
        %v224 = vmax.bf16 %v170, 0
        %v225 = vmax.bf16 %v171, 0
        %v226 = vmax.bf16 %v172, 0
        %v227 = vmax.bf16 %v173, 0
        %v228 = vmax.bf16 %v174, 0
        %v229 = vmax.bf16 %v175, 0
        %v230 = vmax.bf16 %v176, 0
        %v231 = vmax.bf16 %v177, 0
        %v232 = vmax.bf16 %v178, 0
        %v233 = vmax.bf16 %v179, 0
        %v234 = vmax.bf16 %v180, 0
        %v235 = vmax.bf16 %v181, 0
        %v236 = vmax.bf16 %v182, 0
        %v237 = vmax.bf16 %v183, 0
        %v238 = vmax.bf16 %v184, 0
        %v239 = vmax.bf16 %v185, 0
        %v240 = vmax.bf16 %v186, 0
        %v241 = vmax.bf16 %v187, 0
        %v242 = vmax.bf16 %v188, 0
        %v243 = vmax.bf16 %v189, 0
        %v244 = vmax.bf16 %v190, 0
        %v245 = vmax.bf16 %v191, 0
        %v246 = vmax.bf16 %v192, 0
        %v247 = vmax.bf16 %v193, 0
        %v248 = vmax.bf16 %v194, 0
        %v249 = vmax.bf16 %v195, 0
        %v250 = vmax.bf16 %v196, 0
        %v251 = vld [vmem:[%s1] sm:$0xf]
        %v252 = vld [vmem:[%s1 + $0x4] sm:$0xf]
        %vm253 = vsmask.f32 3328
        %vm254 = vsmask.f32 7440
        %vm255 = vmor %vm253, %vm254
        %v257 = vshrl.u32 %v197, 16
        %v259 = vrot.slane %v257, 4
        %v260 = vshll.u32 %v197, 16
        %v262 = vrot.slane %v260, 5
        %v263 = vor.u32 %v259, %v262
        %v264 = vrot.slane %v263, 4
        %v266 = vshll.u32 %v198, 16
        %v268 = vrot.slane %v266, 5
        %v269 = vsel %vm255, %v264, %v268
        %v270 = vshrl.u32 %v198, 16
        %v272 = vrot.slane %v270, 4
        %v273 = vor.u32 %v272, %v268
        %v274 = vrot.slane %v273, 4
        %v276 = vshll.u32 %v199, 16
        %v278 = vrot.slane %v276, 5
        %v279 = vsel %vm255, %v274, %v278
        %v281 = vshrl.u32 %v200, 16
        %v283 = vrot.slane %v281, 4
        %v284 = vshll.u32 %v200, 16
        %v286 = vrot.slane %v284, 5
        %v287 = vor.u32 %v283, %v286
        %v288 = vrot.slane %v287, 4
        %v290 = vshll.u32 %v201, 16
        %v292 = vrot.slane %v290, 5
        %v293 = vsel %vm255, %v288, %v292
        %v294 = vshrl.u32 %v201, 16
        %v296 = vrot.slane %v294, 4
        %v297 = vor.u32 %v296, %v292
        %v298 = vrot.slane %v297, 4
        %v300 = vshll.u32 %v202, 16
        %v302 = vrot.slane %v300, 5
        %v303 = vsel %vm255, %v298, %v302
        %v305 = vshrl.u32 %v203, 16
        %v307 = vrot.slane %v305, 4
        %v308 = vshll.u32 %v203, 16
        %v310 = vrot.slane %v308, 5
        %v311 = vor.u32 %v307, %v310
        %v312 = vrot.slane %v311, 4
        %v314 = vshll.u32 %v204, 16
        %v316 = vrot.slane %v314, 5
        %v317 = vsel %vm255, %v312, %v316
        %v318 = vshrl.u32 %v204, 16
        %v320 = vrot.slane %v318, 4
        %v321 = vor.u32 %v320, %v316
        %v322 = vrot.slane %v321, 4
        %v324 = vshll.u32 %v205, 16
        %v326 = vrot.slane %v324, 5
        %v327 = vsel %vm255, %v322, %v326
        %v329 = vshrl.u32 %v206, 16
        %v331 = vrot.slane %v329, 4
        %v332 = vshll.u32 %v206, 16
        %v334 = vrot.slane %v332, 5
        %v335 = vor.u32 %v331, %v334
        %v336 = vrot.slane %v335, 4
        %v338 = vshll.u32 %v207, 16
        %v340 = vrot.slane %v338, 5
        %v341 = vsel %vm255, %v336, %v340
        %v342 = vshrl.u32 %v207, 16
        %v344 = vrot.slane %v342, 4
        %v345 = vor.u32 %v344, %v340
        %v346 = vrot.slane %v345, 4
        %v348 = vshll.u32 %v208, 16
        %v350 = vrot.slane %v348, 5
        %v351 = vsel %vm255, %v346, %v350
        %v353 = vshrl.u32 %v209, 16
        %v355 = vrot.slane %v353, 4
        %v356 = vshll.u32 %v209, 16
        %v358 = vrot.slane %v356, 5
        %v359 = vor.u32 %v355, %v358
        %v360 = vrot.slane %v359, 4
        %v362 = vshll.u32 %v210, 16
        %v364 = vrot.slane %v362, 5
        %v365 = vsel %vm255, %v360, %v364
        %v366 = vshrl.u32 %v210, 16
        %v368 = vrot.slane %v366, 4
        %v369 = vor.u32 %v368, %v364
        %v370 = vrot.slane %v369, 4
        %v372 = vshll.u32 %v211, 16
        %v374 = vrot.slane %v372, 5
        %v375 = vsel %vm255, %v370, %v374
        %v377 = vshrl.u32 %v212, 16
        %v379 = vrot.slane %v377, 4
        %v380 = vshll.u32 %v212, 16
        %v382 = vrot.slane %v380, 5
        %v383 = vor.u32 %v379, %v382
        %v384 = vrot.slane %v383, 4
        %v386 = vshll.u32 %v213, 16
        %v388 = vrot.slane %v386, 5
        %v389 = vsel %vm255, %v384, %v388
        %v390 = vshrl.u32 %v213, 16
        %v392 = vrot.slane %v390, 4
        %v393 = vor.u32 %v392, %v388
        %v394 = vrot.slane %v393, 4
        %v396 = vshll.u32 %v214, 16
        %v398 = vrot.slane %v396, 5
        %v399 = vsel %vm255, %v394, %v398
        %v401 = vshrl.u32 %v215, 16
        %v403 = vrot.slane %v401, 4
        %v404 = vshll.u32 %v215, 16
        %v406 = vrot.slane %v404, 5
        %v407 = vor.u32 %v403, %v406
        %v408 = vrot.slane %v407, 4
        %v410 = vshll.u32 %v216, 16
        %v412 = vrot.slane %v410, 5
        %v413 = vsel %vm255, %v408, %v412
        %v414 = vshrl.u32 %v216, 16
        %v416 = vrot.slane %v414, 4
        %v417 = vor.u32 %v416, %v412
        %v418 = vrot.slane %v417, 4
        %v420 = vshll.u32 %v217, 16
        %v422 = vrot.slane %v420, 5
        %v423 = vsel %vm255, %v418, %v422
        %v425 = vshrl.u32 %v218, 16
        %v427 = vrot.slane %v425, 4
        %v428 = vshll.u32 %v218, 16
        %v430 = vrot.slane %v428, 5
        %v431 = vor.u32 %v427, %v430
        %v432 = vrot.slane %v431, 4
        %v434 = vshll.u32 %v219, 16
        %v436 = vrot.slane %v434, 5
        %v437 = vsel %vm255, %v432, %v436
        %v438 = vshrl.u32 %v219, 16
        %v440 = vrot.slane %v438, 4
        %v441 = vor.u32 %v440, %v436
        %v442 = vrot.slane %v441, 4
        %v444 = vshll.u32 %v220, 16
        %v446 = vrot.slane %v444, 5
        %v447 = vsel %vm255, %v442, %v446
        %v449 = vshrl.u32 %v221, 16
        %v451 = vrot.slane %v449, 4
        %v452 = vshll.u32 %v221, 16
        %v454 = vrot.slane %v452, 5
        %v455 = vor.u32 %v451, %v454
        %v456 = vrot.slane %v455, 4
        %v458 = vshll.u32 %v222, 16
        %v460 = vrot.slane %v458, 5
        %v461 = vsel %vm255, %v456, %v460
        %v462 = vshrl.u32 %v222, 16
        %v464 = vrot.slane %v462, 4
        %v465 = vor.u32 %v464, %v460
        %v466 = vrot.slane %v465, 4
        %v468 = vshll.u32 %v223, 16
        %v470 = vrot.slane %v468, 5
        %v471 = vsel %vm255, %v466, %v470
        %v473 = vshrl.u32 %v224, 16
        %v475 = vrot.slane %v473, 4
        %v476 = vshll.u32 %v224, 16
        %v478 = vrot.slane %v476, 5
        %v479 = vor.u32 %v475, %v478
        %v480 = vrot.slane %v479, 4
        %v482 = vshll.u32 %v225, 16
        %v484 = vrot.slane %v482, 5
        %v485 = vsel %vm255, %v480, %v484
        %v486 = vshrl.u32 %v225, 16
        %v488 = vrot.slane %v486, 4
        %v489 = vor.u32 %v488, %v484
        %v490 = vrot.slane %v489, 4
        %v492 = vshll.u32 %v226, 16
        %v494 = vrot.slane %v492, 5
        %v495 = vsel %vm255, %v490, %v494
        %v497 = vshrl.u32 %v227, 16
        %v499 = vrot.slane %v497, 4
        %v500 = vshll.u32 %v227, 16
        %v502 = vrot.slane %v500, 5
        %v503 = vor.u32 %v499, %v502
        %v504 = vrot.slane %v503, 4
        %v506 = vshll.u32 %v228, 16
        %v508 = vrot.slane %v506, 5
        %v509 = vsel %vm255, %v504, %v508
        %v510 = vshrl.u32 %v228, 16
        %v512 = vrot.slane %v510, 4
        %v513 = vor.u32 %v512, %v508
        %v514 = vrot.slane %v513, 4
        %v516 = vshll.u32 %v229, 16
        %v518 = vrot.slane %v516, 5
        %v519 = vsel %vm255, %v514, %v518
        %v521 = vshrl.u32 %v230, 16
        %v523 = vrot.slane %v521, 4
        %v524 = vshll.u32 %v230, 16
        %v526 = vrot.slane %v524, 5
        %v527 = vor.u32 %v523, %v526
        %v528 = vrot.slane %v527, 4
        %v530 = vshll.u32 %v231, 16
        %v532 = vrot.slane %v530, 5
        %v533 = vsel %vm255, %v528, %v532
        %v534 = vshrl.u32 %v231, 16
        %v536 = vrot.slane %v534, 4
        %v537 = vor.u32 %v536, %v532
        %v538 = vrot.slane %v537, 4
        %v540 = vshll.u32 %v232, 16
        %v542 = vrot.slane %v540, 5
        %v543 = vsel %vm255, %v538, %v542
        %v545 = vshrl.u32 %v233, 16
        %v547 = vrot.slane %v545, 4
        %v548 = vshll.u32 %v233, 16
        %v550 = vrot.slane %v548, 5
        %v551 = vor.u32 %v547, %v550
        %v552 = vrot.slane %v551, 4
        %v554 = vshll.u32 %v234, 16
        %v556 = vrot.slane %v554, 5
        %v557 = vsel %vm255, %v552, %v556
        %v558 = vshrl.u32 %v234, 16
        %v560 = vrot.slane %v558, 4
        %v561 = vor.u32 %v560, %v556
        %v562 = vrot.slane %v561, 4
        %v564 = vshll.u32 %v235, 16
        %v566 = vrot.slane %v564, 5
        %v567 = vsel %vm255, %v562, %v566
        %v569 = vshrl.u32 %v236, 16
        %v571 = vrot.slane %v569, 4
        %v572 = vshll.u32 %v236, 16
        %v574 = vrot.slane %v572, 5
        %v575 = vor.u32 %v571, %v574
        %v576 = vrot.slane %v575, 4
        %v578 = vshll.u32 %v237, 16
        %v580 = vrot.slane %v578, 5
        %v581 = vsel %vm255, %v576, %v580
        %v582 = vshrl.u32 %v237, 16
        %v584 = vrot.slane %v582, 4
        %v585 = vor.u32 %v584, %v580
        %v586 = vrot.slane %v585, 4
        %v588 = vshll.u32 %v238, 16
        %v590 = vrot.slane %v588, 5
        %v591 = vsel %vm255, %v586, %v590
        %v593 = vshrl.u32 %v239, 16
        %v595 = vrot.slane %v593, 4
        %v596 = vshll.u32 %v239, 16
        %v598 = vrot.slane %v596, 5
        %v599 = vor.u32 %v595, %v598
        %v600 = vrot.slane %v599, 4
        %v602 = vshll.u32 %v240, 16
        %v604 = vrot.slane %v602, 5
        %v605 = vsel %vm255, %v600, %v604
        %v606 = vshrl.u32 %v240, 16
        %v608 = vrot.slane %v606, 4
        %v609 = vor.u32 %v608, %v604
        %v610 = vrot.slane %v609, 4
        %v612 = vshll.u32 %v241, 16
        %v614 = vrot.slane %v612, 5
        %v615 = vsel %vm255, %v610, %v614
        %v617 = vshrl.u32 %v242, 16
        %v619 = vrot.slane %v617, 4
        %v620 = vshll.u32 %v242, 16
        %v622 = vrot.slane %v620, 5
        %v623 = vor.u32 %v619, %v622
        %v624 = vrot.slane %v623, 4
        %v626 = vshll.u32 %v243, 16
        %v628 = vrot.slane %v626, 5
        %v629 = vsel %vm255, %v624, %v628
        %v630 = vshrl.u32 %v243, 16
        %v632 = vrot.slane %v630, 4
        %v633 = vor.u32 %v632, %v628
        %v634 = vrot.slane %v633, 4
        %v636 = vshll.u32 %v244, 16
        %v638 = vrot.slane %v636, 5
        %v639 = vsel %vm255, %v634, %v638
        %v640 = vld [vmem:[%s1 + $0x8] sm:$0xf]
        %v641 = vld [vmem:[%s1 + $0xc] sm:$0xf]
        %v642 = vunpack.c.l.b16 %v269
        %v643 = vunpack.c.l.b16 %v279
        %v644 = vunpack.c.l.b16 %v293
        %v645 = vunpack.c.l.b16 %v303
        %v646 = vunpack.c.l.b16 %v317
        %v647 = vunpack.c.l.b16 %v327
        %v648 = vunpack.c.l.b16 %v341
        %v649 = vunpack.c.l.b16 %v351
        %v650 = vunpack.c.l.b16 %v365
        %v651 = vunpack.c.l.b16 %v375
        %v652 = vunpack.c.l.b16 %v389
        %v653 = vunpack.c.l.b16 %v399
        %v654 = vunpack.c.l.b16 %v413
        %v655 = vunpack.c.l.b16 %v423
        %v656 = vunpack.c.l.b16 %v437
        %v657 = vunpack.c.l.b16 %v447
        %v658 = vunpack.c.l.b16 %v461
        %v659 = vunpack.c.l.b16 %v471
        %v660 = vunpack.c.l.b16 %v485
        %v661 = vunpack.c.l.b16 %v495
        %v662 = vunpack.c.l.b16 %v509
        %v663 = vunpack.c.l.b16 %v519
        %v664 = vunpack.c.l.b16 %v533
        %v665 = vunpack.c.l.b16 %v543
        %v666 = vunpack.c.l.b16 %v557
        %v667 = vunpack.c.l.b16 %v567
        %v668 = vunpack.c.l.b16 %v581
        %v669 = vunpack.c.l.b16 %v591
        %v670 = vunpack.c.l.b16 %v605
        %v671 = vunpack.c.l.b16 %v615
        %v672 = vunpack.c.l.b16 %v629
        %v673 = vunpack.c.l.b16 %v639
        %v674 = vpack.c.b16 %v643, %v642
        %v675 = vpack.c.b16 %v645, %v644
        %v676 = vpack.c.b16 %v647, %v646
        %v677 = vpack.c.b16 %v649, %v648
        %v678 = vpack.c.b16 %v651, %v650
        %v679 = vpack.c.b16 %v653, %v652
        %v680 = vpack.c.b16 %v655, %v654
        %v681 = vpack.c.b16 %v657, %v656
        %v682 = vpack.c.b16 %v659, %v658
        %v683 = vpack.c.b16 %v661, %v660
        %v684 = vpack.c.b16 %v663, %v662
        %v685 = vpack.c.b16 %v665, %v664
        %v686 = vpack.c.b16 %v667, %v666
        %v687 = vpack.c.b16 %v669, %v668
        %v688 = vpack.c.b16 %v671, %v670
        %v689 = vpack.c.b16 %v673, %v672
        %v692 = vunpack.c.l.b16 %v640
        %v693 = vunpack.c.l.b16 %v641
        %v694 = vpack.c.b16 %v693, %v692
        %vm696 = vcmask 130048
        %v698 = vsel %vm696, %v674, 0
        %v701 = vsel %vm696, %v675, 0
        %v704 = vsel %vm696, %v676, 0
        %v707 = vsel %vm696, %v677, 0
        %v710 = vsel %vm696, %v678, 0
        %v713 = vsel %vm696, %v679, 0
        %v716 = vsel %vm696, %v680, 0
        %v719 = vsel %vm696, %v681, 0
        %v722 = vsel %vm696, %v682, 0
        %v725 = vsel %vm696, %v683, 0
        %v728 = vsel %vm696, %v684, 0
        %v731 = vsel %vm696, %v685, 0
        %v734 = vsel %vm696, %v686, 0
        %v737 = vsel %vm696, %v687, 0
        %v740 = vsel %vm696, %v688, 0
        %v743 = vsel %vm696, %v689, 0
        %745 = vmatprep.subr.bf16.mxu0 0
        %746 = vmatpush1.bf16.msra.mxu0 %v694
        %747 = vmatprep.subr.bf16.mxu0 0
        %748 = vmatpush1.bf16.msra.mxu0 0
        %749 = vmatprep.subr.bf16.mxu0 0
        %750 = vmatpush1.bf16.msra.mxu0 0
        %751 = vmatprep.subr.bf16.mxu0 0
        %752 = vmatpush1.bf16.msra.mxu0 0
        %753 = vmatprep.subr.bf16.mxu0 0
        %754 = vmatpush1.bf16.msra.mxu0 0
        %755 = vmatprep.subr.bf16.mxu0 0
        %756 = vmatpush1.bf16.msra.mxu0 0
        %757 = vmatprep.subr.bf16.mxu0 0
        %758 = vmatpush1.bf16.msra.mxu0 0
        %759 = vmatprep.subr.bf16.mxu0 0
        %760 = vmatpush1.bf16.msra.mxu0 0
        %761 = vmatprep.subr.bf16.mxu0 0
        %762 = vmatpush1.bf16.msra.mxu0 0
        %763 = vmatprep.subr.bf16.mxu0 0
        %764 = vmatpush1.bf16.msra.mxu0 0
        %765 = vmatprep.subr.bf16.mxu0 0
        %766 = vmatpush1.bf16.msra.mxu0 0
        %767 = vmatprep.subr.bf16.mxu0 0
        %768 = vmatpush1.bf16.msra.mxu0 0
        %769 = vmatprep.subr.bf16.mxu0 0
        %770 = vmatpush1.bf16.msra.mxu0 0
        %771 = vmatprep.subr.bf16.mxu0 0
        %772 = vmatpush1.bf16.msra.mxu0 0
        %773 = vmatprep.subr.bf16.mxu0 0
        %774 = vmatpush1.bf16.msra.mxu0 0
        %775 = vmatprep.subr.bf16.mxu0 0
        %776 = vmatpush1.bf16.msra.mxu0 0
        %777 = vmatprep.mubr.bf16.mxu0 0
        %778 = vmatmul.mubr.bf16.gmra.mrb[0].mxu0 %v698
        %v779 = vpop.f32.mrb[0].mxu0
        %v780 = vadd.f32 0.0, %v779
        %v781 = vpop.f32.mrb[0].mxu0
        %v782 = vpop.f32.mrb[0].mxu0
        %v783 = vadd.f32 0.0, %v782
        %v784 = vpop.f32.mrb[0].mxu0
        %785 = vmatprep.mubr.bf16.mxu0 0
        %786 = vmatmul.mubr.bf16.gmra.mrb[0].mxu0 %v701
        %v787 = vpop.f32.mrb[0].mxu0
        %v788 = vadd.f32 0.0, %v787
        %v789 = vpop.f32.mrb[0].mxu0
        %v790 = vpop.f32.mrb[0].mxu0
        %v791 = vadd.f32 0.0, %v790
        %v792 = vpop.f32.mrb[0].mxu0
        %793 = vmatprep.mubr.bf16.mxu0 0
        %794 = vmatmul.mubr.bf16.gmra.mrb[0].mxu0 %v704
        %v795 = vpop.f32.mrb[0].mxu0
        %v796 = vadd.f32 0.0, %v795
        %v797 = vpop.f32.mrb[0].mxu0
        %v798 = vpop.f32.mrb[0].mxu0
        %v799 = vadd.f32 0.0, %v798
        %v800 = vpop.f32.mrb[0].mxu0
        %801 = vmatprep.mubr.bf16.mxu0 0
        %802 = vmatmul.mubr.bf16.gmra.mrb[0].mxu0 %v707
        %v803 = vpop.f32.mrb[0].mxu0
        %v804 = vadd.f32 0.0, %v803
        %v805 = vpop.f32.mrb[0].mxu0
        %v806 = vpop.f32.mrb[0].mxu0
        %v807 = vadd.f32 0.0, %v806
        %v808 = vpop.f32.mrb[0].mxu0
        %809 = vmatprep.mubr.bf16.mxu0 0
        %810 = vmatmul.mubr.bf16.gmra.mrb[0].mxu0 %v710
        %v811 = vpop.f32.mrb[0].mxu0
        %v812 = vadd.f32 0.0, %v811
        %v813 = vpop.f32.mrb[0].mxu0
        %v814 = vpop.f32.mrb[0].mxu0
        %v815 = vadd.f32 0.0, %v814
        %v816 = vpop.f32.mrb[0].mxu0
        %817 = vmatprep.mubr.bf16.mxu0 0
        %818 = vmatmul.mubr.bf16.gmra.mrb[0].mxu0 %v713
        %v819 = vpop.f32.mrb[0].mxu0
        %v820 = vadd.f32 0.0, %v819
        %v821 = vpop.f32.mrb[0].mxu0
        %v822 = vpop.f32.mrb[0].mxu0
        %v823 = vadd.f32 0.0, %v822
        %v824 = vpop.f32.mrb[0].mxu0
        %825 = vmatprep.mubr.bf16.mxu0 0
        %826 = vmatmul.mubr.bf16.gmra.mrb[0].mxu0 %v716
        %v827 = vpop.f32.mrb[0].mxu0
        %v828 = vadd.f32 0.0, %v827
        %v829 = vpop.f32.mrb[0].mxu0
        %v830 = vpop.f32.mrb[0].mxu0
        %v831 = vadd.f32 0.0, %v830
        %v832 = vpop.f32.mrb[0].mxu0
        %833 = vmatprep.mubr.bf16.mxu0 0
        %834 = vmatmul.mubr.bf16.gmra.mrb[0].mxu0 %v719
        %v835 = vpop.f32.mrb[0].mxu0
        %v836 = vadd.f32 0.0, %v835
        %v837 = vpop.f32.mrb[0].mxu0
        %v838 = vpop.f32.mrb[0].mxu0
        %v839 = vadd.f32 0.0, %v838
        %v840 = vpop.f32.mrb[0].mxu0
        %841 = vmatprep.mubr.bf16.mxu0 0
        %842 = vmatmul.mubr.bf16.gmra.mrb[0].mxu0 %v722
        %v843 = vpop.f32.mrb[0].mxu0
        %v844 = vadd.f32 0.0, %v843
        %v845 = vpop.f32.mrb[0].mxu0
        %v846 = vpop.f32.mrb[0].mxu0
        %v847 = vadd.f32 0.0, %v846
        %v848 = vpop.f32.mrb[0].mxu0
        %849 = vmatprep.mubr.bf16.mxu0 0
        %850 = vmatmul.mubr.bf16.gmra.mrb[0].mxu0 %v725
        %v851 = vpop.f32.mrb[0].mxu0
        %v852 = vadd.f32 0.0, %v851
        %v853 = vpop.f32.mrb[0].mxu0
        %v854 = vpop.f32.mrb[0].mxu0
        %v855 = vadd.f32 0.0, %v854
        %v856 = vpop.f32.mrb[0].mxu0
        %857 = vmatprep.mubr.bf16.mxu0 0
        %858 = vmatmul.mubr.bf16.gmra.mrb[0].mxu0 %v728
        %v859 = vpop.f32.mrb[0].mxu0
        %v860 = vadd.f32 0.0, %v859
        %v861 = vpop.f32.mrb[0].mxu0
        %v862 = vpop.f32.mrb[0].mxu0
        %v863 = vadd.f32 0.0, %v862
        %v864 = vpop.f32.mrb[0].mxu0
        %865 = vmatprep.mubr.bf16.mxu0 0
        %866 = vmatmul.mubr.bf16.gmra.mrb[0].mxu0 %v731
        %v867 = vpop.f32.mrb[0].mxu0
        %v868 = vadd.f32 0.0, %v867
        %v869 = vpop.f32.mrb[0].mxu0
        %v870 = vpop.f32.mrb[0].mxu0
        %v871 = vadd.f32 0.0, %v870
        %v872 = vpop.f32.mrb[0].mxu0
        %873 = vmatprep.mubr.bf16.mxu0 0
        %874 = vmatmul.mubr.bf16.gmra.mrb[0].mxu0 %v734
        %v875 = vpop.f32.mrb[0].mxu0
        %v876 = vadd.f32 0.0, %v875
        %v877 = vpop.f32.mrb[0].mxu0
        %v878 = vpop.f32.mrb[0].mxu0
        %v879 = vadd.f32 0.0, %v878
        %v880 = vpop.f32.mrb[0].mxu0
        %881 = vmatprep.mubr.bf16.mxu0 0
        %882 = vmatmul.mubr.bf16.gmra.mrb[0].mxu0 %v737
        %v883 = vpop.f32.mrb[0].mxu0
        %v884 = vadd.f32 0.0, %v883
        %v885 = vpop.f32.mrb[0].mxu0
        %v886 = vpop.f32.mrb[0].mxu0
        %v887 = vadd.f32 0.0, %v886
        %v888 = vpop.f32.mrb[0].mxu0
        %889 = vmatprep.mubr.bf16.mxu0 0
        %890 = vmatmul.mubr.bf16.gmra.mrb[0].mxu0 %v740
        %v891 = vpop.f32.mrb[0].mxu0
        %v892 = vadd.f32 0.0, %v891
        %v893 = vpop.f32.mrb[0].mxu0
        %v894 = vpop.f32.mrb[0].mxu0
        %v895 = vadd.f32 0.0, %v894
        %v896 = vpop.f32.mrb[0].mxu0
        %897 = vmatprep.mubr.bf16.mxu0 0
        %898 = vmatmul.mubr.bf16.gmra.mrb[0].mxu0 %v743
        %v899 = vpop.f32.mrb[0].mxu0
        %v900 = vadd.f32 0.0, %v899
        %v901 = vpop.f32.mrb[0].mxu0
        %v902 = vpop.f32.mrb[0].mxu0
        %v903 = vadd.f32 0.0, %v902
        %v904 = vpop.f32.mrb[0].mxu0
        %905 = vdwg.mxu0
        %v938 = vunpack.c.l.b16 %v197
        %v939 = vunpack.c.l.b16 %v198
        %v940 = vunpack.c.l.b16 %v200
        %v941 = vunpack.c.l.b16 %v201
        %v942 = vunpack.c.l.b16 %v203
        %v943 = vunpack.c.l.b16 %v204
        %v944 = vunpack.c.l.b16 %v206
        %v945 = vunpack.c.l.b16 %v207
        %v946 = vunpack.c.l.b16 %v209
        %v947 = vunpack.c.l.b16 %v210
        %v948 = vunpack.c.l.b16 %v212
        %v949 = vunpack.c.l.b16 %v213
        %v950 = vunpack.c.l.b16 %v215
        %v951 = vunpack.c.l.b16 %v216
        %v952 = vunpack.c.l.b16 %v218
        %v953 = vunpack.c.l.b16 %v219
        %v954 = vunpack.c.l.b16 %v221
        %v955 = vunpack.c.l.b16 %v222
        %v956 = vunpack.c.l.b16 %v224
        %v957 = vunpack.c.l.b16 %v225
        %v958 = vunpack.c.l.b16 %v227
        %v959 = vunpack.c.l.b16 %v228
        %v960 = vunpack.c.l.b16 %v230
        %v961 = vunpack.c.l.b16 %v231
        %v962 = vunpack.c.l.b16 %v233
        %v963 = vunpack.c.l.b16 %v234
        %v964 = vunpack.c.l.b16 %v236
        %v965 = vunpack.c.l.b16 %v237
        %v966 = vunpack.c.l.b16 %v239
        %v967 = vunpack.c.l.b16 %v240
        %v968 = vunpack.c.l.b16 %v242
        %v969 = vunpack.c.l.b16 %v243
        %v970 = vpack.c.b16 %v939, %v938
        %v971 = vpack.c.b16 %v941, %v940
        %v972 = vpack.c.b16 %v943, %v942
        %v973 = vpack.c.b16 %v945, %v944
        %v974 = vpack.c.b16 %v947, %v946
        %v975 = vpack.c.b16 %v949, %v948
        %v976 = vpack.c.b16 %v951, %v950
        %v977 = vpack.c.b16 %v953, %v952
        %v978 = vpack.c.b16 %v955, %v954
        %v979 = vpack.c.b16 %v957, %v956
        %v980 = vpack.c.b16 %v959, %v958
        %v981 = vpack.c.b16 %v961, %v960
        %v982 = vpack.c.b16 %v963, %v962
        %v983 = vpack.c.b16 %v965, %v964
        %v984 = vpack.c.b16 %v967, %v966
        %v985 = vpack.c.b16 %v969, %v968
        %v988 = vunpack.c.l.b16 %v251
        %v989 = vunpack.c.l.b16 %v252
        %v990 = vpack.c.b16 %v989, %v988
        %v993 = vsel %vm696, %v970, 0
        %v996 = vsel %vm696, %v971, 0
        %v999 = vsel %vm696, %v972, 0
        %v1002 = vsel %vm696, %v973, 0
        %v1005 = vsel %vm696, %v974, 0
        %v1008 = vsel %vm696, %v975, 0
        %v1011 = vsel %vm696, %v976, 0
        %v1014 = vsel %vm696, %v977, 0
        %v1017 = vsel %vm696, %v978, 0
        %v1020 = vsel %vm696, %v979, 0
        %v1023 = vsel %vm696, %v980, 0
        %v1026 = vsel %vm696, %v981, 0
        %v1029 = vsel %vm696, %v982, 0
        %v1032 = vsel %vm696, %v983, 0
        %v1035 = vsel %vm696, %v984, 0
        %v1038 = vsel %vm696, %v985, 0
        %1040 = vmatprep.subr.bf16.mxu0 0
        %1041 = vmatpush1.bf16.msra.mxu0 %v990
        %1042 = vmatprep.subr.bf16.mxu0 0
        %1043 = vmatpush1.bf16.msra.mxu0 0
        %1044 = vmatprep.subr.bf16.mxu0 0
        %1045 = vmatpush1.bf16.msra.mxu0 0
        %1046 = vmatprep.subr.bf16.mxu0 0
        %1047 = vmatpush1.bf16.msra.mxu0 0
        %1048 = vmatprep.subr.bf16.mxu0 0
        %1049 = vmatpush1.bf16.msra.mxu0 0
        %1050 = vmatprep.subr.bf16.mxu0 0
        %1051 = vmatpush1.bf16.msra.mxu0 0
        %1052 = vmatprep.subr.bf16.mxu0 0
        %1053 = vmatpush1.bf16.msra.mxu0 0
        %1054 = vmatprep.subr.bf16.mxu0 0
        %1055 = vmatpush1.bf16.msra.mxu0 0
        %1056 = vmatprep.subr.bf16.mxu0 0
        %1057 = vmatpush1.bf16.msra.mxu0 0
        %1058 = vmatprep.subr.bf16.mxu0 0
        %1059 = vmatpush1.bf16.msra.mxu0 0
        %1060 = vmatprep.subr.bf16.mxu0 0
        %1061 = vmatpush1.bf16.msra.mxu0 0
        %1062 = vmatprep.subr.bf16.mxu0 0
        %1063 = vmatpush1.bf16.msra.mxu0 0
        %1064 = vmatprep.subr.bf16.mxu0 0
        %1065 = vmatpush1.bf16.msra.mxu0 0
        %1066 = vmatprep.subr.bf16.mxu0 0
        %1067 = vmatpush1.bf16.msra.mxu0 0
        %1068 = vmatprep.subr.bf16.mxu0 0
        %1069 = vmatpush1.bf16.msra.mxu0 0
        %1070 = vmatprep.subr.bf16.mxu0 0
        %1071 = vmatpush1.bf16.msra.mxu0 0
        %1072 = vmatprep.mubr.bf16.mxu0 0
        %1073 = vmatmul.mubr.bf16.gmra.mrb[0].mxu0 %v993
        %v1074 = vpop.f32.mrb[0].mxu0
        %v1075 = vadd.f32 %v780, %v1074
        %v1076 = vpop.f32.mrb[0].mxu0
        %v1077 = vpop.f32.mrb[0].mxu0
        %v1078 = vadd.f32 %v783, %v1077
        %v1079 = vpop.f32.mrb[0].mxu0
        %1080 = vmatprep.mubr.bf16.mxu0 0
        %1081 = vmatmul.mubr.bf16.gmra.mrb[0].mxu0 %v996
        %v1082 = vpop.f32.mrb[0].mxu0
        %v1083 = vadd.f32 %v788, %v1082
        %v1084 = vpop.f32.mrb[0].mxu0
        %v1085 = vpop.f32.mrb[0].mxu0
        %v1086 = vadd.f32 %v791, %v1085
        %v1087 = vpop.f32.mrb[0].mxu0
        %1088 = vmatprep.mubr.bf16.mxu0 0
        %1089 = vmatmul.mubr.bf16.gmra.mrb[0].mxu0 %v999
        %v1090 = vpop.f32.mrb[0].mxu0
        %v1091 = vadd.f32 %v796, %v1090
        %v1092 = vpop.f32.mrb[0].mxu0
        %v1093 = vpop.f32.mrb[0].mxu0
        %v1094 = vadd.f32 %v799, %v1093
        %v1095 = vpop.f32.mrb[0].mxu0
        %1096 = vmatprep.mubr.bf16.mxu0 0
        %1097 = vmatmul.mubr.bf16.gmra.mrb[0].mxu0 %v1002
        %v1098 = vpop.f32.mrb[0].mxu0
        %v1099 = vadd.f32 %v804, %v1098
        %v1100 = vpop.f32.mrb[0].mxu0
        %v1101 = vpop.f32.mrb[0].mxu0
        %v1102 = vadd.f32 %v807, %v1101
        %v1103 = vpop.f32.mrb[0].mxu0
        %1104 = vmatprep.mubr.bf16.mxu0 0
        %1105 = vmatmul.mubr.bf16.gmra.mrb[0].mxu0 %v1005
        %v1106 = vpop.f32.mrb[0].mxu0
        %v1107 = vadd.f32 %v812, %v1106
        %v1108 = vpop.f32.mrb[0].mxu0
        %v1109 = vpop.f32.mrb[0].mxu0
        %v1110 = vadd.f32 %v815, %v1109
        %v1111 = vpop.f32.mrb[0].mxu0
        %1112 = vmatprep.mubr.bf16.mxu0 0
        %1113 = vmatmul.mubr.bf16.gmra.mrb[0].mxu0 %v1008
        %v1114 = vpop.f32.mrb[0].mxu0
        %v1115 = vadd.f32 %v820, %v1114
        %v1116 = vpop.f32.mrb[0].mxu0
        %v1117 = vpop.f32.mrb[0].mxu0
        %v1118 = vadd.f32 %v823, %v1117
        %v1119 = vpop.f32.mrb[0].mxu0
        %1120 = vmatprep.mubr.bf16.mxu0 0
        %1121 = vmatmul.mubr.bf16.gmra.mrb[0].mxu0 %v1011
        %v1122 = vpop.f32.mrb[0].mxu0
        %v1123 = vadd.f32 %v828, %v1122
        %v1124 = vpop.f32.mrb[0].mxu0
        %v1125 = vpop.f32.mrb[0].mxu0
        %v1126 = vadd.f32 %v831, %v1125
        %v1127 = vpop.f32.mrb[0].mxu0
        %1128 = vmatprep.mubr.bf16.mxu0 0
        %1129 = vmatmul.mubr.bf16.gmra.mrb[0].mxu0 %v1014
        %v1130 = vpop.f32.mrb[0].mxu0
        %v1131 = vadd.f32 %v836, %v1130
        %v1132 = vpop.f32.mrb[0].mxu0
        %v1133 = vpop.f32.mrb[0].mxu0
        %v1134 = vadd.f32 %v839, %v1133
        %v1135 = vpop.f32.mrb[0].mxu0
        %1136 = vmatprep.mubr.bf16.mxu0 0
        %1137 = vmatmul.mubr.bf16.gmra.mrb[0].mxu0 %v1017
        %v1138 = vpop.f32.mrb[0].mxu0
        %v1139 = vadd.f32 %v844, %v1138
        %v1140 = vpop.f32.mrb[0].mxu0
        %v1141 = vpop.f32.mrb[0].mxu0
        %v1142 = vadd.f32 %v847, %v1141
        %v1143 = vpop.f32.mrb[0].mxu0
        %1144 = vmatprep.mubr.bf16.mxu0 0
        %1145 = vmatmul.mubr.bf16.gmra.mrb[0].mxu0 %v1020
        %v1146 = vpop.f32.mrb[0].mxu0
        %v1147 = vadd.f32 %v852, %v1146
        %v1148 = vpop.f32.mrb[0].mxu0
        %v1149 = vpop.f32.mrb[0].mxu0
        %v1150 = vadd.f32 %v855, %v1149
        %v1151 = vpop.f32.mrb[0].mxu0
        %1152 = vmatprep.mubr.bf16.mxu0 0
        %1153 = vmatmul.mubr.bf16.gmra.mrb[0].mxu0 %v1023
        %v1154 = vpop.f32.mrb[0].mxu0
        %v1155 = vadd.f32 %v860, %v1154
        %v1156 = vpop.f32.mrb[0].mxu0
        %v1157 = vpop.f32.mrb[0].mxu0
        %v1158 = vadd.f32 %v863, %v1157
        %v1159 = vpop.f32.mrb[0].mxu0
        %1160 = vmatprep.mubr.bf16.mxu0 0
        %1161 = vmatmul.mubr.bf16.gmra.mrb[0].mxu0 %v1026
        %v1162 = vpop.f32.mrb[0].mxu0
        %v1163 = vadd.f32 %v868, %v1162
        %v1164 = vpop.f32.mrb[0].mxu0
        %v1165 = vpop.f32.mrb[0].mxu0
        %v1166 = vadd.f32 %v871, %v1165
        %v1167 = vpop.f32.mrb[0].mxu0
        %1168 = vmatprep.mubr.bf16.mxu0 0
        %1169 = vmatmul.mubr.bf16.gmra.mrb[0].mxu0 %v1029
        %v1170 = vpop.f32.mrb[0].mxu0
        %v1171 = vadd.f32 %v876, %v1170
        %v1172 = vpop.f32.mrb[0].mxu0
        %v1173 = vpop.f32.mrb[0].mxu0
        %v1174 = vadd.f32 %v879, %v1173
        %v1175 = vpop.f32.mrb[0].mxu0
        %1176 = vmatprep.mubr.bf16.mxu0 0
        %1177 = vmatmul.mubr.bf16.gmra.mrb[0].mxu0 %v1032
        %v1178 = vpop.f32.mrb[0].mxu0
        %v1179 = vadd.f32 %v884, %v1178
        %v1180 = vpop.f32.mrb[0].mxu0
        %v1181 = vpop.f32.mrb[0].mxu0
        %v1182 = vadd.f32 %v887, %v1181
        %v1183 = vpop.f32.mrb[0].mxu0
        %1184 = vmatprep.mubr.bf16.mxu0 0
        %1185 = vmatmul.mubr.bf16.gmra.mrb[0].mxu0 %v1035
        %v1186 = vpop.f32.mrb[0].mxu0
        %v1187 = vadd.f32 %v892, %v1186
        %v1188 = vpop.f32.mrb[0].mxu0
        %v1189 = vpop.f32.mrb[0].mxu0
        %v1190 = vadd.f32 %v895, %v1189
        %v1191 = vpop.f32.mrb[0].mxu0
        %1192 = vmatprep.mubr.bf16.mxu0 0
        %1193 = vmatmul.mubr.bf16.gmra.mrb[0].mxu0 %v1038
        %v1194 = vpop.f32.mrb[0].mxu0
        %v1195 = vadd.f32 %v900, %v1194
        %v1196 = vpop.f32.mrb[0].mxu0
        %v1197 = vpop.f32.mrb[0].mxu0
        %v1198 = vadd.f32 %v903, %v1197
        %v1199 = vpop.f32.mrb[0].mxu0
        %1200 = vdwg.mxu0
        %vm1217 = vcmask 1042432
        %vm1218 = vcmask 1046532
        %vm1219 = vmor %vm1217, %vm1218
        %v1220 = vrot.slane %v197, 5
        %v1221 = vrot.slane %v1220, 4
        %v1222 = vrot.slane %v198, 5
        %v1223 = vsel %vm1219, %v1221, %v1222
        %v1224 = vrot.slane %v1222, 4
        %v1225 = vrot.slane %v199, 5
        %v1226 = vsel %vm1219, %v1224, %v1225
        %v1227 = vrot.slane %v200, 5
        %v1228 = vrot.slane %v1227, 4
        %v1229 = vrot.slane %v201, 5
        %v1230 = vsel %vm1219, %v1228, %v1229
        %v1231 = vrot.slane %v1229, 4
        %v1232 = vrot.slane %v202, 5
        %v1233 = vsel %vm1219, %v1231, %v1232
        %v1234 = vrot.slane %v203, 5
        %v1235 = vrot.slane %v1234, 4
        %v1236 = vrot.slane %v204, 5
        %v1237 = vsel %vm1219, %v1235, %v1236
        %v1238 = vrot.slane %v1236, 4
        %v1239 = vrot.slane %v205, 5
        %v1240 = vsel %vm1219, %v1238, %v1239
        %v1241 = vrot.slane %v206, 5
        %v1242 = vrot.slane %v1241, 4
        %v1243 = vrot.slane %v207, 5
        %v1244 = vsel %vm1219, %v1242, %v1243
        %v1245 = vrot.slane %v1243, 4
        %v1246 = vrot.slane %v208, 5
        %v1247 = vsel %vm1219, %v1245, %v1246
        %v1248 = vrot.slane %v209, 5
        %v1249 = vrot.slane %v1248, 4
        %v1250 = vrot.slane %v210, 5
        %v1251 = vsel %vm1219, %v1249, %v1250
        %v1252 = vrot.slane %v1250, 4
        %v1253 = vrot.slane %v211, 5
        %v1254 = vsel %vm1219, %v1252, %v1253
        %v1255 = vrot.slane %v212, 5
        %v1256 = vrot.slane %v1255, 4
        %v1257 = vrot.slane %v213, 5
        %v1258 = vsel %vm1219, %v1256, %v1257
        %v1259 = vrot.slane %v1257, 4
        %v1260 = vrot.slane %v214, 5
        %v1261 = vsel %vm1219, %v1259, %v1260
        %v1262 = vrot.slane %v215, 5
        %v1263 = vrot.slane %v1262, 4
        %v1264 = vrot.slane %v216, 5
        %v1265 = vsel %vm1219, %v1263, %v1264
        %v1266 = vrot.slane %v1264, 4
        %v1267 = vrot.slane %v217, 5
        %v1268 = vsel %vm1219, %v1266, %v1267
        %v1269 = vrot.slane %v218, 5
        %v1270 = vrot.slane %v1269, 4
        %v1271 = vrot.slane %v219, 5
        %v1272 = vsel %vm1219, %v1270, %v1271
        %v1273 = vrot.slane %v1271, 4
        %v1274 = vrot.slane %v220, 5
        %v1275 = vsel %vm1219, %v1273, %v1274
        %v1276 = vrot.slane %v221, 5
        %v1277 = vrot.slane %v1276, 4
        %v1278 = vrot.slane %v222, 5
        %v1279 = vsel %vm1219, %v1277, %v1278
        %v1280 = vrot.slane %v1278, 4
        %v1281 = vrot.slane %v223, 5
        %v1282 = vsel %vm1219, %v1280, %v1281
        %v1283 = vrot.slane %v224, 5
        %v1284 = vrot.slane %v1283, 4
        %v1285 = vrot.slane %v225, 5
        %v1286 = vsel %vm1219, %v1284, %v1285
        %v1287 = vrot.slane %v1285, 4
        %v1288 = vrot.slane %v226, 5
        %v1289 = vsel %vm1219, %v1287, %v1288
        %v1290 = vrot.slane %v227, 5
        %v1291 = vrot.slane %v1290, 4
        %v1292 = vrot.slane %v228, 5
        %v1293 = vsel %vm1219, %v1291, %v1292
        %v1294 = vrot.slane %v1292, 4
        %v1295 = vrot.slane %v229, 5
        %v1296 = vsel %vm1219, %v1294, %v1295
        %v1297 = vrot.slane %v230, 5
        %v1298 = vrot.slane %v1297, 4
        %v1299 = vrot.slane %v231, 5
        %v1300 = vsel %vm1219, %v1298, %v1299
        %v1301 = vrot.slane %v1299, 4
        %v1302 = vrot.slane %v232, 5
        %v1303 = vsel %vm1219, %v1301, %v1302
        %v1304 = vrot.slane %v233, 5
        %v1305 = vrot.slane %v1304, 4
        %v1306 = vrot.slane %v234, 5
        %v1307 = vsel %vm1219, %v1305, %v1306
        %v1308 = vrot.slane %v1306, 4
        %v1309 = vrot.slane %v235, 5
        %v1310 = vsel %vm1219, %v1308, %v1309
        %v1311 = vrot.slane %v236, 5
        %v1312 = vrot.slane %v1311, 4
        %v1313 = vrot.slane %v237, 5
        %v1314 = vsel %vm1219, %v1312, %v1313
        %v1315 = vrot.slane %v1313, 4
        %v1316 = vrot.slane %v238, 5
        %v1317 = vsel %vm1219, %v1315, %v1316
        %v1318 = vrot.slane %v239, 5
        %v1319 = vrot.slane %v1318, 4
        %v1320 = vrot.slane %v240, 5
        %v1321 = vsel %vm1219, %v1319, %v1320
        %v1322 = vrot.slane %v1320, 4
        %v1323 = vrot.slane %v241, 5
        %v1324 = vsel %vm1219, %v1322, %v1323
        %v1325 = vrot.slane %v242, 5
        %v1326 = vrot.slane %v1325, 4
        %v1327 = vrot.slane %v243, 5
        %v1328 = vsel %vm1219, %v1326, %v1327
        %v1329 = vrot.slane %v1327, 4
        %v1330 = vrot.slane %v244, 5
        %v1331 = vsel %vm1219, %v1329, %v1330
        %v1332 = vld [vmem:[%s1 + $0x10] sm:$0xf]
        %v1333 = vld [vmem:[%s1 + $0x14] sm:$0xf]
        %v1334 = vunpack.c.l.b16 %v1223
        %v1335 = vunpack.c.l.b16 %v1226
        %v1336 = vunpack.c.l.b16 %v1230
        %v1337 = vunpack.c.l.b16 %v1233
        %v1338 = vunpack.c.l.b16 %v1237
        %v1339 = vunpack.c.l.b16 %v1240
        %v1340 = vunpack.c.l.b16 %v1244
        %v1341 = vunpack.c.l.b16 %v1247
        %v1342 = vunpack.c.l.b16 %v1251
        %v1343 = vunpack.c.l.b16 %v1254
        %v1344 = vunpack.c.l.b16 %v1258
        %v1345 = vunpack.c.l.b16 %v1261
        %v1346 = vunpack.c.l.b16 %v1265
        %v1347 = vunpack.c.l.b16 %v1268
        %v1348 = vunpack.c.l.b16 %v1272
        %v1349 = vunpack.c.l.b16 %v1275
        %v1350 = vunpack.c.l.b16 %v1279
        %v1351 = vunpack.c.l.b16 %v1282
        %v1352 = vunpack.c.l.b16 %v1286
        %v1353 = vunpack.c.l.b16 %v1289
        %v1354 = vunpack.c.l.b16 %v1293
        %v1355 = vunpack.c.l.b16 %v1296
        %v1356 = vunpack.c.l.b16 %v1300
        %v1357 = vunpack.c.l.b16 %v1303
        %v1358 = vunpack.c.l.b16 %v1307
        %v1359 = vunpack.c.l.b16 %v1310
        %v1360 = vunpack.c.l.b16 %v1314
        %v1361 = vunpack.c.l.b16 %v1317
        %v1362 = vunpack.c.l.b16 %v1321
        %v1363 = vunpack.c.l.b16 %v1324
        %v1364 = vunpack.c.l.b16 %v1328
        %v1365 = vunpack.c.l.b16 %v1331
        %v1366 = vpack.c.b16 %v1335, %v1334
        %v1367 = vpack.c.b16 %v1337, %v1336
        %v1368 = vpack.c.b16 %v1339, %v1338
        %v1369 = vpack.c.b16 %v1341, %v1340
        %v1370 = vpack.c.b16 %v1343, %v1342
        %v1371 = vpack.c.b16 %v1345, %v1344
        %v1372 = vpack.c.b16 %v1347, %v1346
        %v1373 = vpack.c.b16 %v1349, %v1348
        %v1374 = vpack.c.b16 %v1351, %v1350
        %v1375 = vpack.c.b16 %v1353, %v1352
        %v1376 = vpack.c.b16 %v1355, %v1354
        %v1377 = vpack.c.b16 %v1357, %v1356
        %v1378 = vpack.c.b16 %v1359, %v1358
        %v1379 = vpack.c.b16 %v1361, %v1360
        %v1380 = vpack.c.b16 %v1363, %v1362
        %v1381 = vpack.c.b16 %v1365, %v1364
        %v1384 = vunpack.c.l.b16 %v1332
        %v1385 = vunpack.c.l.b16 %v1333
        %v1386 = vpack.c.b16 %v1385, %v1384
        %v1389 = vsel %vm696, %v1366, 0
        %v1392 = vsel %vm696, %v1367, 0
        %v1395 = vsel %vm696, %v1368, 0
        %v1398 = vsel %vm696, %v1369, 0
        %v1401 = vsel %vm696, %v1370, 0
        %v1404 = vsel %vm696, %v1371, 0
        %v1407 = vsel %vm696, %v1372, 0
        %v1410 = vsel %vm696, %v1373, 0
        %v1413 = vsel %vm696, %v1374, 0
        %v1416 = vsel %vm696, %v1375, 0
        %v1419 = vsel %vm696, %v1376, 0
        %v1422 = vsel %vm696, %v1377, 0
        %v1425 = vsel %vm696, %v1378, 0
        %v1428 = vsel %vm696, %v1379, 0
        %v1431 = vsel %vm696, %v1380, 0
        %v1434 = vsel %vm696, %v1381, 0
        %1436 = vmatprep.subr.bf16.mxu0 0
        %1437 = vmatpush1.bf16.msra.mxu0 %v1386
        %1438 = vmatprep.subr.bf16.mxu0 0
        %1439 = vmatpush1.bf16.msra.mxu0 0
        %1440 = vmatprep.subr.bf16.mxu0 0
        %1441 = vmatpush1.bf16.msra.mxu0 0
        %1442 = vmatprep.subr.bf16.mxu0 0
        %1443 = vmatpush1.bf16.msra.mxu0 0
        %1444 = vmatprep.subr.bf16.mxu0 0
        %1445 = vmatpush1.bf16.msra.mxu0 0
        %1446 = vmatprep.subr.bf16.mxu0 0
        %1447 = vmatpush1.bf16.msra.mxu0 0
        %1448 = vmatprep.subr.bf16.mxu0 0
        %1449 = vmatpush1.bf16.msra.mxu0 0
        %1450 = vmatprep.subr.bf16.mxu0 0
        %1451 = vmatpush1.bf16.msra.mxu0 0
        %1452 = vmatprep.subr.bf16.mxu0 0
        %1453 = vmatpush1.bf16.msra.mxu0 0
        %1454 = vmatprep.subr.bf16.mxu0 0
        %1455 = vmatpush1.bf16.msra.mxu0 0
        %1456 = vmatprep.subr.bf16.mxu0 0
        %1457 = vmatpush1.bf16.msra.mxu0 0
        %1458 = vmatprep.subr.bf16.mxu0 0
        %1459 = vmatpush1.bf16.msra.mxu0 0
        %1460 = vmatprep.subr.bf16.mxu0 0
        %1461 = vmatpush1.bf16.msra.mxu0 0
        %1462 = vmatprep.subr.bf16.mxu0 0
        %1463 = vmatpush1.bf16.msra.mxu0 0
        %1464 = vmatprep.subr.bf16.mxu0 0
        %1465 = vmatpush1.bf16.msra.mxu0 0
        %1466 = vmatprep.subr.bf16.mxu0 0
        %1467 = vmatpush1.bf16.msra.mxu0 0
        %1468 = vmatprep.mubr.bf16.mxu0 0
        %1469 = vmatmul.mubr.bf16.gmra.mrb[0].mxu0 %v1389
        %v1470 = vpop.f32.mrb[0].mxu0
        %v1471 = vadd.f32 0.0, %v1470
        %v1472 = vpop.f32.mrb[0].mxu0
        %v1473 = vpop.f32.mrb[0].mxu0
        %v1474 = vadd.f32 0.0, %v1473
        %v1475 = vpop.f32.mrb[0].mxu0
        %1476 = vmatprep.mubr.bf16.mxu0 0
        %1477 = vmatmul.mubr.bf16.gmra.mrb[0].mxu0 %v1392
        %v1478 = vpop.f32.mrb[0].mxu0
        %v1479 = vadd.f32 0.0, %v1478
        %v1480 = vpop.f32.mrb[0].mxu0
        %v1481 = vpop.f32.mrb[0].mxu0
        %v1482 = vadd.f32 0.0, %v1481
        %v1483 = vpop.f32.mrb[0].mxu0
        %1484 = vmatprep.mubr.bf16.mxu0 0
        %1485 = vmatmul.mubr.bf16.gmra.mrb[0].mxu0 %v1395
        %v1486 = vpop.f32.mrb[0].mxu0
        %v1487 = vadd.f32 0.0, %v1486
        %v1488 = vpop.f32.mrb[0].mxu0
        %v1489 = vpop.f32.mrb[0].mxu0
        %v1490 = vadd.f32 0.0, %v1489
        %v1491 = vpop.f32.mrb[0].mxu0
        %1492 = vmatprep.mubr.bf16.mxu0 0
        %1493 = vmatmul.mubr.bf16.gmra.mrb[0].mxu0 %v1398
        %v1494 = vpop.f32.mrb[0].mxu0
        %v1495 = vadd.f32 0.0, %v1494
        %v1496 = vpop.f32.mrb[0].mxu0
        %v1497 = vpop.f32.mrb[0].mxu0
        %v1498 = vadd.f32 0.0, %v1497
        %v1499 = vpop.f32.mrb[0].mxu0
        %1500 = vmatprep.mubr.bf16.mxu0 0
        %1501 = vmatmul.mubr.bf16.gmra.mrb[0].mxu0 %v1401
        %v1502 = vpop.f32.mrb[0].mxu0
        %v1503 = vadd.f32 0.0, %v1502
        %v1504 = vpop.f32.mrb[0].mxu0
        %v1505 = vpop.f32.mrb[0].mxu0
        %v1506 = vadd.f32 0.0, %v1505
        %v1507 = vpop.f32.mrb[0].mxu0
        %1508 = vmatprep.mubr.bf16.mxu0 0
        %1509 = vmatmul.mubr.bf16.gmra.mrb[0].mxu0 %v1404
        %v1510 = vpop.f32.mrb[0].mxu0
        %v1511 = vadd.f32 0.0, %v1510
        %v1512 = vpop.f32.mrb[0].mxu0
        %v1513 = vpop.f32.mrb[0].mxu0
        %v1514 = vadd.f32 0.0, %v1513
        %v1515 = vpop.f32.mrb[0].mxu0
        %1516 = vmatprep.mubr.bf16.mxu0 0
        %1517 = vmatmul.mubr.bf16.gmra.mrb[0].mxu0 %v1407
        %v1518 = vpop.f32.mrb[0].mxu0
        %v1519 = vadd.f32 0.0, %v1518
        %v1520 = vpop.f32.mrb[0].mxu0
        %v1521 = vpop.f32.mrb[0].mxu0
        %v1522 = vadd.f32 0.0, %v1521
        %v1523 = vpop.f32.mrb[0].mxu0
        %1524 = vmatprep.mubr.bf16.mxu0 0
        %1525 = vmatmul.mubr.bf16.gmra.mrb[0].mxu0 %v1410
        %v1526 = vpop.f32.mrb[0].mxu0
        %v1527 = vadd.f32 0.0, %v1526
        %v1528 = vpop.f32.mrb[0].mxu0
        %v1529 = vpop.f32.mrb[0].mxu0
        %v1530 = vadd.f32 0.0, %v1529
        %v1531 = vpop.f32.mrb[0].mxu0
        %1532 = vmatprep.mubr.bf16.mxu0 0
        %1533 = vmatmul.mubr.bf16.gmra.mrb[0].mxu0 %v1413
        %v1534 = vpop.f32.mrb[0].mxu0
        %v1535 = vadd.f32 0.0, %v1534
        %v1536 = vpop.f32.mrb[0].mxu0
        %v1537 = vpop.f32.mrb[0].mxu0
        %v1538 = vadd.f32 0.0, %v1537
        %v1539 = vpop.f32.mrb[0].mxu0
        %1540 = vmatprep.mubr.bf16.mxu0 0
        %1541 = vmatmul.mubr.bf16.gmra.mrb[0].mxu0 %v1416
        %v1542 = vpop.f32.mrb[0].mxu0
        %v1543 = vadd.f32 0.0, %v1542
        %v1544 = vpop.f32.mrb[0].mxu0
        %v1545 = vpop.f32.mrb[0].mxu0
        %v1546 = vadd.f32 0.0, %v1545
        %v1547 = vpop.f32.mrb[0].mxu0
        %1548 = vmatprep.mubr.bf16.mxu0 0
        %1549 = vmatmul.mubr.bf16.gmra.mrb[0].mxu0 %v1419
        %v1550 = vpop.f32.mrb[0].mxu0
        %v1551 = vadd.f32 0.0, %v1550
        %v1552 = vpop.f32.mrb[0].mxu0
        %v1553 = vpop.f32.mrb[0].mxu0
        %v1554 = vadd.f32 0.0, %v1553
        %v1555 = vpop.f32.mrb[0].mxu0
        %1556 = vmatprep.mubr.bf16.mxu0 0
        %1557 = vmatmul.mubr.bf16.gmra.mrb[0].mxu0 %v1422
        %v1558 = vpop.f32.mrb[0].mxu0
        %v1559 = vadd.f32 0.0, %v1558
        %v1560 = vpop.f32.mrb[0].mxu0
        %v1561 = vpop.f32.mrb[0].mxu0
        %v1562 = vadd.f32 0.0, %v1561
        %v1563 = vpop.f32.mrb[0].mxu0
        %1564 = vmatprep.mubr.bf16.mxu0 0
        %1565 = vmatmul.mubr.bf16.gmra.mrb[0].mxu0 %v1425
        %v1566 = vpop.f32.mrb[0].mxu0
        %v1567 = vadd.f32 0.0, %v1566
        %v1568 = vpop.f32.mrb[0].mxu0
        %v1569 = vpop.f32.mrb[0].mxu0
        %v1570 = vadd.f32 0.0, %v1569
        %v1571 = vpop.f32.mrb[0].mxu0
        %1572 = vmatprep.mubr.bf16.mxu0 0
        %1573 = vmatmul.mubr.bf16.gmra.mrb[0].mxu0 %v1428
        %v1574 = vpop.f32.mrb[0].mxu0
        %v1575 = vadd.f32 0.0, %v1574
        %v1576 = vpop.f32.mrb[0].mxu0
        %v1577 = vpop.f32.mrb[0].mxu0
        %v1578 = vadd.f32 0.0, %v1577
        %v1579 = vpop.f32.mrb[0].mxu0
        %1580 = vmatprep.mubr.bf16.mxu0 0
        %1581 = vmatmul.mubr.bf16.gmra.mrb[0].mxu0 %v1431
        %v1582 = vpop.f32.mrb[0].mxu0
        %v1583 = vadd.f32 0.0, %v1582
        %v1584 = vpop.f32.mrb[0].mxu0
        %v1585 = vpop.f32.mrb[0].mxu0
        %v1586 = vadd.f32 0.0, %v1585
        %v1587 = vpop.f32.mrb[0].mxu0
        %1588 = vmatprep.mubr.bf16.mxu0 0
        %1589 = vmatmul.mubr.bf16.gmra.mrb[0].mxu0 %v1434
        %v1590 = vpop.f32.mrb[0].mxu0
        %v1591 = vadd.f32 0.0, %v1590
        %v1592 = vpop.f32.mrb[0].mxu0
        %v1593 = vpop.f32.mrb[0].mxu0
        %v1594 = vadd.f32 0.0, %v1593
        %v1595 = vpop.f32.mrb[0].mxu0
        %1596 = vdwg.mxu0
        %v1597 = vadd.f32 %v1075, %v1471
        %v1598 = vadd.f32 %v1078, %v1474
        %v1599 = vadd.f32 %v1083, %v1479
        %v1600 = vadd.f32 %v1086, %v1482
        %v1601 = vadd.f32 %v1091, %v1487
        %v1602 = vadd.f32 %v1094, %v1490
        %v1603 = vadd.f32 %v1099, %v1495
        %v1604 = vadd.f32 %v1102, %v1498
        %v1605 = vadd.f32 %v1107, %v1503
        %v1606 = vadd.f32 %v1110, %v1506
        %v1607 = vadd.f32 %v1115, %v1511
        %v1608 = vadd.f32 %v1118, %v1514
        %v1609 = vadd.f32 %v1123, %v1519
        %v1610 = vadd.f32 %v1126, %v1522
        %v1611 = vadd.f32 %v1131, %v1527
        %v1612 = vadd.f32 %v1134, %v1530
        %v1613 = vadd.f32 %v1139, %v1535
        %v1614 = vadd.f32 %v1142, %v1538
        %v1615 = vadd.f32 %v1147, %v1543
        %v1616 = vadd.f32 %v1150, %v1546
        %v1617 = vadd.f32 %v1155, %v1551
        %v1618 = vadd.f32 %v1158, %v1554
        %v1619 = vadd.f32 %v1163, %v1559
        %v1620 = vadd.f32 %v1166, %v1562
        %v1621 = vadd.f32 %v1171, %v1567
        %v1622 = vadd.f32 %v1174, %v1570
        %v1623 = vadd.f32 %v1179, %v1575
        %v1624 = vadd.f32 %v1182, %v1578
        %v1625 = vadd.f32 %v1187, %v1583
        %v1626 = vadd.f32 %v1190, %v1586
        %v1627 = vadd.f32 %v1195, %v1591
        %v1628 = vadd.f32 %v1198, %v1594
        %v1629 = vld [vmem:[%s1 + $0x18] sm:$0xf]
        %v1630 = vld [vmem:[%s1 + $0x1c] sm:$0xf]
        %v1633 = vunpack.c.l.b16 %v245
        %v1634 = vunpack.c.l.b16 %v246
        %v1635 = vpack.c.b16 %v1634, %v1633
        %v1638 = vunpack.c.l.b16 %v1629
        %v1639 = vunpack.c.l.b16 %v1630
        %v1640 = vpack.c.b16 %v1639, %v1638
        %v1643 = vsel %vm696, %v1635, 0
        %1645 = vmatprep.subr.bf16.mxu0 0
        %1646 = vmatpush1.bf16.msra.mxu0 %v1640
        %1647 = vmatprep.subr.bf16.mxu0 0
        %1648 = vmatpush1.bf16.msra.mxu0 0
        %1649 = vmatprep.subr.bf16.mxu0 0
        %1650 = vmatpush1.bf16.msra.mxu0 0
        %1651 = vmatprep.subr.bf16.mxu0 0
        %1652 = vmatpush1.bf16.msra.mxu0 0
        %1653 = vmatprep.subr.bf16.mxu0 0
        %1654 = vmatpush1.bf16.msra.mxu0 0
        %1655 = vmatprep.subr.bf16.mxu0 0
        %1656 = vmatpush1.bf16.msra.mxu0 0
        %1657 = vmatprep.subr.bf16.mxu0 0
        %1658 = vmatpush1.bf16.msra.mxu0 0
        %1659 = vmatprep.subr.bf16.mxu0 0
        %1660 = vmatpush1.bf16.msra.mxu0 0
        %1661 = vmatprep.subr.bf16.mxu0 0
        %1662 = vmatpush1.bf16.msra.mxu0 0
        %1663 = vmatprep.subr.bf16.mxu0 0
        %1664 = vmatpush1.bf16.msra.mxu0 0
        %1665 = vmatprep.subr.bf16.mxu0 0
        %1666 = vmatpush1.bf16.msra.mxu0 0
        %1667 = vmatprep.subr.bf16.mxu0 0
        %1668 = vmatpush1.bf16.msra.mxu0 0
        %1669 = vmatprep.subr.bf16.mxu0 0
        %1670 = vmatpush1.bf16.msra.mxu0 0
        %1671 = vmatprep.subr.bf16.mxu0 0
        %1672 = vmatpush1.bf16.msra.mxu0 0
        %1673 = vmatprep.subr.bf16.mxu0 0
        %1674 = vmatpush1.bf16.msra.mxu0 0
        %1675 = vmatprep.subr.bf16.mxu0 0
        %1676 = vmatpush1.bf16.msra.mxu0 0
        %1677 = vmatprep.mubr.bf16.mxu0 0
        %1678 = vmatmul.mubr.bf16.gmra.mrb[0].mxu0 %v996
        %v1679 = vpop.f32.mrb[0].mxu0
        %v1680 = vadd.f32 0.0, %v1679
        %v1681 = vpop.f32.mrb[0].mxu0
        %v1682 = vpop.f32.mrb[0].mxu0
        %v1683 = vadd.f32 0.0, %v1682
        %v1684 = vpop.f32.mrb[0].mxu0
        %1685 = vmatprep.mubr.bf16.mxu0 0
        %1686 = vmatmul.mubr.bf16.gmra.mrb[0].mxu0 %v999
        %v1687 = vpop.f32.mrb[0].mxu0
        %v1688 = vadd.f32 0.0, %v1687
        %v1689 = vpop.f32.mrb[0].mxu0
        %v1690 = vpop.f32.mrb[0].mxu0
        %v1691 = vadd.f32 0.0, %v1690
        %v1692 = vpop.f32.mrb[0].mxu0
        %1693 = vmatprep.mubr.bf16.mxu0 0
        %1694 = vmatmul.mubr.bf16.gmra.mrb[0].mxu0 %v1002
        %v1695 = vpop.f32.mrb[0].mxu0
        %v1696 = vadd.f32 0.0, %v1695
        %v1697 = vpop.f32.mrb[0].mxu0
        %v1698 = vpop.f32.mrb[0].mxu0
        %v1699 = vadd.f32 0.0, %v1698
        %v1700 = vpop.f32.mrb[0].mxu0
        %1701 = vmatprep.mubr.bf16.mxu0 0
        %1702 = vmatmul.mubr.bf16.gmra.mrb[0].mxu0 %v1005
        %v1703 = vpop.f32.mrb[0].mxu0
        %v1704 = vadd.f32 0.0, %v1703
        %v1705 = vpop.f32.mrb[0].mxu0
        %v1706 = vpop.f32.mrb[0].mxu0
        %v1707 = vadd.f32 0.0, %v1706
        %v1708 = vpop.f32.mrb[0].mxu0
        %1709 = vmatprep.mubr.bf16.mxu0 0
        %1710 = vmatmul.mubr.bf16.gmra.mrb[0].mxu0 %v1008
        %v1711 = vpop.f32.mrb[0].mxu0
        %v1712 = vadd.f32 0.0, %v1711
        %v1713 = vpop.f32.mrb[0].mxu0
        %v1714 = vpop.f32.mrb[0].mxu0
        %v1715 = vadd.f32 0.0, %v1714
        %v1716 = vpop.f32.mrb[0].mxu0
        %1717 = vmatprep.mubr.bf16.mxu0 0
        %1718 = vmatmul.mubr.bf16.gmra.mrb[0].mxu0 %v1011
        %v1719 = vpop.f32.mrb[0].mxu0
        %v1720 = vadd.f32 0.0, %v1719
        %v1721 = vpop.f32.mrb[0].mxu0
        %v1722 = vpop.f32.mrb[0].mxu0
        %v1723 = vadd.f32 0.0, %v1722
        %v1724 = vpop.f32.mrb[0].mxu0
        %1725 = vmatprep.mubr.bf16.mxu0 0
        %1726 = vmatmul.mubr.bf16.gmra.mrb[0].mxu0 %v1014
        %v1727 = vpop.f32.mrb[0].mxu0
        %v1728 = vadd.f32 0.0, %v1727
        %v1729 = vpop.f32.mrb[0].mxu0
        %v1730 = vpop.f32.mrb[0].mxu0
        %v1731 = vadd.f32 0.0, %v1730
        %v1732 = vpop.f32.mrb[0].mxu0
        %1733 = vmatprep.mubr.bf16.mxu0 0
        %1734 = vmatmul.mubr.bf16.gmra.mrb[0].mxu0 %v1017
        %v1735 = vpop.f32.mrb[0].mxu0
        %v1736 = vadd.f32 0.0, %v1735
        %v1737 = vpop.f32.mrb[0].mxu0
        %v1738 = vpop.f32.mrb[0].mxu0
        %v1739 = vadd.f32 0.0, %v1738
        %v1740 = vpop.f32.mrb[0].mxu0
        %1741 = vmatprep.mubr.bf16.mxu0 0
        %1742 = vmatmul.mubr.bf16.gmra.mrb[0].mxu0 %v1020
        %v1743 = vpop.f32.mrb[0].mxu0
        %v1744 = vadd.f32 0.0, %v1743
        %v1745 = vpop.f32.mrb[0].mxu0
        %v1746 = vpop.f32.mrb[0].mxu0
        %v1747 = vadd.f32 0.0, %v1746
        %v1748 = vpop.f32.mrb[0].mxu0
        %1749 = vmatprep.mubr.bf16.mxu0 0
        %1750 = vmatmul.mubr.bf16.gmra.mrb[0].mxu0 %v1023
        %v1751 = vpop.f32.mrb[0].mxu0
        %v1752 = vadd.f32 0.0, %v1751
        %v1753 = vpop.f32.mrb[0].mxu0
        %v1754 = vpop.f32.mrb[0].mxu0
        %v1755 = vadd.f32 0.0, %v1754
        %v1756 = vpop.f32.mrb[0].mxu0
        %1757 = vmatprep.mubr.bf16.mxu0 0
        %1758 = vmatmul.mubr.bf16.gmra.mrb[0].mxu0 %v1026
        %v1759 = vpop.f32.mrb[0].mxu0
        %v1760 = vadd.f32 0.0, %v1759
        %v1761 = vpop.f32.mrb[0].mxu0
        %v1762 = vpop.f32.mrb[0].mxu0
        %v1763 = vadd.f32 0.0, %v1762
        %v1764 = vpop.f32.mrb[0].mxu0
        %1765 = vmatprep.mubr.bf16.mxu0 0
        %1766 = vmatmul.mubr.bf16.gmra.mrb[0].mxu0 %v1029
        %v1767 = vpop.f32.mrb[0].mxu0
        %v1768 = vadd.f32 0.0, %v1767
        %v1769 = vpop.f32.mrb[0].mxu0
        %v1770 = vpop.f32.mrb[0].mxu0
        %v1771 = vadd.f32 0.0, %v1770
        %v1772 = vpop.f32.mrb[0].mxu0
        %1773 = vmatprep.mubr.bf16.mxu0 0
        %1774 = vmatmul.mubr.bf16.gmra.mrb[0].mxu0 %v1032
        %v1775 = vpop.f32.mrb[0].mxu0
        %v1776 = vadd.f32 0.0, %v1775
        %v1777 = vpop.f32.mrb[0].mxu0
        %v1778 = vpop.f32.mrb[0].mxu0
        %v1779 = vadd.f32 0.0, %v1778
        %v1780 = vpop.f32.mrb[0].mxu0
        %1781 = vmatprep.mubr.bf16.mxu0 0
        %1782 = vmatmul.mubr.bf16.gmra.mrb[0].mxu0 %v1035
        %v1783 = vpop.f32.mrb[0].mxu0
        %v1784 = vadd.f32 0.0, %v1783
        %v1785 = vpop.f32.mrb[0].mxu0
        %v1786 = vpop.f32.mrb[0].mxu0
        %v1787 = vadd.f32 0.0, %v1786
        %v1788 = vpop.f32.mrb[0].mxu0
        %1789 = vmatprep.mubr.bf16.mxu0 0
        %1790 = vmatmul.mubr.bf16.gmra.mrb[0].mxu0 %v1038
        %v1791 = vpop.f32.mrb[0].mxu0
        %v1792 = vadd.f32 0.0, %v1791
        %v1793 = vpop.f32.mrb[0].mxu0
        %v1794 = vpop.f32.mrb[0].mxu0
        %v1795 = vadd.f32 0.0, %v1794
        %v1796 = vpop.f32.mrb[0].mxu0
        %1797 = vmatprep.mubr.bf16.mxu0 0
        %1798 = vmatmul.mubr.bf16.gmra.mrb[0].mxu0 %v1643
        %v1799 = vpop.f32.mrb[0].mxu0
        %v1800 = vadd.f32 0.0, %v1799
        %v1801 = vpop.f32.mrb[0].mxu0
        %v1802 = vpop.f32.mrb[0].mxu0
        %v1803 = vadd.f32 0.0, %v1802
        %v1804 = vpop.f32.mrb[0].mxu0
        %1805 = vdwg.mxu0
        %v1806 = vadd.f32 %v1597, %v1680
        %v1807 = vadd.f32 %v1598, %v1683
        %v1808 = vadd.f32 %v1599, %v1688
        %v1809 = vadd.f32 %v1600, %v1691
        %v1810 = vadd.f32 %v1601, %v1696
        %v1811 = vadd.f32 %v1602, %v1699
        %v1812 = vadd.f32 %v1603, %v1704
        %v1813 = vadd.f32 %v1604, %v1707
        %v1814 = vadd.f32 %v1605, %v1712
        %v1815 = vadd.f32 %v1606, %v1715
        %v1816 = vadd.f32 %v1607, %v1720
        %v1817 = vadd.f32 %v1608, %v1723
        %v1818 = vadd.f32 %v1609, %v1728
        %v1819 = vadd.f32 %v1610, %v1731
        %v1820 = vadd.f32 %v1611, %v1736
        %v1821 = vadd.f32 %v1612, %v1739
        %v1822 = vadd.f32 %v1613, %v1744
        %v1823 = vadd.f32 %v1614, %v1747
        %v1824 = vadd.f32 %v1615, %v1752
        %v1825 = vadd.f32 %v1616, %v1755
        %v1826 = vadd.f32 %v1617, %v1760
        %v1827 = vadd.f32 %v1618, %v1763
        %v1828 = vadd.f32 %v1619, %v1768
        %v1829 = vadd.f32 %v1620, %v1771
        %v1830 = vadd.f32 %v1621, %v1776
        %v1831 = vadd.f32 %v1622, %v1779
        %v1832 = vadd.f32 %v1623, %v1784
        %v1833 = vadd.f32 %v1624, %v1787
        %v1834 = vadd.f32 %v1625, %v1792
        %v1835 = vadd.f32 %v1626, %v1795
        %v1836 = vadd.f32 %v1627, %v1800
        %v1837 = vadd.f32 %v1628, %v1803
        %v1839 = vshrl.u32 %v245, 16
        %v1841 = vrot.slane %v1839, 4
        %v1842 = vshll.u32 %v245, 16
        %v1844 = vrot.slane %v1842, 5
        %v1845 = vor.u32 %v1841, %v1844
        %v1846 = vrot.slane %v1845, 4
        %v1848 = vshll.u32 %v246, 16
        %v1850 = vrot.slane %v1848, 5
        %v1851 = vsel %vm255, %v1846, %v1850
        %v1852 = vshrl.u32 %v246, 16
        %v1854 = vrot.slane %v1852, 4
        %v1855 = vor.u32 %v1854, %v1850
        %v1856 = vrot.slane %v1855, 4
        %v1858 = vshll.u32 %v247, 16
        %v1860 = vrot.slane %v1858, 5
        %v1861 = vsel %vm255, %v1856, %v1860
        %v1862 = vld [vmem:[%s1 + $0x20] sm:$0xf]
        %v1863 = vld [vmem:[%s1 + $0x24] sm:$0xf]
        %v1864 = vunpack.c.l.b16 %v1851
        %v1865 = vunpack.c.l.b16 %v1861
        %v1866 = vpack.c.b16 %v1865, %v1864
        %v1869 = vunpack.c.l.b16 %v1862
        %v1870 = vunpack.c.l.b16 %v1863
        %v1871 = vpack.c.b16 %v1870, %v1869
        %v1874 = vsel %vm696, %v1866, 0
        %1876 = vmatprep.subr.bf16.mxu0 0
        %1877 = vmatpush1.bf16.msra.mxu0 %v1871
        %1878 = vmatprep.subr.bf16.mxu0 0
        %1879 = vmatpush1.bf16.msra.mxu0 0
        %1880 = vmatprep.subr.bf16.mxu0 0
        %1881 = vmatpush1.bf16.msra.mxu0 0
        %1882 = vmatprep.subr.bf16.mxu0 0
        %1883 = vmatpush1.bf16.msra.mxu0 0
        %1884 = vmatprep.subr.bf16.mxu0 0
        %1885 = vmatpush1.bf16.msra.mxu0 0
        %1886 = vmatprep.subr.bf16.mxu0 0
        %1887 = vmatpush1.bf16.msra.mxu0 0
        %1888 = vmatprep.subr.bf16.mxu0 0
        %1889 = vmatpush1.bf16.msra.mxu0 0
        %1890 = vmatprep.subr.bf16.mxu0 0
        %1891 = vmatpush1.bf16.msra.mxu0 0
        %1892 = vmatprep.subr.bf16.mxu0 0
        %1893 = vmatpush1.bf16.msra.mxu0 0
        %1894 = vmatprep.subr.bf16.mxu0 0
        %1895 = vmatpush1.bf16.msra.mxu0 0
        %1896 = vmatprep.subr.bf16.mxu0 0
        %1897 = vmatpush1.bf16.msra.mxu0 0
        %1898 = vmatprep.subr.bf16.mxu0 0
        %1899 = vmatpush1.bf16.msra.mxu0 0
        %1900 = vmatprep.subr.bf16.mxu0 0
        %1901 = vmatpush1.bf16.msra.mxu0 0
        %1902 = vmatprep.subr.bf16.mxu0 0
        %1903 = vmatpush1.bf16.msra.mxu0 0
        %1904 = vmatprep.subr.bf16.mxu0 0
        %1905 = vmatpush1.bf16.msra.mxu0 0
        %1906 = vmatprep.subr.bf16.mxu0 0
        %1907 = vmatpush1.bf16.msra.mxu0 0
        %1908 = vmatprep.mubr.bf16.mxu0 0
        %1909 = vmatmul.mubr.bf16.gmra.mrb[0].mxu0 %v701
        %v1910 = vpop.f32.mrb[0].mxu0
        %v1911 = vadd.f32 0.0, %v1910
        %v1912 = vpop.f32.mrb[0].mxu0
        %v1913 = vpop.f32.mrb[0].mxu0
        %v1914 = vadd.f32 0.0, %v1913
        %v1915 = vpop.f32.mrb[0].mxu0
        %1916 = vmatprep.mubr.bf16.mxu0 0
        %1917 = vmatmul.mubr.bf16.gmra.mrb[0].mxu0 %v704
        %v1918 = vpop.f32.mrb[0].mxu0
        %v1919 = vadd.f32 0.0, %v1918
        %v1920 = vpop.f32.mrb[0].mxu0
        %v1921 = vpop.f32.mrb[0].mxu0
        %v1922 = vadd.f32 0.0, %v1921
        %v1923 = vpop.f32.mrb[0].mxu0
        %1924 = vmatprep.mubr.bf16.mxu0 0
        %1925 = vmatmul.mubr.bf16.gmra.mrb[0].mxu0 %v707
        %v1926 = vpop.f32.mrb[0].mxu0
        %v1927 = vadd.f32 0.0, %v1926
        %v1928 = vpop.f32.mrb[0].mxu0
        %v1929 = vpop.f32.mrb[0].mxu0
        %v1930 = vadd.f32 0.0, %v1929
        %v1931 = vpop.f32.mrb[0].mxu0
        %1932 = vmatprep.mubr.bf16.mxu0 0
        %1933 = vmatmul.mubr.bf16.gmra.mrb[0].mxu0 %v710
        %v1934 = vpop.f32.mrb[0].mxu0
        %v1935 = vadd.f32 0.0, %v1934
        %v1936 = vpop.f32.mrb[0].mxu0
        %v1937 = vpop.f32.mrb[0].mxu0
        %v1938 = vadd.f32 0.0, %v1937
        %v1939 = vpop.f32.mrb[0].mxu0
        %1940 = vmatprep.mubr.bf16.mxu0 0
        %1941 = vmatmul.mubr.bf16.gmra.mrb[0].mxu0 %v713
        %v1942 = vpop.f32.mrb[0].mxu0
        %v1943 = vadd.f32 0.0, %v1942
        %v1944 = vpop.f32.mrb[0].mxu0
        %v1945 = vpop.f32.mrb[0].mxu0
        %v1946 = vadd.f32 0.0, %v1945
        %v1947 = vpop.f32.mrb[0].mxu0
        %1948 = vmatprep.mubr.bf16.mxu0 0
        %1949 = vmatmul.mubr.bf16.gmra.mrb[0].mxu0 %v716
        %v1950 = vpop.f32.mrb[0].mxu0
        %v1951 = vadd.f32 0.0, %v1950
        %v1952 = vpop.f32.mrb[0].mxu0
        %v1953 = vpop.f32.mrb[0].mxu0
        %v1954 = vadd.f32 0.0, %v1953
        %v1955 = vpop.f32.mrb[0].mxu0
        %1956 = vmatprep.mubr.bf16.mxu0 0
        %1957 = vmatmul.mubr.bf16.gmra.mrb[0].mxu0 %v719
        %v1958 = vpop.f32.mrb[0].mxu0
        %v1959 = vadd.f32 0.0, %v1958
        %v1960 = vpop.f32.mrb[0].mxu0
        %v1961 = vpop.f32.mrb[0].mxu0
        %v1962 = vadd.f32 0.0, %v1961
        %v1963 = vpop.f32.mrb[0].mxu0
        %1964 = vmatprep.mubr.bf16.mxu0 0
        %1965 = vmatmul.mubr.bf16.gmra.mrb[0].mxu0 %v722
        %v1966 = vpop.f32.mrb[0].mxu0
        %v1967 = vadd.f32 0.0, %v1966
        %v1968 = vpop.f32.mrb[0].mxu0
        %v1969 = vpop.f32.mrb[0].mxu0
        %v1970 = vadd.f32 0.0, %v1969
        %v1971 = vpop.f32.mrb[0].mxu0
        %1972 = vmatprep.mubr.bf16.mxu0 0
        %1973 = vmatmul.mubr.bf16.gmra.mrb[0].mxu0 %v725
        %v1974 = vpop.f32.mrb[0].mxu0
        %v1975 = vadd.f32 0.0, %v1974
        %v1976 = vpop.f32.mrb[0].mxu0
        %v1977 = vpop.f32.mrb[0].mxu0
        %v1978 = vadd.f32 0.0, %v1977
        %v1979 = vpop.f32.mrb[0].mxu0
        %1980 = vmatprep.mubr.bf16.mxu0 0
        %1981 = vmatmul.mubr.bf16.gmra.mrb[0].mxu0 %v728
        %v1982 = vpop.f32.mrb[0].mxu0
        %v1983 = vadd.f32 0.0, %v1982
        %v1984 = vpop.f32.mrb[0].mxu0
        %v1985 = vpop.f32.mrb[0].mxu0
        %v1986 = vadd.f32 0.0, %v1985
        %v1987 = vpop.f32.mrb[0].mxu0
        %1988 = vmatprep.mubr.bf16.mxu0 0
        %1989 = vmatmul.mubr.bf16.gmra.mrb[0].mxu0 %v731
        %v1990 = vpop.f32.mrb[0].mxu0
        %v1991 = vadd.f32 0.0, %v1990
        %v1992 = vpop.f32.mrb[0].mxu0
        %v1993 = vpop.f32.mrb[0].mxu0
        %v1994 = vadd.f32 0.0, %v1993
        %v1995 = vpop.f32.mrb[0].mxu0
        %1996 = vmatprep.mubr.bf16.mxu0 0
        %1997 = vmatmul.mubr.bf16.gmra.mrb[0].mxu0 %v734
        %v1998 = vpop.f32.mrb[0].mxu0
        %v1999 = vadd.f32 0.0, %v1998
        %v2000 = vpop.f32.mrb[0].mxu0
        %v2001 = vpop.f32.mrb[0].mxu0
        %v2002 = vadd.f32 0.0, %v2001
        %v2003 = vpop.f32.mrb[0].mxu0
        %2004 = vmatprep.mubr.bf16.mxu0 0
        %2005 = vmatmul.mubr.bf16.gmra.mrb[0].mxu0 %v737
        %v2006 = vpop.f32.mrb[0].mxu0
        %v2007 = vadd.f32 0.0, %v2006
        %v2008 = vpop.f32.mrb[0].mxu0
        %v2009 = vpop.f32.mrb[0].mxu0
        %v2010 = vadd.f32 0.0, %v2009
        %v2011 = vpop.f32.mrb[0].mxu0
        %2012 = vmatprep.mubr.bf16.mxu0 0
        %2013 = vmatmul.mubr.bf16.gmra.mrb[0].mxu0 %v740
        %v2014 = vpop.f32.mrb[0].mxu0
        %v2015 = vadd.f32 0.0, %v2014
        %v2016 = vpop.f32.mrb[0].mxu0
        %v2017 = vpop.f32.mrb[0].mxu0
        %v2018 = vadd.f32 0.0, %v2017
        %v2019 = vpop.f32.mrb[0].mxu0
        %2020 = vmatprep.mubr.bf16.mxu0 0
        %2021 = vmatmul.mubr.bf16.gmra.mrb[0].mxu0 %v743
        %v2022 = vpop.f32.mrb[0].mxu0
        %v2023 = vadd.f32 0.0, %v2022
        %v2024 = vpop.f32.mrb[0].mxu0
        %v2025 = vpop.f32.mrb[0].mxu0
        %v2026 = vadd.f32 0.0, %v2025
        %v2027 = vpop.f32.mrb[0].mxu0
        %2028 = vmatprep.mubr.bf16.mxu0 0
        %2029 = vmatmul.mubr.bf16.gmra.mrb[0].mxu0 %v1874
        %v2030 = vpop.f32.mrb[0].mxu0
        %v2031 = vadd.f32 0.0, %v2030
        %v2032 = vpop.f32.mrb[0].mxu0
        %v2033 = vpop.f32.mrb[0].mxu0
        %v2034 = vadd.f32 0.0, %v2033
        %v2035 = vpop.f32.mrb[0].mxu0
        %2036 = vdwg.mxu0
        %v2037 = vadd.f32 %v1806, %v1911
        %v2038 = vadd.f32 %v1807, %v1914
        %v2039 = vadd.f32 %v1808, %v1919
        %v2040 = vadd.f32 %v1809, %v1922
        %v2041 = vadd.f32 %v1810, %v1927
        %v2042 = vadd.f32 %v1811, %v1930
        %v2043 = vadd.f32 %v1812, %v1935
        %v2044 = vadd.f32 %v1813, %v1938
        %v2045 = vadd.f32 %v1814, %v1943
        %v2046 = vadd.f32 %v1815, %v1946
        %v2047 = vadd.f32 %v1816, %v1951
        %v2048 = vadd.f32 %v1817, %v1954
        %v2049 = vadd.f32 %v1818, %v1959
        %v2050 = vadd.f32 %v1819, %v1962
        %v2051 = vadd.f32 %v1820, %v1967
        %v2052 = vadd.f32 %v1821, %v1970
        %v2053 = vadd.f32 %v1822, %v1975
        %v2054 = vadd.f32 %v1823, %v1978
        %v2055 = vadd.f32 %v1824, %v1983
        %v2056 = vadd.f32 %v1825, %v1986
        %v2057 = vadd.f32 %v1826, %v1991
        %v2058 = vadd.f32 %v1827, %v1994
        %v2059 = vadd.f32 %v1828, %v1999
        %v2060 = vadd.f32 %v1829, %v2002
        %v2061 = vadd.f32 %v1830, %v2007
        %v2062 = vadd.f32 %v1831, %v2010
        %v2063 = vadd.f32 %v1832, %v2015
        %v2064 = vadd.f32 %v1833, %v2018
        %v2065 = vadd.f32 %v1834, %v2023
        %v2066 = vadd.f32 %v1835, %v2026
        %v2067 = vadd.f32 %v1836, %v2031
        %v2068 = vadd.f32 %v1837, %v2034
        %v2070 = vrot.slane %v245, 5
        %v2071 = vrot.slane %v2070, 4
        %v2072 = vrot.slane %v246, 5
        %v2073 = vsel %vm1219, %v2071, %v2072
        %v2074 = vrot.slane %v2072, 4
        %v2075 = vrot.slane %v247, 5
        %v2076 = vsel %vm1219, %v2074, %v2075
        %v2077 = vld [vmem:[%s1 + $0x28] sm:$0xf]
        %v2078 = vld [vmem:[%s1 + $0x2c] sm:$0xf]
        %v2079 = vunpack.c.l.b16 %v2073
        %v2080 = vunpack.c.l.b16 %v2076
        %v2081 = vpack.c.b16 %v2080, %v2079
        %v2084 = vunpack.c.l.b16 %v2077
        %v2085 = vunpack.c.l.b16 %v2078
        %v2086 = vpack.c.b16 %v2085, %v2084
        %v2089 = vsel %vm696, %v2081, 0
        %2091 = vmatprep.subr.bf16.mxu0 0
        %2092 = vmatpush1.bf16.msra.mxu0 %v2086
        %2093 = vmatprep.subr.bf16.mxu0 0
        %2094 = vmatpush1.bf16.msra.mxu0 0
        %2095 = vmatprep.subr.bf16.mxu0 0
        %2096 = vmatpush1.bf16.msra.mxu0 0
        %2097 = vmatprep.subr.bf16.mxu0 0
        %2098 = vmatpush1.bf16.msra.mxu0 0
        %2099 = vmatprep.subr.bf16.mxu0 0
        %2100 = vmatpush1.bf16.msra.mxu0 0
        %2101 = vmatprep.subr.bf16.mxu0 0
        %2102 = vmatpush1.bf16.msra.mxu0 0
        %2103 = vmatprep.subr.bf16.mxu0 0
        %2104 = vmatpush1.bf16.msra.mxu0 0
        %2105 = vmatprep.subr.bf16.mxu0 0
        %2106 = vmatpush1.bf16.msra.mxu0 0
        %2107 = vmatprep.subr.bf16.mxu0 0
        %2108 = vmatpush1.bf16.msra.mxu0 0
        %2109 = vmatprep.subr.bf16.mxu0 0
        %2110 = vmatpush1.bf16.msra.mxu0 0
        %2111 = vmatprep.subr.bf16.mxu0 0
        %2112 = vmatpush1.bf16.msra.mxu0 0
        %2113 = vmatprep.subr.bf16.mxu0 0
        %2114 = vmatpush1.bf16.msra.mxu0 0
        %2115 = vmatprep.subr.bf16.mxu0 0
        %2116 = vmatpush1.bf16.msra.mxu0 0
        %2117 = vmatprep.subr.bf16.mxu0 0
        %2118 = vmatpush1.bf16.msra.mxu0 0
        %2119 = vmatprep.subr.bf16.mxu0 0
        %2120 = vmatpush1.bf16.msra.mxu0 0
        %2121 = vmatprep.subr.bf16.mxu0 0
        %2122 = vmatpush1.bf16.msra.mxu0 0
        %2123 = vmatprep.mubr.bf16.mxu0 0
        %2124 = vmatmul.mubr.bf16.gmra.mrb[0].mxu0 %v1392
        %v2125 = vpop.f32.mrb[0].mxu0
        %v2126 = vadd.f32 0.0, %v2125
        %v2127 = vpop.f32.mrb[0].mxu0
        %v2128 = vpop.f32.mrb[0].mxu0
        %v2129 = vadd.f32 0.0, %v2128
        %v2130 = vpop.f32.mrb[0].mxu0
        %2131 = vmatprep.mubr.bf16.mxu0 0
        %2132 = vmatmul.mubr.bf16.gmra.mrb[0].mxu0 %v1395
        %v2133 = vpop.f32.mrb[0].mxu0
        %v2134 = vadd.f32 0.0, %v2133
        %v2135 = vpop.f32.mrb[0].mxu0
        %v2136 = vpop.f32.mrb[0].mxu0
        %v2137 = vadd.f32 0.0, %v2136
        %v2138 = vpop.f32.mrb[0].mxu0
        %2139 = vmatprep.mubr.bf16.mxu0 0
        %2140 = vmatmul.mubr.bf16.gmra.mrb[0].mxu0 %v1398
        %v2141 = vpop.f32.mrb[0].mxu0
        %v2142 = vadd.f32 0.0, %v2141
        %v2143 = vpop.f32.mrb[0].mxu0
        %v2144 = vpop.f32.mrb[0].mxu0
        %v2145 = vadd.f32 0.0, %v2144
        %v2146 = vpop.f32.mrb[0].mxu0
        %2147 = vmatprep.mubr.bf16.mxu0 0
        %2148 = vmatmul.mubr.bf16.gmra.mrb[0].mxu0 %v1401
        %v2149 = vpop.f32.mrb[0].mxu0
        %v2150 = vadd.f32 0.0, %v2149
        %v2151 = vpop.f32.mrb[0].mxu0
        %v2152 = vpop.f32.mrb[0].mxu0
        %v2153 = vadd.f32 0.0, %v2152
        %v2154 = vpop.f32.mrb[0].mxu0
        %2155 = vmatprep.mubr.bf16.mxu0 0
        %2156 = vmatmul.mubr.bf16.gmra.mrb[0].mxu0 %v1404
        %v2157 = vpop.f32.mrb[0].mxu0
        %v2158 = vadd.f32 0.0, %v2157
        %v2159 = vpop.f32.mrb[0].mxu0
        %v2160 = vpop.f32.mrb[0].mxu0
        %v2161 = vadd.f32 0.0, %v2160
        %v2162 = vpop.f32.mrb[0].mxu0
        %2163 = vmatprep.mubr.bf16.mxu0 0
        %2164 = vmatmul.mubr.bf16.gmra.mrb[0].mxu0 %v1407
        %v2165 = vpop.f32.mrb[0].mxu0
        %v2166 = vadd.f32 0.0, %v2165
        %v2167 = vpop.f32.mrb[0].mxu0
        %v2168 = vpop.f32.mrb[0].mxu0
        %v2169 = vadd.f32 0.0, %v2168
        %v2170 = vpop.f32.mrb[0].mxu0
        %2171 = vmatprep.mubr.bf16.mxu0 0
        %2172 = vmatmul.mubr.bf16.gmra.mrb[0].mxu0 %v1410
        %v2173 = vpop.f32.mrb[0].mxu0
        %v2174 = vadd.f32 0.0, %v2173
        %v2175 = vpop.f32.mrb[0].mxu0
        %v2176 = vpop.f32.mrb[0].mxu0
        %v2177 = vadd.f32 0.0, %v2176
        %v2178 = vpop.f32.mrb[0].mxu0
        %2179 = vmatprep.mubr.bf16.mxu0 0
        %2180 = vmatmul.mubr.bf16.gmra.mrb[0].mxu0 %v1413
        %v2181 = vpop.f32.mrb[0].mxu0
        %v2182 = vadd.f32 0.0, %v2181
        %v2183 = vpop.f32.mrb[0].mxu0
        %v2184 = vpop.f32.mrb[0].mxu0
        %v2185 = vadd.f32 0.0, %v2184
        %v2186 = vpop.f32.mrb[0].mxu0
        %2187 = vmatprep.mubr.bf16.mxu0 0
        %2188 = vmatmul.mubr.bf16.gmra.mrb[0].mxu0 %v1416
        %v2189 = vpop.f32.mrb[0].mxu0
        %v2190 = vadd.f32 0.0, %v2189
        %v2191 = vpop.f32.mrb[0].mxu0
        %v2192 = vpop.f32.mrb[0].mxu0
        %v2193 = vadd.f32 0.0, %v2192
        %v2194 = vpop.f32.mrb[0].mxu0
        %2195 = vmatprep.mubr.bf16.mxu0 0
        %2196 = vmatmul.mubr.bf16.gmra.mrb[0].mxu0 %v1419
        %v2197 = vpop.f32.mrb[0].mxu0
        %v2198 = vadd.f32 0.0, %v2197
        %v2199 = vpop.f32.mrb[0].mxu0
        %v2200 = vpop.f32.mrb[0].mxu0
        %v2201 = vadd.f32 0.0, %v2200
        %v2202 = vpop.f32.mrb[0].mxu0
        %2203 = vmatprep.mubr.bf16.mxu0 0
        %2204 = vmatmul.mubr.bf16.gmra.mrb[0].mxu0 %v1422
        %v2205 = vpop.f32.mrb[0].mxu0
        %v2206 = vadd.f32 0.0, %v2205
        %v2207 = vpop.f32.mrb[0].mxu0
        %v2208 = vpop.f32.mrb[0].mxu0
        %v2209 = vadd.f32 0.0, %v2208
        %v2210 = vpop.f32.mrb[0].mxu0
        %2211 = vmatprep.mubr.bf16.mxu0 0
        %2212 = vmatmul.mubr.bf16.gmra.mrb[0].mxu0 %v1425
        %v2213 = vpop.f32.mrb[0].mxu0
        %v2214 = vadd.f32 0.0, %v2213
        %v2215 = vpop.f32.mrb[0].mxu0
        %v2216 = vpop.f32.mrb[0].mxu0
        %v2217 = vadd.f32 0.0, %v2216
        %v2218 = vpop.f32.mrb[0].mxu0
        %2219 = vmatprep.mubr.bf16.mxu0 0
        %2220 = vmatmul.mubr.bf16.gmra.mrb[0].mxu0 %v1428
        %v2221 = vpop.f32.mrb[0].mxu0
        %v2222 = vadd.f32 0.0, %v2221
        %v2223 = vpop.f32.mrb[0].mxu0
        %v2224 = vpop.f32.mrb[0].mxu0
        %v2225 = vadd.f32 0.0, %v2224
        %v2226 = vpop.f32.mrb[0].mxu0
        %2227 = vmatprep.mubr.bf16.mxu0 0
        %2228 = vmatmul.mubr.bf16.gmra.mrb[0].mxu0 %v1431
        %v2229 = vpop.f32.mrb[0].mxu0
        %v2230 = vadd.f32 0.0, %v2229
        %v2231 = vpop.f32.mrb[0].mxu0
        %v2232 = vpop.f32.mrb[0].mxu0
        %v2233 = vadd.f32 0.0, %v2232
        %v2234 = vpop.f32.mrb[0].mxu0
        %2235 = vmatprep.mubr.bf16.mxu0 0
        %2236 = vmatmul.mubr.bf16.gmra.mrb[0].mxu0 %v1434
        %v2237 = vpop.f32.mrb[0].mxu0
        %v2238 = vadd.f32 0.0, %v2237
        %v2239 = vpop.f32.mrb[0].mxu0
        %v2240 = vpop.f32.mrb[0].mxu0
        %v2241 = vadd.f32 0.0, %v2240
        %v2242 = vpop.f32.mrb[0].mxu0
        %2243 = vmatprep.mubr.bf16.mxu0 0
        %2244 = vmatmul.mubr.bf16.gmra.mrb[0].mxu0 %v2089
        %v2245 = vpop.f32.mrb[0].mxu0
        %v2246 = vadd.f32 0.0, %v2245
        %v2247 = vpop.f32.mrb[0].mxu0
        %v2248 = vpop.f32.mrb[0].mxu0
        %v2249 = vadd.f32 0.0, %v2248
        %v2250 = vpop.f32.mrb[0].mxu0
        %2251 = vdwg.mxu0
        %v2252 = vadd.f32 %v2037, %v2126
        %v2253 = vadd.f32 %v2038, %v2129
        %v2254 = vadd.f32 %v2039, %v2134
        %v2255 = vadd.f32 %v2040, %v2137
        %v2256 = vadd.f32 %v2041, %v2142
        %v2257 = vadd.f32 %v2042, %v2145
        %v2258 = vadd.f32 %v2043, %v2150
        %v2259 = vadd.f32 %v2044, %v2153
        %v2260 = vadd.f32 %v2045, %v2158
        %v2261 = vadd.f32 %v2046, %v2161
        %v2262 = vadd.f32 %v2047, %v2166
        %v2263 = vadd.f32 %v2048, %v2169
        %v2264 = vadd.f32 %v2049, %v2174
        %v2265 = vadd.f32 %v2050, %v2177
        %v2266 = vadd.f32 %v2051, %v2182
        %v2267 = vadd.f32 %v2052, %v2185
        %v2268 = vadd.f32 %v2053, %v2190
        %v2269 = vadd.f32 %v2054, %v2193
        %v2270 = vadd.f32 %v2055, %v2198
        %v2271 = vadd.f32 %v2056, %v2201
        %v2272 = vadd.f32 %v2057, %v2206
        %v2273 = vadd.f32 %v2058, %v2209
        %v2274 = vadd.f32 %v2059, %v2214
        %v2275 = vadd.f32 %v2060, %v2217
        %v2276 = vadd.f32 %v2061, %v2222
        %v2277 = vadd.f32 %v2062, %v2225
        %v2278 = vadd.f32 %v2063, %v2230
        %v2279 = vadd.f32 %v2064, %v2233
        %v2280 = vadd.f32 %v2065, %v2238
        %v2281 = vadd.f32 %v2066, %v2241
        %v2282 = vadd.f32 %v2067, %v2246
        %v2283 = vadd.f32 %v2068, %v2249
        %v2284 = vld [vmem:[%s1 + $0x30] sm:$0xf]
        %v2285 = vld [vmem:[%s1 + $0x34] sm:$0xf]
        %v2288 = vunpack.c.l.b16 %v248
        %v2289 = vunpack.c.l.b16 %v249
        %v2290 = vpack.c.b16 %v2289, %v2288
        %v2293 = vunpack.c.l.b16 %v2284
        %v2294 = vunpack.c.l.b16 %v2285
        %v2295 = vpack.c.b16 %v2294, %v2293
        %v2298 = vsel %vm696, %v2290, 0
        %2300 = vmatprep.subr.bf16.mxu0 0
        %2301 = vmatpush1.bf16.msra.mxu0 %v2295
        %2302 = vmatprep.subr.bf16.mxu0 0
        %2303 = vmatpush1.bf16.msra.mxu0 0
        %2304 = vmatprep.subr.bf16.mxu0 0
        %2305 = vmatpush1.bf16.msra.mxu0 0
        %2306 = vmatprep.subr.bf16.mxu0 0
        %2307 = vmatpush1.bf16.msra.mxu0 0
        %2308 = vmatprep.subr.bf16.mxu0 0
        %2309 = vmatpush1.bf16.msra.mxu0 0
        %2310 = vmatprep.subr.bf16.mxu0 0
        %2311 = vmatpush1.bf16.msra.mxu0 0
        %2312 = vmatprep.subr.bf16.mxu0 0
        %2313 = vmatpush1.bf16.msra.mxu0 0
        %2314 = vmatprep.subr.bf16.mxu0 0
        %2315 = vmatpush1.bf16.msra.mxu0 0
        %2316 = vmatprep.subr.bf16.mxu0 0
        %2317 = vmatpush1.bf16.msra.mxu0 0
        %2318 = vmatprep.subr.bf16.mxu0 0
        %2319 = vmatpush1.bf16.msra.mxu0 0
        %2320 = vmatprep.subr.bf16.mxu0 0
        %2321 = vmatpush1.bf16.msra.mxu0 0
        %2322 = vmatprep.subr.bf16.mxu0 0
        %2323 = vmatpush1.bf16.msra.mxu0 0
        %2324 = vmatprep.subr.bf16.mxu0 0
        %2325 = vmatpush1.bf16.msra.mxu0 0
        %2326 = vmatprep.subr.bf16.mxu0 0
        %2327 = vmatpush1.bf16.msra.mxu0 0
        %2328 = vmatprep.subr.bf16.mxu0 0
        %2329 = vmatpush1.bf16.msra.mxu0 0
        %2330 = vmatprep.subr.bf16.mxu0 0
        %2331 = vmatpush1.bf16.msra.mxu0 0
        %2332 = vmatprep.mubr.bf16.mxu0 0
        %2333 = vmatmul.mubr.bf16.gmra.mrb[0].mxu0 %v999
        %v2334 = vpop.f32.mrb[0].mxu0
        %v2335 = vadd.f32 0.0, %v2334
        %v2336 = vpop.f32.mrb[0].mxu0
        %v2337 = vpop.f32.mrb[0].mxu0
        %v2338 = vadd.f32 0.0, %v2337
        %v2339 = vpop.f32.mrb[0].mxu0
        %2340 = vmatprep.mubr.bf16.mxu0 0
        %2341 = vmatmul.mubr.bf16.gmra.mrb[0].mxu0 %v1002
        %v2342 = vpop.f32.mrb[0].mxu0
        %v2343 = vadd.f32 0.0, %v2342
        %v2344 = vpop.f32.mrb[0].mxu0
        %v2345 = vpop.f32.mrb[0].mxu0
        %v2346 = vadd.f32 0.0, %v2345
        %v2347 = vpop.f32.mrb[0].mxu0
        %2348 = vmatprep.mubr.bf16.mxu0 0
        %2349 = vmatmul.mubr.bf16.gmra.mrb[0].mxu0 %v1005
        %v2350 = vpop.f32.mrb[0].mxu0
        %v2351 = vadd.f32 0.0, %v2350
        %v2352 = vpop.f32.mrb[0].mxu0
        %v2353 = vpop.f32.mrb[0].mxu0
        %v2354 = vadd.f32 0.0, %v2353
        %v2355 = vpop.f32.mrb[0].mxu0
        %2356 = vmatprep.mubr.bf16.mxu0 0
        %2357 = vmatmul.mubr.bf16.gmra.mrb[0].mxu0 %v1008
        %v2358 = vpop.f32.mrb[0].mxu0
        %v2359 = vadd.f32 0.0, %v2358
        %v2360 = vpop.f32.mrb[0].mxu0
        %v2361 = vpop.f32.mrb[0].mxu0
        %v2362 = vadd.f32 0.0, %v2361
        %v2363 = vpop.f32.mrb[0].mxu0
        %2364 = vmatprep.mubr.bf16.mxu0 0
        %2365 = vmatmul.mubr.bf16.gmra.mrb[0].mxu0 %v1011
        %v2366 = vpop.f32.mrb[0].mxu0
        %v2367 = vadd.f32 0.0, %v2366
        %v2368 = vpop.f32.mrb[0].mxu0
        %v2369 = vpop.f32.mrb[0].mxu0
        %v2370 = vadd.f32 0.0, %v2369
        %v2371 = vpop.f32.mrb[0].mxu0
        %2372 = vmatprep.mubr.bf16.mxu0 0
        %2373 = vmatmul.mubr.bf16.gmra.mrb[0].mxu0 %v1014
        %v2374 = vpop.f32.mrb[0].mxu0
        %v2375 = vadd.f32 0.0, %v2374
        %v2376 = vpop.f32.mrb[0].mxu0
        %v2377 = vpop.f32.mrb[0].mxu0
        %v2378 = vadd.f32 0.0, %v2377
        %v2379 = vpop.f32.mrb[0].mxu0
        %2380 = vmatprep.mubr.bf16.mxu0 0
        %2381 = vmatmul.mubr.bf16.gmra.mrb[0].mxu0 %v1017
        %v2382 = vpop.f32.mrb[0].mxu0
        %v2383 = vadd.f32 0.0, %v2382
        %v2384 = vpop.f32.mrb[0].mxu0
        %v2385 = vpop.f32.mrb[0].mxu0
        %v2386 = vadd.f32 0.0, %v2385
        %v2387 = vpop.f32.mrb[0].mxu0
        %2388 = vmatprep.mubr.bf16.mxu0 0
        %2389 = vmatmul.mubr.bf16.gmra.mrb[0].mxu0 %v1020
        %v2390 = vpop.f32.mrb[0].mxu0
        %v2391 = vadd.f32 0.0, %v2390
        %v2392 = vpop.f32.mrb[0].mxu0
        %v2393 = vpop.f32.mrb[0].mxu0
        %v2394 = vadd.f32 0.0, %v2393
        %v2395 = vpop.f32.mrb[0].mxu0
        %2396 = vmatprep.mubr.bf16.mxu0 0
        %2397 = vmatmul.mubr.bf16.gmra.mrb[0].mxu0 %v1023
        %v2398 = vpop.f32.mrb[0].mxu0
        %v2399 = vadd.f32 0.0, %v2398
        %v2400 = vpop.f32.mrb[0].mxu0
        %v2401 = vpop.f32.mrb[0].mxu0
        %v2402 = vadd.f32 0.0, %v2401
        %v2403 = vpop.f32.mrb[0].mxu0
        %2404 = vmatprep.mubr.bf16.mxu0 0
        %2405 = vmatmul.mubr.bf16.gmra.mrb[0].mxu0 %v1026
        %v2406 = vpop.f32.mrb[0].mxu0
        %v2407 = vadd.f32 0.0, %v2406
        %v2408 = vpop.f32.mrb[0].mxu0
        %v2409 = vpop.f32.mrb[0].mxu0
        %v2410 = vadd.f32 0.0, %v2409
        %v2411 = vpop.f32.mrb[0].mxu0
        %2412 = vmatprep.mubr.bf16.mxu0 0
        %2413 = vmatmul.mubr.bf16.gmra.mrb[0].mxu0 %v1029
        %v2414 = vpop.f32.mrb[0].mxu0
        %v2415 = vadd.f32 0.0, %v2414
        %v2416 = vpop.f32.mrb[0].mxu0
        %v2417 = vpop.f32.mrb[0].mxu0
        %v2418 = vadd.f32 0.0, %v2417
        %v2419 = vpop.f32.mrb[0].mxu0
        %2420 = vmatprep.mubr.bf16.mxu0 0
        %2421 = vmatmul.mubr.bf16.gmra.mrb[0].mxu0 %v1032
        %v2422 = vpop.f32.mrb[0].mxu0
        %v2423 = vadd.f32 0.0, %v2422
        %v2424 = vpop.f32.mrb[0].mxu0
        %v2425 = vpop.f32.mrb[0].mxu0
        %v2426 = vadd.f32 0.0, %v2425
        %v2427 = vpop.f32.mrb[0].mxu0
        %2428 = vmatprep.mubr.bf16.mxu0 0
        %2429 = vmatmul.mubr.bf16.gmra.mrb[0].mxu0 %v1035
        %v2430 = vpop.f32.mrb[0].mxu0
        %v2431 = vadd.f32 0.0, %v2430
        %v2432 = vpop.f32.mrb[0].mxu0
        %v2433 = vpop.f32.mrb[0].mxu0
        %v2434 = vadd.f32 0.0, %v2433
        %v2435 = vpop.f32.mrb[0].mxu0
        %2436 = vmatprep.mubr.bf16.mxu0 0
        %2437 = vmatmul.mubr.bf16.gmra.mrb[0].mxu0 %v1038
        %v2438 = vpop.f32.mrb[0].mxu0
        %v2439 = vadd.f32 0.0, %v2438
        %v2440 = vpop.f32.mrb[0].mxu0
        %v2441 = vpop.f32.mrb[0].mxu0
        %v2442 = vadd.f32 0.0, %v2441
        %v2443 = vpop.f32.mrb[0].mxu0
        %2444 = vmatprep.mubr.bf16.mxu0 0
        %2445 = vmatmul.mubr.bf16.gmra.mrb[0].mxu0 %v1643
        %v2446 = vpop.f32.mrb[0].mxu0
        %v2447 = vadd.f32 0.0, %v2446
        %v2448 = vpop.f32.mrb[0].mxu0
        %v2449 = vpop.f32.mrb[0].mxu0
        %v2450 = vadd.f32 0.0, %v2449
        %v2451 = vpop.f32.mrb[0].mxu0
        %2452 = vmatprep.mubr.bf16.mxu0 0
        %2453 = vmatmul.mubr.bf16.gmra.mrb[0].mxu0 %v2298
        %v2454 = vpop.f32.mrb[0].mxu0
        %v2455 = vadd.f32 0.0, %v2454
        %v2456 = vpop.f32.mrb[0].mxu0
        %v2457 = vpop.f32.mrb[0].mxu0
        %v2458 = vadd.f32 0.0, %v2457
        %v2459 = vpop.f32.mrb[0].mxu0
        %2460 = vdwg.mxu0
        %v2461 = vadd.f32 %v2252, %v2335
        %v2462 = vadd.f32 %v2253, %v2338
        %v2463 = vadd.f32 %v2254, %v2343
        %v2464 = vadd.f32 %v2255, %v2346
        %v2465 = vadd.f32 %v2256, %v2351
        %v2466 = vadd.f32 %v2257, %v2354
        %v2467 = vadd.f32 %v2258, %v2359
        %v2468 = vadd.f32 %v2259, %v2362
        %v2469 = vadd.f32 %v2260, %v2367
        %v2470 = vadd.f32 %v2261, %v2370
        %v2471 = vadd.f32 %v2262, %v2375
        %v2472 = vadd.f32 %v2263, %v2378
        %v2473 = vadd.f32 %v2264, %v2383
        %v2474 = vadd.f32 %v2265, %v2386
        %v2475 = vadd.f32 %v2266, %v2391
        %v2476 = vadd.f32 %v2267, %v2394
        %v2477 = vadd.f32 %v2268, %v2399
        %v2478 = vadd.f32 %v2269, %v2402
        %v2479 = vadd.f32 %v2270, %v2407
        %v2480 = vadd.f32 %v2271, %v2410
        %v2481 = vadd.f32 %v2272, %v2415
        %v2482 = vadd.f32 %v2273, %v2418
        %v2483 = vadd.f32 %v2274, %v2423
        %v2484 = vadd.f32 %v2275, %v2426
        %v2485 = vadd.f32 %v2276, %v2431
        %v2486 = vadd.f32 %v2277, %v2434
        %v2487 = vadd.f32 %v2278, %v2439
        %v2488 = vadd.f32 %v2279, %v2442
        %v2489 = vadd.f32 %v2280, %v2447
        %v2490 = vadd.f32 %v2281, %v2450
        %v2491 = vadd.f32 %v2282, %v2455
        %v2492 = vadd.f32 %v2283, %v2458
        %v2494 = vshrl.u32 %v248, 16
        %v2496 = vrot.slane %v2494, 4
        %v2497 = vshll.u32 %v248, 16
        %v2499 = vrot.slane %v2497, 5
        %v2500 = vor.u32 %v2496, %v2499
        %v2501 = vrot.slane %v2500, 4
        %v2503 = vshll.u32 %v249, 16
        %v2505 = vrot.slane %v2503, 5
        %v2506 = vsel %vm255, %v2501, %v2505
        %v2507 = vshrl.u32 %v249, 16
        %v2509 = vrot.slane %v2507, 4
        %v2510 = vor.u32 %v2509, %v2505
        %v2511 = vrot.slane %v2510, 4
        %v2513 = vshll.u32 %v250, 16
        %v2515 = vrot.slane %v2513, 5
        %v2516 = vsel %vm255, %v2511, %v2515
        %v2517 = vld [vmem:[%s1 + $0x38] sm:$0xf]
        %v2518 = vld [vmem:[%s1 + $0x3c] sm:$0xf]
        %v2519 = vunpack.c.l.b16 %v2506
        %v2520 = vunpack.c.l.b16 %v2516
        %v2521 = vpack.c.b16 %v2520, %v2519
        %v2524 = vunpack.c.l.b16 %v2517
        %v2525 = vunpack.c.l.b16 %v2518
        %v2526 = vpack.c.b16 %v2525, %v2524
        %v2529 = vsel %vm696, %v2521, 0
        %2531 = vmatprep.subr.bf16.mxu0 0
        %2532 = vmatpush1.bf16.msra.mxu0 %v2526
        %2533 = vmatprep.subr.bf16.mxu0 0
        %2534 = vmatpush1.bf16.msra.mxu0 0
        %2535 = vmatprep.subr.bf16.mxu0 0
        %2536 = vmatpush1.bf16.msra.mxu0 0
        %2537 = vmatprep.subr.bf16.mxu0 0
        %2538 = vmatpush1.bf16.msra.mxu0 0
        %2539 = vmatprep.subr.bf16.mxu0 0
        %2540 = vmatpush1.bf16.msra.mxu0 0
        %2541 = vmatprep.subr.bf16.mxu0 0
        %2542 = vmatpush1.bf16.msra.mxu0 0
        %2543 = vmatprep.subr.bf16.mxu0 0
        %2544 = vmatpush1.bf16.msra.mxu0 0
        %2545 = vmatprep.subr.bf16.mxu0 0
        %2546 = vmatpush1.bf16.msra.mxu0 0
        %2547 = vmatprep.subr.bf16.mxu0 0
        %2548 = vmatpush1.bf16.msra.mxu0 0
        %2549 = vmatprep.subr.bf16.mxu0 0
        %2550 = vmatpush1.bf16.msra.mxu0 0
        %2551 = vmatprep.subr.bf16.mxu0 0
        %2552 = vmatpush1.bf16.msra.mxu0 0
        %2553 = vmatprep.subr.bf16.mxu0 0
        %2554 = vmatpush1.bf16.msra.mxu0 0
        %2555 = vmatprep.subr.bf16.mxu0 0
        %2556 = vmatpush1.bf16.msra.mxu0 0
        %2557 = vmatprep.subr.bf16.mxu0 0
        %2558 = vmatpush1.bf16.msra.mxu0 0
        %2559 = vmatprep.subr.bf16.mxu0 0
        %2560 = vmatpush1.bf16.msra.mxu0 0
        %2561 = vmatprep.subr.bf16.mxu0 0
        %2562 = vmatpush1.bf16.msra.mxu0 0
        %2563 = vmatprep.mubr.bf16.mxu0 0
        %2564 = vmatmul.mubr.bf16.gmra.mrb[0].mxu0 %v704
        %v2565 = vpop.f32.mrb[0].mxu0
        %v2566 = vadd.f32 0.0, %v2565
        %v2567 = vpop.f32.mrb[0].mxu0
        %v2568 = vpop.f32.mrb[0].mxu0
        %v2569 = vadd.f32 0.0, %v2568
        %v2570 = vpop.f32.mrb[0].mxu0
        %2571 = vmatprep.mubr.bf16.mxu0 0
        %2572 = vmatmul.mubr.bf16.gmra.mrb[0].mxu0 %v707
        %v2573 = vpop.f32.mrb[0].mxu0
        %v2574 = vadd.f32 0.0, %v2573
        %v2575 = vpop.f32.mrb[0].mxu0
        %v2576 = vpop.f32.mrb[0].mxu0
        %v2577 = vadd.f32 0.0, %v2576
        %v2578 = vpop.f32.mrb[0].mxu0
        %2579 = vmatprep.mubr.bf16.mxu0 0
        %2580 = vmatmul.mubr.bf16.gmra.mrb[0].mxu0 %v710
        %v2581 = vpop.f32.mrb[0].mxu0
        %v2582 = vadd.f32 0.0, %v2581
        %v2583 = vpop.f32.mrb[0].mxu0
        %v2584 = vpop.f32.mrb[0].mxu0
        %v2585 = vadd.f32 0.0, %v2584
        %v2586 = vpop.f32.mrb[0].mxu0
        %2587 = vmatprep.mubr.bf16.mxu0 0
        %2588 = vmatmul.mubr.bf16.gmra.mrb[0].mxu0 %v713
        %v2589 = vpop.f32.mrb[0].mxu0
        %v2590 = vadd.f32 0.0, %v2589
        %v2591 = vpop.f32.mrb[0].mxu0
        %v2592 = vpop.f32.mrb[0].mxu0
        %v2593 = vadd.f32 0.0, %v2592
        %v2594 = vpop.f32.mrb[0].mxu0
        %2595 = vmatprep.mubr.bf16.mxu0 0
        %2596 = vmatmul.mubr.bf16.gmra.mrb[0].mxu0 %v716
        %v2597 = vpop.f32.mrb[0].mxu0
        %v2598 = vadd.f32 0.0, %v2597
        %v2599 = vpop.f32.mrb[0].mxu0
        %v2600 = vpop.f32.mrb[0].mxu0
        %v2601 = vadd.f32 0.0, %v2600
        %v2602 = vpop.f32.mrb[0].mxu0
        %2603 = vmatprep.mubr.bf16.mxu0 0
        %2604 = vmatmul.mubr.bf16.gmra.mrb[0].mxu0 %v719
        %v2605 = vpop.f32.mrb[0].mxu0
        %v2606 = vadd.f32 0.0, %v2605
        %v2607 = vpop.f32.mrb[0].mxu0
        %v2608 = vpop.f32.mrb[0].mxu0
        %v2609 = vadd.f32 0.0, %v2608
        %v2610 = vpop.f32.mrb[0].mxu0
        %2611 = vmatprep.mubr.bf16.mxu0 0
        %2612 = vmatmul.mubr.bf16.gmra.mrb[0].mxu0 %v722
        %v2613 = vpop.f32.mrb[0].mxu0
        %v2614 = vadd.f32 0.0, %v2613
        %v2615 = vpop.f32.mrb[0].mxu0
        %v2616 = vpop.f32.mrb[0].mxu0
        %v2617 = vadd.f32 0.0, %v2616
        %v2618 = vpop.f32.mrb[0].mxu0
        %2619 = vmatprep.mubr.bf16.mxu0 0
        %2620 = vmatmul.mubr.bf16.gmra.mrb[0].mxu0 %v725
        %v2621 = vpop.f32.mrb[0].mxu0
        %v2622 = vadd.f32 0.0, %v2621
        %v2623 = vpop.f32.mrb[0].mxu0
        %v2624 = vpop.f32.mrb[0].mxu0
        %v2625 = vadd.f32 0.0, %v2624
        %v2626 = vpop.f32.mrb[0].mxu0
        %2627 = vmatprep.mubr.bf16.mxu0 0
        %2628 = vmatmul.mubr.bf16.gmra.mrb[0].mxu0 %v728
        %v2629 = vpop.f32.mrb[0].mxu0
        %v2630 = vadd.f32 0.0, %v2629
        %v2631 = vpop.f32.mrb[0].mxu0
        %v2632 = vpop.f32.mrb[0].mxu0
        %v2633 = vadd.f32 0.0, %v2632
        %v2634 = vpop.f32.mrb[0].mxu0
        %2635 = vmatprep.mubr.bf16.mxu0 0
        %2636 = vmatmul.mubr.bf16.gmra.mrb[0].mxu0 %v731
        %v2637 = vpop.f32.mrb[0].mxu0
        %v2638 = vadd.f32 0.0, %v2637
        %v2639 = vpop.f32.mrb[0].mxu0
        %v2640 = vpop.f32.mrb[0].mxu0
        %v2641 = vadd.f32 0.0, %v2640
        %v2642 = vpop.f32.mrb[0].mxu0
        %2643 = vmatprep.mubr.bf16.mxu0 0
        %2644 = vmatmul.mubr.bf16.gmra.mrb[0].mxu0 %v734
        %v2645 = vpop.f32.mrb[0].mxu0
        %v2646 = vadd.f32 0.0, %v2645
        %v2647 = vpop.f32.mrb[0].mxu0
        %v2648 = vpop.f32.mrb[0].mxu0
        %v2649 = vadd.f32 0.0, %v2648
        %v2650 = vpop.f32.mrb[0].mxu0
        %2651 = vmatprep.mubr.bf16.mxu0 0
        %2652 = vmatmul.mubr.bf16.gmra.mrb[0].mxu0 %v737
        %v2653 = vpop.f32.mrb[0].mxu0
        %v2654 = vadd.f32 0.0, %v2653
        %v2655 = vpop.f32.mrb[0].mxu0
        %v2656 = vpop.f32.mrb[0].mxu0
        %v2657 = vadd.f32 0.0, %v2656
        %v2658 = vpop.f32.mrb[0].mxu0
        %2659 = vmatprep.mubr.bf16.mxu0 0
        %2660 = vmatmul.mubr.bf16.gmra.mrb[0].mxu0 %v740
        %v2661 = vpop.f32.mrb[0].mxu0
        %v2662 = vadd.f32 0.0, %v2661
        %v2663 = vpop.f32.mrb[0].mxu0
        %v2664 = vpop.f32.mrb[0].mxu0
        %v2665 = vadd.f32 0.0, %v2664
        %v2666 = vpop.f32.mrb[0].mxu0
        %2667 = vmatprep.mubr.bf16.mxu0 0
        %2668 = vmatmul.mubr.bf16.gmra.mrb[0].mxu0 %v743
        %v2669 = vpop.f32.mrb[0].mxu0
        %v2670 = vadd.f32 0.0, %v2669
        %v2671 = vpop.f32.mrb[0].mxu0
        %v2672 = vpop.f32.mrb[0].mxu0
        %v2673 = vadd.f32 0.0, %v2672
        %v2674 = vpop.f32.mrb[0].mxu0
        %2675 = vmatprep.mubr.bf16.mxu0 0
        %2676 = vmatmul.mubr.bf16.gmra.mrb[0].mxu0 %v1874
        %v2677 = vpop.f32.mrb[0].mxu0
        %v2678 = vadd.f32 0.0, %v2677
        %v2679 = vpop.f32.mrb[0].mxu0
        %v2680 = vpop.f32.mrb[0].mxu0
        %v2681 = vadd.f32 0.0, %v2680
        %v2682 = vpop.f32.mrb[0].mxu0
        %2683 = vmatprep.mubr.bf16.mxu0 0
        %2684 = vmatmul.mubr.bf16.gmra.mrb[0].mxu0 %v2529
        %v2685 = vpop.f32.mrb[0].mxu0
        %v2686 = vadd.f32 0.0, %v2685
        %v2687 = vpop.f32.mrb[0].mxu0
        %v2688 = vpop.f32.mrb[0].mxu0
        %v2689 = vadd.f32 0.0, %v2688
        %v2690 = vpop.f32.mrb[0].mxu0
        %2691 = vdwg.mxu0
        %v2692 = vadd.f32 %v2461, %v2566
        %v2693 = vadd.f32 %v2462, %v2569
        %v2694 = vadd.f32 %v2463, %v2574
        %v2695 = vadd.f32 %v2464, %v2577
        %v2696 = vadd.f32 %v2465, %v2582
        %v2697 = vadd.f32 %v2466, %v2585
        %v2698 = vadd.f32 %v2467, %v2590
        %v2699 = vadd.f32 %v2468, %v2593
        %v2700 = vadd.f32 %v2469, %v2598
        %v2701 = vadd.f32 %v2470, %v2601
        %v2702 = vadd.f32 %v2471, %v2606
        %v2703 = vadd.f32 %v2472, %v2609
        %v2704 = vadd.f32 %v2473, %v2614
        %v2705 = vadd.f32 %v2474, %v2617
        %v2706 = vadd.f32 %v2475, %v2622
        %v2707 = vadd.f32 %v2476, %v2625
        %v2708 = vadd.f32 %v2477, %v2630
        %v2709 = vadd.f32 %v2478, %v2633
        %v2710 = vadd.f32 %v2479, %v2638
        %v2711 = vadd.f32 %v2480, %v2641
        %v2712 = vadd.f32 %v2481, %v2646
        %v2713 = vadd.f32 %v2482, %v2649
        %v2714 = vadd.f32 %v2483, %v2654
        %v2715 = vadd.f32 %v2484, %v2657
        %v2716 = vadd.f32 %v2485, %v2662
        %v2717 = vadd.f32 %v2486, %v2665
        %v2718 = vadd.f32 %v2487, %v2670
        %v2719 = vadd.f32 %v2488, %v2673
        %v2720 = vadd.f32 %v2489, %v2678
        %v2721 = vadd.f32 %v2490, %v2681
        %v2722 = vadd.f32 %v2491, %v2686
        %v2723 = vadd.f32 %v2492, %v2689
        %v2725 = vrot.slane %v248, 5
        %v2726 = vrot.slane %v2725, 4
        %v2727 = vrot.slane %v249, 5
        %v2728 = vsel %vm1219, %v2726, %v2727
        %v2729 = vrot.slane %v2727, 4
        %v2730 = vrot.slane %v250, 5
        %v2731 = vsel %vm1219, %v2729, %v2730
        %v2732 = vld [vmem:[%s1 + $0x40] sm:$0xf]
        %v2733 = vld [vmem:[%s1 + $0x44] sm:$0xf]
        %v2734 = vunpack.c.l.b16 %v2728
        %v2735 = vunpack.c.l.b16 %v2731
        %v2736 = vpack.c.b16 %v2735, %v2734
        %v2739 = vunpack.c.l.b16 %v2732
        %v2740 = vunpack.c.l.b16 %v2733
        %v2741 = vpack.c.b16 %v2740, %v2739
        %v2744 = vsel %vm696, %v2736, 0
        %2746 = vmatprep.subr.bf16.mxu0 0
        %2747 = vmatpush1.bf16.msra.mxu0 %v2741
        %2748 = vmatprep.subr.bf16.mxu0 0
        %2749 = vmatpush1.bf16.msra.mxu0 0
        %2750 = vmatprep.subr.bf16.mxu0 0
        %2751 = vmatpush1.bf16.msra.mxu0 0
        %2752 = vmatprep.subr.bf16.mxu0 0
        %2753 = vmatpush1.bf16.msra.mxu0 0
        %2754 = vmatprep.subr.bf16.mxu0 0
        %2755 = vmatpush1.bf16.msra.mxu0 0
        %2756 = vmatprep.subr.bf16.mxu0 0
        %2757 = vmatpush1.bf16.msra.mxu0 0
        %2758 = vmatprep.subr.bf16.mxu0 0
        %2759 = vmatpush1.bf16.msra.mxu0 0
        %2760 = vmatprep.subr.bf16.mxu0 0
        %2761 = vmatpush1.bf16.msra.mxu0 0
        %2762 = vmatprep.subr.bf16.mxu0 0
        %2763 = vmatpush1.bf16.msra.mxu0 0
        %2764 = vmatprep.subr.bf16.mxu0 0
        %2765 = vmatpush1.bf16.msra.mxu0 0
        %2766 = vmatprep.subr.bf16.mxu0 0
        %2767 = vmatpush1.bf16.msra.mxu0 0
        %2768 = vmatprep.subr.bf16.mxu0 0
        %2769 = vmatpush1.bf16.msra.mxu0 0
        %2770 = vmatprep.subr.bf16.mxu0 0
        %2771 = vmatpush1.bf16.msra.mxu0 0
        %2772 = vmatprep.subr.bf16.mxu0 0
        %2773 = vmatpush1.bf16.msra.mxu0 0
        %2774 = vmatprep.subr.bf16.mxu0 0
        %2775 = vmatpush1.bf16.msra.mxu0 0
        %2776 = vmatprep.subr.bf16.mxu0 0
        %2777 = vmatpush1.bf16.msra.mxu0 0
        %2778 = vmatprep.mubr.bf16.mxu0 0
        %2779 = vmatmul.mubr.bf16.gmra.mrb[0].mxu0 %v1395
        %v2780 = vpop.f32.mrb[0].mxu0
        %v2781 = vadd.f32 0.0, %v2780
        %v2782 = vpop.f32.mrb[0].mxu0
        %v2783 = vpop.f32.mrb[0].mxu0
        %v2784 = vadd.f32 0.0, %v2783
        %v2785 = vpop.f32.mrb[0].mxu0
        %2786 = vmatprep.mubr.bf16.mxu0 0
        %2787 = vmatmul.mubr.bf16.gmra.mrb[0].mxu0 %v1398
        %v2788 = vpop.f32.mrb[0].mxu0
        %v2789 = vadd.f32 0.0, %v2788
        %v2790 = vpop.f32.mrb[0].mxu0
        %v2791 = vpop.f32.mrb[0].mxu0
        %v2792 = vadd.f32 0.0, %v2791
        %v2793 = vpop.f32.mrb[0].mxu0
        %2794 = vmatprep.mubr.bf16.mxu0 0
        %2795 = vmatmul.mubr.bf16.gmra.mrb[0].mxu0 %v1401
        %v2796 = vpop.f32.mrb[0].mxu0
        %v2797 = vadd.f32 0.0, %v2796
        %v2798 = vpop.f32.mrb[0].mxu0
        %v2799 = vpop.f32.mrb[0].mxu0
        %v2800 = vadd.f32 0.0, %v2799
        %v2801 = vpop.f32.mrb[0].mxu0
        %2802 = vmatprep.mubr.bf16.mxu0 0
        %2803 = vmatmul.mubr.bf16.gmra.mrb[0].mxu0 %v1404
        %v2804 = vpop.f32.mrb[0].mxu0
        %v2805 = vadd.f32 0.0, %v2804
        %v2806 = vpop.f32.mrb[0].mxu0
        %v2807 = vpop.f32.mrb[0].mxu0
        %v2808 = vadd.f32 0.0, %v2807
        %v2809 = vpop.f32.mrb[0].mxu0
        %2810 = vmatprep.mubr.bf16.mxu0 0
        %2811 = vmatmul.mubr.bf16.gmra.mrb[0].mxu0 %v1407
        %v2812 = vpop.f32.mrb[0].mxu0
        %v2813 = vadd.f32 0.0, %v2812
        %v2814 = vpop.f32.mrb[0].mxu0
        %v2815 = vpop.f32.mrb[0].mxu0
        %v2816 = vadd.f32 0.0, %v2815
        %v2817 = vpop.f32.mrb[0].mxu0
        %2818 = vmatprep.mubr.bf16.mxu0 0
        %2819 = vmatmul.mubr.bf16.gmra.mrb[0].mxu0 %v1410
        %v2820 = vpop.f32.mrb[0].mxu0
        %v2821 = vadd.f32 0.0, %v2820
        %v2822 = vpop.f32.mrb[0].mxu0
        %v2823 = vpop.f32.mrb[0].mxu0
        %v2824 = vadd.f32 0.0, %v2823
        %v2825 = vpop.f32.mrb[0].mxu0
        %2826 = vmatprep.mubr.bf16.mxu0 0
        %2827 = vmatmul.mubr.bf16.gmra.mrb[0].mxu0 %v1413
        %v2828 = vpop.f32.mrb[0].mxu0
        %v2829 = vadd.f32 0.0, %v2828
        %v2830 = vpop.f32.mrb[0].mxu0
        %v2831 = vpop.f32.mrb[0].mxu0
        %v2832 = vadd.f32 0.0, %v2831
        %v2833 = vpop.f32.mrb[0].mxu0
        %2834 = vmatprep.mubr.bf16.mxu0 0
        %2835 = vmatmul.mubr.bf16.gmra.mrb[0].mxu0 %v1416
        %v2836 = vpop.f32.mrb[0].mxu0
        %v2837 = vadd.f32 0.0, %v2836
        %v2838 = vpop.f32.mrb[0].mxu0
        %v2839 = vpop.f32.mrb[0].mxu0
        %v2840 = vadd.f32 0.0, %v2839
        %v2841 = vpop.f32.mrb[0].mxu0
        %2842 = vmatprep.mubr.bf16.mxu0 0
        %2843 = vmatmul.mubr.bf16.gmra.mrb[0].mxu0 %v1419
        %v2844 = vpop.f32.mrb[0].mxu0
        %v2845 = vadd.f32 0.0, %v2844
        %v2846 = vpop.f32.mrb[0].mxu0
        %v2847 = vpop.f32.mrb[0].mxu0
        %v2848 = vadd.f32 0.0, %v2847
        %v2849 = vpop.f32.mrb[0].mxu0
        %2850 = vmatprep.mubr.bf16.mxu0 0
        %2851 = vmatmul.mubr.bf16.gmra.mrb[0].mxu0 %v1422
        %v2852 = vpop.f32.mrb[0].mxu0
        %v2853 = vadd.f32 0.0, %v2852
        %v2854 = vpop.f32.mrb[0].mxu0
        %v2855 = vpop.f32.mrb[0].mxu0
        %v2856 = vadd.f32 0.0, %v2855
        %v2857 = vpop.f32.mrb[0].mxu0
        %2858 = vmatprep.mubr.bf16.mxu0 0
        %2859 = vmatmul.mubr.bf16.gmra.mrb[0].mxu0 %v1425
        %v2860 = vpop.f32.mrb[0].mxu0
        %v2861 = vadd.f32 0.0, %v2860
        %v2862 = vpop.f32.mrb[0].mxu0
        %v2863 = vpop.f32.mrb[0].mxu0
        %v2864 = vadd.f32 0.0, %v2863
        %v2865 = vpop.f32.mrb[0].mxu0
        %2866 = vmatprep.mubr.bf16.mxu0 0
        %2867 = vmatmul.mubr.bf16.gmra.mrb[0].mxu0 %v1428
        %v2868 = vpop.f32.mrb[0].mxu0
        %v2869 = vadd.f32 0.0, %v2868
        %v2870 = vpop.f32.mrb[0].mxu0
        %v2871 = vpop.f32.mrb[0].mxu0
        %v2872 = vadd.f32 0.0, %v2871
        %v2873 = vpop.f32.mrb[0].mxu0
        %2874 = vmatprep.mubr.bf16.mxu0 0
        %2875 = vmatmul.mubr.bf16.gmra.mrb[0].mxu0 %v1431
        %v2876 = vpop.f32.mrb[0].mxu0
        %v2877 = vadd.f32 0.0, %v2876
        %v2878 = vpop.f32.mrb[0].mxu0
        %v2879 = vpop.f32.mrb[0].mxu0
        %v2880 = vadd.f32 0.0, %v2879
        %v2881 = vpop.f32.mrb[0].mxu0
        %2882 = vmatprep.mubr.bf16.mxu0 0
        %2883 = vmatmul.mubr.bf16.gmra.mrb[0].mxu0 %v1434
        %v2884 = vpop.f32.mrb[0].mxu0
        %v2885 = vadd.f32 0.0, %v2884
        %v2886 = vpop.f32.mrb[0].mxu0
        %v2887 = vpop.f32.mrb[0].mxu0
        %v2888 = vadd.f32 0.0, %v2887
        %v2889 = vpop.f32.mrb[0].mxu0
        %2890 = vmatprep.mubr.bf16.mxu0 0
        %2891 = vmatmul.mubr.bf16.gmra.mrb[0].mxu0 %v2089
        %v2892 = vpop.f32.mrb[0].mxu0
        %v2893 = vadd.f32 0.0, %v2892
        %v2894 = vpop.f32.mrb[0].mxu0
        %v2895 = vpop.f32.mrb[0].mxu0
        %v2896 = vadd.f32 0.0, %v2895
        %v2897 = vpop.f32.mrb[0].mxu0
        %2898 = vmatprep.mubr.bf16.mxu0 0
        %2899 = vmatmul.mubr.bf16.gmra.mrb[0].mxu0 %v2744
        %v2900 = vpop.f32.mrb[0].mxu0
        %v2901 = vadd.f32 0.0, %v2900
        %v2902 = vpop.f32.mrb[0].mxu0
        %v2903 = vpop.f32.mrb[0].mxu0
        %v2904 = vadd.f32 0.0, %v2903
        %v2905 = vpop.f32.mrb[0].mxu0
        %2906 = vdwg.mxu0
        %v2907 = vadd.f32 %v2692, %v2781
        %v2908 = vadd.f32 %v2693, %v2784
        %v2909 = vadd.f32 %v2694, %v2789
        %v2910 = vadd.f32 %v2695, %v2792
        %v2911 = vadd.f32 %v2696, %v2797
        %v2912 = vadd.f32 %v2697, %v2800
        %v2913 = vadd.f32 %v2698, %v2805
        %v2914 = vadd.f32 %v2699, %v2808
        %v2915 = vadd.f32 %v2700, %v2813
        %v2916 = vadd.f32 %v2701, %v2816
        %v2917 = vadd.f32 %v2702, %v2821
        %v2918 = vadd.f32 %v2703, %v2824
        %v2919 = vadd.f32 %v2704, %v2829
        %v2920 = vadd.f32 %v2705, %v2832
        %v2921 = vadd.f32 %v2706, %v2837
        %v2922 = vadd.f32 %v2707, %v2840
        %v2923 = vadd.f32 %v2708, %v2845
        %v2924 = vadd.f32 %v2709, %v2848
        %v2925 = vadd.f32 %v2710, %v2853
        %v2926 = vadd.f32 %v2711, %v2856
        %v2927 = vadd.f32 %v2712, %v2861
        %v2928 = vadd.f32 %v2713, %v2864
        %v2929 = vadd.f32 %v2714, %v2869
        %v2930 = vadd.f32 %v2715, %v2872
        %v2931 = vadd.f32 %v2716, %v2877
        %v2932 = vadd.f32 %v2717, %v2880
        %v2933 = vadd.f32 %v2718, %v2885
        %v2934 = vadd.f32 %v2719, %v2888
        %v2935 = vadd.f32 %v2720, %v2893
        %v2936 = vadd.f32 %v2721, %v2896
        %v2937 = vadd.f32 %v2722, %v2901
        %v2938 = vadd.f32 %v2723, %v2904
        %v2939 = vadd.f32 %v2907, %v2908
        %v2940 = vadd.f32 %v2939, %v2909
        %v2941 = vadd.f32 %v2940, %v2910
        %v2942 = vadd.f32 %v2941, %v2911
        %v2943 = vadd.f32 %v2942, %v2912
        %v2944 = vadd.f32 %v2943, %v2913
        %v2945 = vadd.f32 %v2944, %v2914
        %v2946 = vadd.f32 %v2945, %v2915
        %v2947 = vadd.f32 %v2946, %v2916
        %v2948 = vadd.f32 %v2947, %v2917
        %v2949 = vadd.f32 %v2948, %v2918
        %v2950 = vadd.f32 %v2949, %v2919
        %v2951 = vadd.f32 %v2950, %v2920
        %v2952 = vadd.f32 %v2951, %v2921
        %v2953 = vadd.f32 %v2952, %v2922
        %v2954 = vadd.f32 %v2953, %v2923
        %v2955 = vadd.f32 %v2954, %v2924
        %v2956 = vadd.f32 %v2955, %v2925
        %v2957 = vadd.f32 %v2956, %v2926
        %v2958 = vadd.f32 %v2957, %v2927
        %v2959 = vadd.f32 %v2958, %v2928
        %v2960 = vadd.f32 %v2959, %v2929
        %v2961 = vadd.f32 %v2960, %v2930
        %v2962 = vadd.f32 %v2961, %v2931
        %v2963 = vadd.f32 %v2962, %v2932
        %v2964 = vadd.f32 %v2963, %v2933
        %v2965 = vadd.f32 %v2964, %v2934
        %v2966 = vadd.f32 %v2965, %v2935
        %v2967 = vadd.f32 %v2966, %v2936
        %v2968 = vadd.f32 %v2967, %v2937
        %v2969 = vadd.f32 %v2968, %v2938
        %v2970 = vrot.slane %v2969, 4
        %v2971 = vadd.f32 %v2969, %v2970
        %v2972 = vrot.slane %v2971, 2
        %v2973 = vadd.f32 %v2971, %v2972
        %v2974 = vrot.slane %v2973, 1
        %v2975 = vadd.f32 %v2973, %v2974
        %v2976 = vmul.f32 %v2907, %v2907
        %v2977 = vmul.f32 %v2908, %v2908
        %v2978 = vmul.f32 %v2909, %v2909
        %v2979 = vmul.f32 %v2910, %v2910
        %v2980 = vmul.f32 %v2911, %v2911
        %v2981 = vmul.f32 %v2912, %v2912
        %v2982 = vmul.f32 %v2913, %v2913
        %v2983 = vmul.f32 %v2914, %v2914
        %v2984 = vmul.f32 %v2915, %v2915
        %v2985 = vmul.f32 %v2916, %v2916
        %v2986 = vmul.f32 %v2917, %v2917
        %v2987 = vmul.f32 %v2918, %v2918
        %v2988 = vmul.f32 %v2919, %v2919
        %v2989 = vmul.f32 %v2920, %v2920
        %v2990 = vmul.f32 %v2921, %v2921
        %v2991 = vmul.f32 %v2922, %v2922
        %v2992 = vmul.f32 %v2923, %v2923
        %v2993 = vmul.f32 %v2924, %v2924
        %v2994 = vmul.f32 %v2925, %v2925
        %v2995 = vmul.f32 %v2926, %v2926
        %v2996 = vmul.f32 %v2927, %v2927
        %v2997 = vmul.f32 %v2928, %v2928
        %v2998 = vmul.f32 %v2929, %v2929
        %v2999 = vmul.f32 %v2930, %v2930
        %v3000 = vmul.f32 %v2931, %v2931
        %v3001 = vmul.f32 %v2932, %v2932
        %v3002 = vmul.f32 %v2933, %v2933
        %v3003 = vmul.f32 %v2934, %v2934
        %v3004 = vmul.f32 %v2935, %v2935
        %v3005 = vmul.f32 %v2936, %v2936
        %v3006 = vmul.f32 %v2937, %v2937
        %v3007 = vmul.f32 %v2938, %v2938
        %v3008 = vadd.f32 %v2976, %v2977
        %v3009 = vadd.f32 %v3008, %v2978
        %v3010 = vadd.f32 %v3009, %v2979
        %v3011 = vadd.f32 %v3010, %v2980
        %v3012 = vadd.f32 %v3011, %v2981
        %v3013 = vadd.f32 %v3012, %v2982
        %v3014 = vadd.f32 %v3013, %v2983
        %v3015 = vadd.f32 %v3014, %v2984
        %v3016 = vadd.f32 %v3015, %v2985
        %v3017 = vadd.f32 %v3016, %v2986
        %v3018 = vadd.f32 %v3017, %v2987
        %v3019 = vadd.f32 %v3018, %v2988
        %v3020 = vadd.f32 %v3019, %v2989
        %v3021 = vadd.f32 %v3020, %v2990
        %v3022 = vadd.f32 %v3021, %v2991
        %v3023 = vadd.f32 %v3022, %v2992
        %v3024 = vadd.f32 %v3023, %v2993
        %v3025 = vadd.f32 %v3024, %v2994
        %v3026 = vadd.f32 %v3025, %v2995
        %v3027 = vadd.f32 %v3026, %v2996
        %v3028 = vadd.f32 %v3027, %v2997
        %v3029 = vadd.f32 %v3028, %v2998
        %v3030 = vadd.f32 %v3029, %v2999
        %v3031 = vadd.f32 %v3030, %v3000
        %v3032 = vadd.f32 %v3031, %v3001
        %v3033 = vadd.f32 %v3032, %v3002
        %v3034 = vadd.f32 %v3033, %v3003
        %v3035 = vadd.f32 %v3034, %v3004
        %v3036 = vadd.f32 %v3035, %v3005
        %v3037 = vadd.f32 %v3036, %v3006
        %v3038 = vadd.f32 %v3037, %v3007
        %v3039 = vrot.slane %v3038, 4
        %v3040 = vadd.f32 %v3038, %v3039
        %v3041 = vrot.slane %v3040, 2
        %v3042 = vadd.f32 %v3040, %v3041
        %v3043 = vrot.slane %v3042, 1
        %v3044 = vadd.f32 %v3042, %v3043
        %3046 = vrot.lane.b32.xlu0 %v2975, 96
        %v3047 = vpop.permute.xlu0 %3046
        %v3049 = vadd.f32 %v2975, %v3047
        %3050 = vrot.lane.b32.xlu0 %v2975, 64
        %v3051 = vpop.permute.xlu0 %3050
        %v3053 = vadd.f32 %v3049, %v3051
        %3054 = vrot.lane.b32.xlu0 %v2975, 32
        %v3055 = vpop.permute.xlu0 %3054
        %v3057 = vadd.f32 %v3053, %v3055
        %v3058 = vmul.f32 %v3057, 0.0009765625
        %3060 = vrot.lane.b32.xlu0 %v3044, 96
        %v3061 = vpop.permute.xlu0 %3060
        %v3063 = vadd.f32 %v3044, %v3061
        %3064 = vrot.lane.b32.xlu0 %v3044, 64
        %v3065 = vpop.permute.xlu0 %3064
        %v3067 = vadd.f32 %v3063, %v3065
        %3068 = vrot.lane.b32.xlu0 %v3044, 32
        %v3069 = vpop.permute.xlu0 %3068
        %v3071 = vadd.f32 %v3067, %v3069
        %v3072 = vmul.f32 %v3071, 0.0009765625
        %v3073 = vmul.f32 %v3058, %v3058
        %v3074 = vsub.f32 %v3072, %v3073
        %v3075 = vmax.f32 %v3074, 0.0
        %v3076 = vadd.f32 %v3075, 1e-05
        %v3077 = vrsqrt.pop %v3076
        %v3078 = vlaneseq
        %v3079 = vshrl.u32 %v3078, 7
        %v3080 = vsub.s32 0, %v3079
        %v3081 = vrot.slane %v3058, %v3080
        %v3083 = vunpack.c.l.s4 1983009808
        %v3084 = vunpack.c.0.s8 %v3083
        %v3085 = vlaneseq
        %v3086 = vshrl.u32 %v3085, 7
        %v3087 = vsub.s32 %v3084, %v3086
        %v3088 = vrot.slane %v3081, %v3087
        %v3089 = vcombine.high %v3088, 0.0
        %v3091 = vunpack.c.l.s4 1934713408
        %v3092 = vunpack.c.0.s8 %v3091
        %v3093 = vlaneseq
        %v3094 = vshrl.u32 %v3093, 7
        %v3095 = vsub.s32 %v3092, %v3094
        %v3096 = vrot.slane %v3088, %v3095
        %v3098 = vunpack.c.l.s4 1934713408
        %v3099 = vunpack.c.0.s8 %v3098
        %v3100 = vlaneseq
        %v3101 = vshrl.u32 %v3100, 7
        %v3102 = vsub.s32 %v3099, %v3101
        %v3103 = vrot.slane %v3089, %v3102
        %v3104 = vcombine.high %v3096, 0.0
        %v3105 = vcombine.high %v3103, 0.0
        %3107 = vrot.lane.b32.xlu0 %v3104, 32
        %v3108 = vpop.permute.xlu0 %3107
        %3111 = vrot.lane.b32.xlu0 %v3103, 64
        %v3112 = vpop.permute.xlu0 %3111
        %3115 = vrot.lane.b32.xlu0 %v3105, 96
        %v3116 = vpop.permute.xlu0 %3115
        %vm3118 = vcmask 261120
        %v3119 = vsel %vm3118, %v3096, %v3108
        %vm3120 = vcmask 523264
        %v3121 = vsel %vm3120, %v3119, %v3112
        %vm3122 = vcmask 785408
        %v3123 = vsel %vm3122, %v3121, %v3116
        %v3124 = vlaneseq
        %v3125 = vshrl.u32 %v3124, 7
        %v3126 = vsub.s32 0, %v3125
        %v3127 = vrot.slane %v3077, %v3126
        %v3129 = vunpack.c.l.s4 1983009808
        %v3130 = vunpack.c.0.s8 %v3129
        %v3131 = vlaneseq
        %v3132 = vshrl.u32 %v3131, 7
        %v3133 = vsub.s32 %v3130, %v3132
        %v3134 = vrot.slane %v3127, %v3133
        %v3135 = vcombine.high %v3134, 0.0
        %v3137 = vunpack.c.l.s4 1934713408
        %v3138 = vunpack.c.0.s8 %v3137
        %v3139 = vlaneseq
        %v3140 = vshrl.u32 %v3139, 7
        %v3141 = vsub.s32 %v3138, %v3140
        %v3142 = vrot.slane %v3134, %v3141
        %v3144 = vunpack.c.l.s4 1934713408
        %v3145 = vunpack.c.0.s8 %v3144
        %v3146 = vlaneseq
        %v3147 = vshrl.u32 %v3146, 7
        %v3148 = vsub.s32 %v3145, %v3147
        %v3149 = vrot.slane %v3135, %v3148
        %v3150 = vcombine.high %v3142, 0.0
        %v3151 = vcombine.high %v3149, 0.0
        %3153 = vrot.lane.b32.xlu0 %v3150, 32
        %v3154 = vpop.permute.xlu0 %3153
        %3157 = vrot.lane.b32.xlu0 %v3149, 64
        %v3158 = vpop.permute.xlu0 %3157
        %3161 = vrot.lane.b32.xlu0 %v3151, 96
        %v3162 = vpop.permute.xlu0 %3161
        %v3164 = vsel %vm3118, %v3142, %v3154
        %v3165 = vsel %vm3120, %v3164, %v3158
        %v3166 = vsel %vm3122, %v3165, %v3162
        %v3167 = vlaneseq
        %v3168 = vshrl.u32 %v3167, 7
        %v3169 = vsub.s32 0, %v3168
        %v3170 = vrot.slane %v3123, %v3169
        %v3171 = vsub.f32 %v2907, %v3170
        %v3172 = vsub.f32 %v2908, %v3170
        %v3173 = vsub.f32 %v2909, %v3170
        %v3174 = vsub.f32 %v2910, %v3170
        %v3175 = vsub.f32 %v2911, %v3170
        %v3176 = vsub.f32 %v2912, %v3170
        %v3177 = vsub.f32 %v2913, %v3170
        %v3178 = vsub.f32 %v2914, %v3170
        %v3179 = vsub.f32 %v2915, %v3170
        %v3180 = vsub.f32 %v2916, %v3170
        %v3181 = vsub.f32 %v2917, %v3170
        %v3182 = vsub.f32 %v2918, %v3170
        %v3183 = vsub.f32 %v2919, %v3170
        %v3184 = vsub.f32 %v2920, %v3170
        %v3185 = vsub.f32 %v2921, %v3170
        %v3186 = vsub.f32 %v2922, %v3170
        %v3187 = vsub.f32 %v2923, %v3170
        %v3188 = vsub.f32 %v2924, %v3170
        %v3189 = vsub.f32 %v2925, %v3170
        %v3190 = vsub.f32 %v2926, %v3170
        %v3191 = vsub.f32 %v2927, %v3170
        %v3192 = vsub.f32 %v2928, %v3170
        %v3193 = vsub.f32 %v2929, %v3170
        %v3194 = vsub.f32 %v2930, %v3170
        %v3195 = vsub.f32 %v2931, %v3170
        %v3196 = vsub.f32 %v2932, %v3170
        %v3197 = vsub.f32 %v2933, %v3170
        %v3198 = vsub.f32 %v2934, %v3170
        %v3199 = vsub.f32 %v2935, %v3170
        %v3200 = vsub.f32 %v2936, %v3170
        %v3201 = vsub.f32 %v2937, %v3170
        %v3202 = vsub.f32 %v2938, %v3170
        %v3203 = vlaneseq
        %v3204 = vshrl.u32 %v3203, 7
        %v3205 = vsub.s32 0, %v3204
        %v3206 = vrot.slane %v3166, %v3205
        %v3207 = vmul.f32 %v3171, %v3206
        %v3208 = vmul.f32 %v3172, %v3206
        %v3209 = vmul.f32 %v3173, %v3206
        %v3210 = vmul.f32 %v3174, %v3206
        %v3211 = vmul.f32 %v3175, %v3206
        %v3212 = vmul.f32 %v3176, %v3206
        %v3213 = vmul.f32 %v3177, %v3206
        %v3214 = vmul.f32 %v3178, %v3206
        %v3215 = vmul.f32 %v3179, %v3206
        %v3216 = vmul.f32 %v3180, %v3206
        %v3217 = vmul.f32 %v3181, %v3206
        %v3218 = vmul.f32 %v3182, %v3206
        %v3219 = vmul.f32 %v3183, %v3206
        %v3220 = vmul.f32 %v3184, %v3206
        %v3221 = vmul.f32 %v3185, %v3206
        %v3222 = vmul.f32 %v3186, %v3206
        %v3223 = vmul.f32 %v3187, %v3206
        %v3224 = vmul.f32 %v3188, %v3206
        %v3225 = vmul.f32 %v3189, %v3206
        %v3226 = vmul.f32 %v3190, %v3206
        %v3227 = vmul.f32 %v3191, %v3206
        %v3228 = vmul.f32 %v3192, %v3206
        %v3229 = vmul.f32 %v3193, %v3206
        %v3230 = vmul.f32 %v3194, %v3206
        %v3231 = vmul.f32 %v3195, %v3206
        %v3232 = vmul.f32 %v3196, %v3206
        %v3233 = vmul.f32 %v3197, %v3206
        %v3234 = vmul.f32 %v3198, %v3206
        %v3235 = vmul.f32 %v3199, %v3206
        %v3236 = vmul.f32 %v3200, %v3206
        %v3237 = vmul.f32 %v3201, %v3206
        %v3238 = vmul.f32 %v3202, %v3206
        %v3239 = vpack.c.bf16 %v3208, %v3207
        %v3240 = vpack.c.bf16 %v3210, %v3209
        %v3241 = vpack.c.bf16 %v3212, %v3211
        %v3242 = vpack.c.bf16 %v3214, %v3213
        %v3243 = vpack.c.bf16 %v3216, %v3215
        %v3244 = vpack.c.bf16 %v3218, %v3217
        %v3245 = vpack.c.bf16 %v3220, %v3219
        %v3246 = vpack.c.bf16 %v3222, %v3221
        %v3247 = vpack.c.bf16 %v3224, %v3223
        %v3248 = vpack.c.bf16 %v3226, %v3225
        %v3249 = vpack.c.bf16 %v3228, %v3227
        %v3250 = vpack.c.bf16 %v3230, %v3229
        %v3251 = vpack.c.bf16 %v3232, %v3231
        %v3252 = vpack.c.bf16 %v3234, %v3233
        %v3253 = vpack.c.bf16 %v3236, %v3235
        %v3254 = vpack.c.bf16 %v3238, %v3237
        %v3271 = vunpack.c.l.b16 %v3239
        %v3272 = vunpack.c.h.b16 %v3239
        %v3273 = vunpack.c.l.b16 %v3240
        %v3274 = vunpack.c.h.b16 %v3240
        %v3275 = vunpack.c.l.b16 %v3241
        %v3276 = vunpack.c.h.b16 %v3241
        %v3277 = vunpack.c.l.b16 %v3242
        %v3278 = vunpack.c.h.b16 %v3242
        %v3279 = vunpack.c.l.b16 %v3243
        %v3280 = vunpack.c.h.b16 %v3243
        %v3281 = vunpack.c.l.b16 %v3244
        %v3282 = vunpack.c.h.b16 %v3244
        %v3283 = vunpack.c.l.b16 %v3245
        %v3284 = vunpack.c.h.b16 %v3245
        %v3285 = vunpack.c.l.b16 %v3246
        %v3286 = vunpack.c.h.b16 %v3246
        %v3287 = vunpack.c.l.b16 %v3247
        %v3288 = vunpack.c.h.b16 %v3247
        %v3289 = vunpack.c.l.b16 %v3248
        %v3290 = vunpack.c.h.b16 %v3248
        %v3291 = vunpack.c.l.b16 %v3249
        %v3292 = vunpack.c.h.b16 %v3249
        %v3293 = vunpack.c.l.b16 %v3250
        %v3294 = vunpack.c.h.b16 %v3250
        %v3295 = vunpack.c.l.b16 %v3251
        %v3296 = vunpack.c.h.b16 %v3251
        %v3297 = vunpack.c.l.b16 %v3252
        %v3298 = vunpack.c.h.b16 %v3252
        %v3299 = vunpack.c.l.b16 %v3253
        %v3300 = vunpack.c.h.b16 %v3253
        %v3301 = vunpack.c.l.b16 %v3254
        %v3302 = vunpack.c.h.b16 %v3254
        %v3303 = vpack.c.b16 %v3271, %v3271
        %v3304 = vpack.c.b16 %v3272, %v3272
        %v3305 = vpack.c.b16 %v3273, %v3273
        %v3306 = vpack.c.b16 %v3274, %v3274
        %v3307 = vpack.c.b16 %v3275, %v3275
        %v3308 = vpack.c.b16 %v3276, %v3276
        %v3309 = vpack.c.b16 %v3277, %v3277
        %v3310 = vpack.c.b16 %v3278, %v3278
        %v3311 = vpack.c.b16 %v3279, %v3279
        %v3312 = vpack.c.b16 %v3280, %v3280
        %v3313 = vpack.c.b16 %v3281, %v3281
        %v3314 = vpack.c.b16 %v3282, %v3282
        %v3315 = vpack.c.b16 %v3283, %v3283
        %v3316 = vpack.c.b16 %v3284, %v3284
        %v3317 = vpack.c.b16 %v3285, %v3285
        %v3318 = vpack.c.b16 %v3286, %v3286
        %v3319 = vpack.c.b16 %v3287, %v3287
        %v3320 = vpack.c.b16 %v3288, %v3288
        %v3321 = vpack.c.b16 %v3289, %v3289
        %v3322 = vpack.c.b16 %v3290, %v3290
        %v3323 = vpack.c.b16 %v3291, %v3291
        %v3324 = vpack.c.b16 %v3292, %v3292
        %v3325 = vpack.c.b16 %v3293, %v3293
        %v3326 = vpack.c.b16 %v3294, %v3294
        %v3327 = vpack.c.b16 %v3295, %v3295
        %v3328 = vpack.c.b16 %v3296, %v3296
        %v3329 = vpack.c.b16 %v3297, %v3297
        %v3330 = vpack.c.b16 %v3298, %v3298
        %v3331 = vpack.c.b16 %v3299, %v3299
        %v3332 = vpack.c.b16 %v3300, %v3300
        %v3333 = vpack.c.b16 %v3301, %v3301
        %v3334 = vpack.c.b16 %v3302, %v3302
        %3367 = vst [vmem:[%s136] sm:$0xf] %v3303
        %3368 = vst [vmem:[%s136 + $0x4] sm:$0xf] %v3304
        %3369 = vst [vmem:[%s136 + $0x8] sm:$0xf] %v3305
        %3370 = vst [vmem:[%s136 + $0xc] sm:$0xf] %v3306
        %3371 = vst [vmem:[%s136 + $0x10] sm:$0xf] %v3307
        %3372 = vst [vmem:[%s136 + $0x14] sm:$0xf] %v3308
        %3373 = vst [vmem:[%s136 + $0x18] sm:$0xf] %v3309
        %3374 = vst [vmem:[%s136 + $0x1c] sm:$0xf] %v3310
        %3375 = vst [vmem:[%s136 + $0x20] sm:$0xf] %v3311
        %3376 = vst [vmem:[%s136 + $0x24] sm:$0xf] %v3312
        %3377 = vst [vmem:[%s136 + $0x28] sm:$0xf] %v3313
        %3378 = vst [vmem:[%s136 + $0x2c] sm:$0xf] %v3314
        %3379 = vst [vmem:[%s136 + $0x30] sm:$0xf] %v3315
        %3380 = vst [vmem:[%s136 + $0x34] sm:$0xf] %v3316
        %3381 = vst [vmem:[%s136 + $0x38] sm:$0xf] %v3317
        %3382 = vst [vmem:[%s136 + $0x3c] sm:$0xf] %v3318
        %3383 = vst [vmem:[%s136 + $0x40] sm:$0xf] %v3319
        %3384 = vst [vmem:[%s136 + $0x44] sm:$0xf] %v3320
        %3385 = vst [vmem:[%s136 + $0x48] sm:$0xf] %v3321
        %3386 = vst [vmem:[%s136 + $0x4c] sm:$0xf] %v3322
        %3387 = vst [vmem:[%s136 + $0x50] sm:$0xf] %v3323
        %3388 = vst [vmem:[%s136 + $0x54] sm:$0xf] %v3324
        %3389 = vst [vmem:[%s136 + $0x58] sm:$0xf] %v3325
        %3390 = vst [vmem:[%s136 + $0x5c] sm:$0xf] %v3326
        %3391 = vst [vmem:[%s136 + $0x60] sm:$0xf] %v3327
        %3392 = vst [vmem:[%s136 + $0x64] sm:$0xf] %v3328
        %3393 = vst [vmem:[%s136 + $0x68] sm:$0xf] %v3329
        %3394 = vst [vmem:[%s136 + $0x6c] sm:$0xf] %v3330
        %3395 = vst [vmem:[%s136 + $0x70] sm:$0xf] %v3331
        %3396 = vst [vmem:[%s136 + $0x74] sm:$0xf] %v3332
        %3397 = vst [vmem:[%s136 + $0x78] sm:$0xf] %v3333
        %3398 = vst [vmem:[%s136 + $0x7c] sm:$0xf] %v3334
        %s3399 = sand.u32 %s71, 1
        %s3400 = scalar_lea.sflag [#allocation3], %s3399
        %s3401 = sand.u32 %s71, 1
        %s3402 = smul.addr %s3401, 128
        %s3403 = scalar_lea.vmem [#allocation2], %s3402
        // Predicated region
        $region29: #{tpu_custom_call.1} parent=27 // pred_check
          %p3404 = pneg %p81
        $region30: #{tpu_custom_call.1} parent=27 // pred_check_branch
          %3406 = sbr.rel (%p3404) target = $region32
        $region31: #{tpu_custom_call.1} parent=27 // pred_region
          %s3408 = ssub.s32 2048, 2048
          %3409 = vsyncadd %s3400, %s3408
          %s3410 = smul.addr %s16, 32
          %s3411 = smul.addr %s3410, 64
          %s3412 = scalar_lea.hbm %s2, %s3411
          %s3413 = sshll.u32 %s3403, 4
          %s3414 = int_to_ptr.vmem [resolvable:$true] %s3413
          %3419 = dma.vmem_to_hbm [thread:$0]  %s3414, 2048, %s3412, %s3400, 64, 64, 4
        $region32: #{tpu_custom_call.1} parent=27 // pred_fallthru
          _
      $region28: #{tpu_custom_call.1} parent=5 // pred_fallthru
        _
      %p3420 = scmp.le.s32.totalorder 2, %s11
      // Predicated region
      $region33: #{tpu_custom_call.1} parent=5 // pred_check
        %p3421 = pneg %p3420
      $region34: #{tpu_custom_call.1} parent=5 // pred_check_branch
        %3423 = sbr.rel (%p3421) target = $region36
      $region35: #{tpu_custom_call.1} parent=5 // pred_region
        %s3424 = ssub.s32 %s11, 2
        // Predicated region
        $region37: #{tpu_custom_call.1} parent=35 // pred_check
          %p3425 = pneg %p87
        $region38: #{tpu_custom_call.1} parent=35 // pred_check_branch
          %3427 = sbr.rel (%p3425) target = $region40
        $region39: #{tpu_custom_call.1} parent=35 // pred_region
          %s3428 = sand.u32 %s72, 1
          %s3429 = scalar_lea.sflag [#allocation3], %s3428
          %s3430 = sand.u32 %s72, 1
          %s3431 = smul.addr %s3430, 128
          %s3432 = scalar_lea.vmem [#allocation2], %s3431
          %3433 = dma.done %s3429, 2048
        $region40: #{tpu_custom_call.1} parent=35 // pred_fallthru
          _
      $region36: #{tpu_custom_call.1} parent=5 // pred_fallthru
        _
    $region6: #{tpu_custom_call.1} parent=1 // loop_footer
      %s15 = sadd.s32 1, %s11
    $region7: #{tpu_custom_call.1} parent=1 // loop_footer_branch
      %10 = sbr.rel target = $region3
    $region8: #{tpu_custom_call.1} parent=1 // loop_exit
      _
    %3434 = vsyncpa [#allocation3], 1
    %s3435 = scalar_lea.sflag [#allocation3], 1
    %3436 = vsyncpa %s3435, 1

</llo_original>
